<compile_context>
chip_gen: v7x
topology: tpu7x:2x2x1
jax: 0.10.0
libtpu: 0.0.40
codegen_flags: <defaults>
</compile_context>

<pallas_src>
import functools
import math

import jax
import jax.numpy as jnp
from jax.experimental import pallas as pl
from jax.experimental.pallas import tpu as pltpu

# ----------------------------- config ---------------------------------------
VOCAB = 128
HIDDEN = 32
N_HEADS = 4
HEAD_DIM = HIDDEN // N_HEADS
FFN_DIM = 64
N_LAYERS = 2
PAD_ID = 1
EPS = 1e-6


# --------------------------- fused encoder kernel ---------------------------
def _rms(x, w):
    """T5 LayerNorm (RMSNorm, no mean subtraction, no bias). w: (1, H)."""
    var = jnp.mean(x * x, axis=-1, keepdims=True)
    return x * jax.lax.rsqrt(var + EPS) * w


def _encoder_kernel(h0_ref, bias_ref, ln1_ref, wq_ref, wk_ref, wv_ref, wo_ref,
                    ln2_ref, wi_ref, wof_ref, fln_ref, o_ref, attn_ref,
                    *, batch, seq):
    """One grid step == one encoder layer.

    h0_ref:   (B*S, H)        embedded tokens (read once at layer 0)
    bias_ref: (B, 1, S)       additive key-padding bias (0 / -1e9)
    ln1/ln2:  (1, H)          per-layer RMSNorm weights
    wq/wk/wv: (NH, H, HD)     per-head projections (scale folded into wq)
    wo:       (NH, HD, H)     per-head output projection rows
    wi/wof:   (H, F) / (F, H) FFN weights
    fln_ref:  (1, H)          final RMSNorm weight
    o_ref:    (B*S, H)        resident activation carry / final output
    attn_ref: (B*S, H)        VMEM scratch for the attention block output
    """
    layer = pl.program_id(0)

    @pl.when(layer == 0)
    def _init():
        o_ref[...] = h0_ref[...]

    h = o_ref[...]                                      # (B*S, H) carry

    # ---- self-attention block ----------------------------------------------
    x = _rms(h, ln1_ref[...])
    for b in range(batch):
        rs = b * seq
        x_b = x[rs:rs + seq, :]                         # (S, H) sublane-aligned
        kb = bias_ref[b]                                # (1, S) additive bias
        proj = jnp.zeros((seq, HIDDEN), jnp.float32)
        for hh in range(N_HEADS):
            q_h = jnp.dot(x_b, wq_ref[hh], preferred_element_type=jnp.float32)
            k_h = jnp.dot(x_b, wk_ref[hh], preferred_element_type=jnp.float32)
            v_h = jnp.dot(x_b, wv_ref[hh], preferred_element_type=jnp.float32)
            # scores: contract head dims directly (no explicit transpose)
            s = jax.lax.dot_general(q_h, k_h, (((1,), (1,)), ((), ())),
                                    preferred_element_type=jnp.float32)
            s = s + kb                                  # mask padded keys
            s = s - jnp.max(s, axis=-1, keepdims=True)
            p = jnp.exp(s)
            p = p * pl.reciprocal(jnp.sum(p, axis=-1, keepdims=True),
                                  approx=True)
            hv = jnp.dot(p, v_h, preferred_element_type=jnp.float32)   # (S, HD)
            proj = proj + jnp.dot(hv, wo_ref[hh],
                                  preferred_element_type=jnp.float32)  # (S, H)
        attn_ref[rs:rs + seq, :] = proj
    h = h + attn_ref[...]

    # ---- feed-forward block --------------------------------------------------
    x2 = _rms(h, ln2_ref[...])
    ff = jnp.maximum(
        jnp.dot(x2, wi_ref[...], preferred_element_type=jnp.float32), 0.0)
    h = h + jnp.dot(ff, wof_ref[...], preferred_element_type=jnp.float32)

    o_ref[...] = h

    @pl.when(layer == pl.num_programs(0) - 1)
    def _final():
        o_ref[...] = _rms(o_ref[...], fln_ref[...])


# --------------------------- params & packing --------------------------------
def init_params(key):
    def normal(k, shape, scale=0.02):
        return scale * jax.random.normal(k, shape, dtype=jnp.float32)

    keys = jax.random.split(key, 1 + N_LAYERS)
    params = {"embed": normal(keys[0], (VOCAB, HIDDEN)), "layers": []}
    for li in range(N_LAYERS):
        lk = jax.random.split(keys[1 + li], 8)
        params["layers"].append(
            {
                "ln1": jnp.ones((HIDDEN,), jnp.float32),
                "wq": normal(lk[0], (HIDDEN, HIDDEN)),
                "wk": normal(lk[1], (HIDDEN, HIDDEN)),
                "wv": normal(lk[2], (HIDDEN, HIDDEN)),
                "wo": normal(lk[3], (HIDDEN, HIDDEN)),
                "ln2": jnp.ones((HIDDEN,), jnp.float32),
                "wi": normal(lk[4], (HIDDEN, FFN_DIM)),
                "wo_ffn": normal(lk[5], (FFN_DIM, HIDDEN)),
            }
        )
    params["final_ln"] = jnp.ones((HIDDEN,), jnp.float32)
    return params


def pack_params(params):
    """One-time repack: stack per-layer weights on a leading axis and split the
    attention projections per head so the fused kernel only needs leading-axis
    indexing. The 1/sqrt(head_dim) attention scale is folded into wq."""
    scale = 1.0 / math.sqrt(HEAD_DIM)

    def split_cols(w):  # (H, H) -> (NH, H, HD)   (q/k/v: head = column block)
        return w.reshape(HIDDEN, N_HEADS, HEAD_DIM).transpose(1, 0, 2)

    def split_rows(w):  # (H, H) -> (NH, HD, H)   (out proj: head = row block)
        return w.reshape(N_HEADS, HEAD_DIM, HIDDEN)

    L = params["layers"]
    return {
        "embed": params["embed"],
        "ln1": jnp.stack([l["ln1"].reshape(1, HIDDEN) for l in L]),
        "wq": jnp.stack([split_cols(l["wq"] * scale) for l in L]),
        "wk": jnp.stack([split_cols(l["wk"]) for l in L]),
        "wv": jnp.stack([split_cols(l["wv"]) for l in L]),
        "wo": jnp.stack([split_rows(l["wo"]) for l in L]),
        "ln2": jnp.stack([l["ln2"].reshape(1, HIDDEN) for l in L]),
        "wi": jnp.stack([l["wi"] for l in L]),
        "wo_ffn": jnp.stack([l["wo_ffn"] for l in L]),
        "final_ln": params["final_ln"].reshape(1, HIDDEN),
    }


# --------------------------- forward (jit + single pallas_call) --------------
def encoder_forward(packed, input_ids):
    B, S = input_ids.shape
    BS = B * S
    mask = input_ids != PAD_ID
    key_bias = jnp.where(mask, 0.0, -1e9).astype(jnp.float32).reshape(B, 1, S)
    h0 = jnp.take(packed["embed"], input_ids, axis=0).reshape(BS, HIDDEN)

    kernel = functools.partial(_encoder_kernel, batch=B, seq=S)

    grid_spec = pltpu.PrefetchScalarGridSpec(
        num_scalar_prefetch=0,
        grid=(N_LAYERS,),
        in_specs=[
            pl.BlockSpec((BS, HIDDEN), lambda l: (0, 0)),                   # h0
            pl.BlockSpec((B, 1, S), lambda l: (0, 0, 0)),                   # bias
            pl.BlockSpec((None, 1, HIDDEN), lambda l: (l, 0, 0)),           # ln1
            pl.BlockSpec((None, N_HEADS, HIDDEN, HEAD_DIM),
                         lambda l: (l, 0, 0, 0)),                           # wq
            pl.BlockSpec((None, N_HEADS, HIDDEN, HEAD_DIM),
                         lambda l: (l, 0, 0, 0)),                           # wk
            pl.BlockSpec((None, N_HEADS, HIDDEN, HEAD_DIM),
                         lambda l: (l, 0, 0, 0)),                           # wv
            pl.BlockSpec((None, N_HEADS, HEAD_DIM, HIDDEN),
                         lambda l: (l, 0, 0, 0)),                           # wo
            pl.BlockSpec((None, 1, HIDDEN), lambda l: (l, 0, 0)),           # ln2
            pl.BlockSpec((None, HIDDEN, FFN_DIM), lambda l: (l, 0, 0)),     # wi
            pl.BlockSpec((None, FFN_DIM, HIDDEN), lambda l: (l, 0, 0)),     # wo_ffn
            pl.BlockSpec((1, HIDDEN), lambda l: (0, 0)),                    # final ln
        ],
        out_specs=pl.BlockSpec((BS, HIDDEN), lambda l: (0, 0)),
        scratch_shapes=[pltpu.VMEM((BS, HIDDEN), jnp.float32)],
    )

    out = pl.pallas_call(
        kernel,
        grid_spec=grid_spec,
        out_shape=jax.ShapeDtypeStruct((BS, HIDDEN), jnp.float32),
        compiler_params=pltpu.CompilerParams(
            dimension_semantics=("arbitrary",)),
    )(h0, key_bias, packed["ln1"], packed["wq"], packed["wk"], packed["wv"],
      packed["wo"], packed["ln2"], packed["wi"], packed["wo_ffn"],
      packed["final_ln"])
    return out.reshape(B, S, HIDDEN)


_forward = jax.jit(encoder_forward)


def codet5p_model(packed, code_inputs=None, nl_inputs=None):
    """Mirrors CodeT5pModel.forward: attention_mask = inputs.ne(1)."""
    inputs = code_inputs if code_inputs is not None else nl_inputs
    return _forward(packed, inputs)


# ------------------------------- main ----------------------------------------
if __name__ == "__main__":
    key = jax.random.PRNGKey(0)
    pkey, dkey = jax.random.split(key)
    packed = pack_params(init_params(pkey))

    B, S = 2, 8
    ids = jax.random.randint(dkey, (B, S), minval=2, maxval=VOCAB, dtype=jnp.int32)
    # Introduce padding (pad id = 1) so the attention-mask path is exercised.
    ids = ids.at[0, 6:].set(PAD_ID)
    ids = ids.at[1, 4:].set(PAD_ID)

    out_code = codet5p_model(packed, code_inputs=ids)   # code branch
    out_nl = codet5p_model(packed, nl_inputs=ids)       # nl branch
    jax.block_until_ready(out_code)
    jax.block_until_ready(out_nl)

    assert out_code.shape == (B, S, HIDDEN)
    assert out_nl.shape == (B, S, HIDDEN)
    assert bool(jnp.all(jnp.isfinite(out_code)))
    print("KERNEL_OK")
</pallas_src>

<mosaic_0001>
module attributes {stable_mosaic.version = 11 : i64} {
  func.func @_encoder_kernel(%arg0: i32, %arg1: memref<16x32xf32, #tpu.memory_space<vmem>>, %arg2: memref<2x1x8xf32, #tpu.memory_space<vmem>>, %arg3: memref<1x1x32xf32, #tpu.memory_space<vmem>>, %arg4: memref<1x4x32x8xf32, #tpu.memory_space<vmem>>, %arg5: memref<1x4x32x8xf32, #tpu.memory_space<vmem>>, %arg6: memref<1x4x32x8xf32, #tpu.memory_space<vmem>>, %arg7: memref<1x4x8x32xf32, #tpu.memory_space<vmem>>, %arg8: memref<1x1x32xf32, #tpu.memory_space<vmem>>, %arg9: memref<1x32x64xf32, #tpu.memory_space<vmem>>, %arg10: memref<1x64x32xf32, #tpu.memory_space<vmem>>, %arg11: memref<1x32xf32, #tpu.memory_space<vmem>>, %arg12: memref<16x32xf32, #tpu.memory_space<vmem>>, %arg13: memref<16x32xf32, #tpu.memory_space<vmem>>) attributes {dimension_semantics = [#tpu.dimension_semantics<arbitrary>], iteration_bounds = array<i64: 2>, scalar_prefetch = 0 : i64, scratch_operands = 1 : i64, tpu.core_type = #tpu.core_type<tc>, window_params = [{pipeline_mode = #tpu.pipeline_mode<synchronous>, transform_indices = @transform_0, window_bounds = array<i64: 16, 32>}, {pipeline_mode = #tpu.pipeline_mode<synchronous>, transform_indices = @transform_1, window_bounds = array<i64: 2, 1, 8>}, {transform_indices = @transform_2, window_bounds = array<i64: 1, 1, 32>}, {transform_indices = @transform_3, window_bounds = array<i64: 1, 4, 32, 8>}, {transform_indices = @transform_4, window_bounds = array<i64: 1, 4, 32, 8>}, {transform_indices = @transform_5, window_bounds = array<i64: 1, 4, 32, 8>}, {transform_indices = @transform_6, window_bounds = array<i64: 1, 4, 8, 32>}, {transform_indices = @transform_7, window_bounds = array<i64: 1, 1, 32>}, {transform_indices = @transform_8, window_bounds = array<i64: 1, 32, 64>}, {transform_indices = @transform_9, window_bounds = array<i64: 1, 64, 32>}, {pipeline_mode = #tpu.pipeline_mode<synchronous>, transform_indices = @transform_10, window_bounds = array<i64: 1, 32>}, {pipeline_mode = #tpu.pipeline_mode<synchronous>, transform_indices = @transform_11, window_bounds = array<i64: 16, 32>}]} {
    %c0_i32 = arith.constant 0 : i32
    %0 = arith.cmpi eq, %arg0, %c0_i32 : i32
    %1 = arith.extui %0 : i1 to i32
    %c0_i32_0 = arith.constant 0 : i32
    %2 = arith.cmpi ne, %1, %c0_i32_0 : i32
    scf.if %2 {
      %c0_227 = arith.constant 0 : index
      %c0_228 = arith.constant 0 : index
      %273 = vector.load %arg1[%c0_227, %c0_228] : memref<16x32xf32, #tpu.memory_space<vmem>>, vector<16x32xf32>
      %c0_229 = arith.constant 0 : index
      %c0_230 = arith.constant 0 : index
      %274 = vector.load %arg12[%c0_229, %c0_230] : memref<16x32xf32, #tpu.memory_space<vmem>>, vector<16x32xf32>
      tpu.vector_store %arg12[%c0_229, %c0_230], %273 {strides = array<i32>} : memref<16x32xf32, #tpu.memory_space<vmem>>, vector<16x32xf32>,
    } else {
    }
    %c0 = arith.constant 0 : index
    %c0_1 = arith.constant 0 : index
    %3 = vector.load %arg12[%c0, %c0_1] : memref<16x32xf32, #tpu.memory_space<vmem>>, vector<16x32xf32>
    %c0_2 = arith.constant 0 : index
    %c0_3 = arith.constant 0 : index
    %c0_4 = arith.constant 0 : index
    %4 = vector.load %arg3[%c0_2, %c0_3, %c0_4] : memref<1x1x32xf32, #tpu.memory_space<vmem>>, vector<1x1x32xf32>
    %5 = vector.shape_cast %4 : vector<1x1x32xf32> to vector<1x32xf32>
    %6 = arith.mulf %3, %3 : vector<16x32xf32>
    %cst = arith.constant dense<0.000000e+00> : vector<16xf32>
    %7 = vector.multi_reduction <add>, %6, %cst [1] : vector<16x32xf32> to vector<16xf32>
    %8 = vector.shape_cast %7 : vector<16xf32> to vector<16x1xf32>
    %cst_5 = arith.constant 3.200000e+01 : f32
    %9 = vector.broadcast %cst_5 : f32 to vector<16x1xf32>
    %10 = arith.divf %8, %9 : vector<16x1xf32>
    %cst_6 = arith.constant 9.99999997E-7 : f32
    %11 = vector.broadcast %cst_6 : f32 to vector<16x1xf32>
    %12 = arith.addf %10, %11 : vector<16x1xf32>
    %13 = math.rsqrt %12 : vector<16x1xf32>
    %14 = vector.broadcast %13 : vector<16x1xf32> to vector<16x32xf32>
    %15 = arith.mulf %3, %14 : vector<16x32xf32>
    %16 = vector.broadcast %5 : vector<1x32xf32> to vector<16x32xf32>
    %17 = arith.mulf %15, %16 : vector<16x32xf32>
    %18 = vector.extract_strided_slice %17 {offsets = [0, 0], sizes = [8, 32], strides = [1, 1]} : vector<16x32xf32> to vector<8x32xf32>
    %c0_7 = arith.constant 0 : index
    %c0_8 = arith.constant 0 : index
    %c0_9 = arith.constant 0 : index
    %19 = vector.load %arg2[%c0_7, %c0_8, %c0_9] : memref<2x1x8xf32, #tpu.memory_space<vmem>>, vector<1x1x8xf32>
    %20 = vector.shape_cast %19 : vector<1x1x8xf32> to vector<1x8xf32>
    %cst_10 = arith.constant 0.000000e+00 : f32
    %21 = vector.broadcast %cst_10 : f32 to vector<8x32xf32>
    %c0_11 = arith.constant 0 : index
    %c0_12 = arith.constant 0 : index
    %c0_13 = arith.constant 0 : index
    %c0_14 = arith.constant 0 : index
    %22 = vector.load %arg4[%c0_11, %c0_12, %c0_13, %c0_14] : memref<1x4x32x8xf32, #tpu.memory_space<vmem>>, vector<1x1x32x8xf32>
    %23 = vector.shape_cast %22 : vector<1x1x32x8xf32> to vector<32x8xf32>
    %cst_15 = arith.constant dense<0.000000e+00> : vector<8x8xf32>
    %24 = tpu.matmul %18, %23, %cst_15 {dimension_numbers = #tpu.dot_dimension_numbers<[1], [0], [0], [1], [0, 0, 1, 1], [], []>} : vector<8x32xf32>, vector<32x8xf32>, vector<8x8xf32> -> vector<8x8xf32>
    %c0_16 = arith.constant 0 : index
    %c0_17 = arith.constant 0 : index
    %c0_18 = arith.constant 0 : index
    %c0_19 = arith.constant 0 : index
    %25 = vector.load %arg5[%c0_16, %c0_17, %c0_18, %c0_19] : memref<1x4x32x8xf32, #tpu.memory_space<vmem>>, vector<1x1x32x8xf32>
    %26 = vector.shape_cast %25 : vector<1x1x32x8xf32> to vector<32x8xf32>
    %cst_20 = arith.constant dense<0.000000e+00> : vector<8x8xf32>
    %27 = tpu.matmul %18, %26, %cst_20 {dimension_numbers = #tpu.dot_dimension_numbers<[1], [0], [0], [1], [0, 0, 1, 1], [], []>} : vector<8x32xf32>, vector<32x8xf32>, vector<8x8xf32> -> vector<8x8xf32>
    %c0_21 = arith.constant 0 : index
    %c0_22 = arith.constant 0 : index
    %c0_23 = arith.constant 0 : index
    %c0_24 = arith.constant 0 : index
    %28 = vector.load %arg6[%c0_21, %c0_22, %c0_23, %c0_24] : memref<1x4x32x8xf32, #tpu.memory_space<vmem>>, vector<1x1x32x8xf32>
    %29 = vector.shape_cast %28 : vector<1x1x32x8xf32> to vector<32x8xf32>
    %cst_25 = arith.constant dense<0.000000e+00> : vector<8x8xf32>
    %30 = tpu.matmul %18, %29, %cst_25 {dimension_numbers = #tpu.dot_dimension_numbers<[1], [0], [0], [1], [0, 0, 1, 1], [], []>} : vector<8x32xf32>, vector<32x8xf32>, vector<8x8xf32> -> vector<8x8xf32>
    %cst_26 = arith.constant dense<0.000000e+00> : vector<8x8xf32>
    %31 = tpu.matmul %24, %27, %cst_26 {dimension_numbers = #tpu.dot_dimension_numbers<[1], [1], [0], [0], [0, 0, 1, 0], [], []>} : vector<8x8xf32>, vector<8x8xf32>, vector<8x8xf32> -> vector<8x8xf32>
    %32 = vector.broadcast %20 : vector<1x8xf32> to vector<8x8xf32>
    %33 = arith.addf %31, %32 : vector<8x8xf32>
    %cst_27 = arith.constant dense<0xFF800000> : vector<8xf32>
    %34 = vector.multi_reduction <maximumf>, %33, %cst_27 [1] : vector<8x8xf32> to vector<8xf32>
    %35 = vector.shape_cast %34 : vector<8xf32> to vector<8x1xf32>
    %36 = vector.broadcast %35 : vector<8x1xf32> to vector<8x8xf32>
    %37 = arith.subf %33, %36 : vector<8x8xf32>
    %38 = math.exp %37 : vector<8x8xf32>
    %cst_28 = arith.constant dense<0.000000e+00> : vector<8xf32>
    %39 = vector.multi_reduction <add>, %38, %cst_28 [1] : vector<8x8xf32> to vector<8xf32>
    %40 = vector.shape_cast %39 : vector<8xf32> to vector<8x1xf32>
    %41 = tpu.reciprocal %40 {approx = true} : vector<8x1xf32> -> vector<8x1xf32>
    %42 = vector.broadcast %41 : vector<8x1xf32> to vector<8x8xf32>
    %43 = arith.mulf %38, %42 : vector<8x8xf32>
    %cst_29 = arith.constant dense<0.000000e+00> : vector<8x8xf32>
    %44 = tpu.matmul %43, %30, %cst_29 {dimension_numbers = #tpu.dot_dimension_numbers<[1], [0], [0], [1], [0, 0, 1, 1], [], []>} : vector<8x8xf32>, vector<8x8xf32>, vector<8x8xf32> -> vector<8x8xf32>
    %c0_30 = arith.constant 0 : index
    %c0_31 = arith.constant 0 : index
    %c0_32 = arith.constant 0 : index
    %c0_33 = arith.constant 0 : index
    %45 = vector.load %arg7[%c0_30, %c0_31, %c0_32, %c0_33] : memref<1x4x8x32xf32, #tpu.memory_space<vmem>>, vector<1x1x8x32xf32>
    %46 = vector.shape_cast %45 : vector<1x1x8x32xf32> to vector<8x32xf32>
    %cst_34 = arith.constant dense<0.000000e+00> : vector<8x32xf32>
    %47 = tpu.matmul %44, %46, %cst_34 {dimension_numbers = #tpu.dot_dimension_numbers<[1], [0], [0], [1], [0, 0, 1, 1], [], []>} : vector<8x8xf32>, vector<8x32xf32>, vector<8x32xf32> -> vector<8x32xf32>
    %48 = arith.addf %21, %47 : vector<8x32xf32>
    %c0_35 = arith.constant 0 : index
    %c1 = arith.constant 1 : index
    %c0_36 = arith.constant 0 : index
    %c0_37 = arith.constant 0 : index
    %49 = vector.load %arg4[%c0_35, %c1, %c0_36, %c0_37] : memref<1x4x32x8xf32, #tpu.memory_space<vmem>>, vector<1x1x32x8xf32>
    %50 = vector.shape_cast %49 : vector<1x1x32x8xf32> to vector<32x8xf32>
    %cst_38 = arith.constant dense<0.000000e+00> : vector<8x8xf32>
    %51 = tpu.matmul %18, %50, %cst_38 {dimension_numbers = #tpu.dot_dimension_numbers<[1], [0], [0], [1], [0, 0, 1, 1], [], []>} : vector<8x32xf32>, vector<32x8xf32>, vector<8x8xf32> -> vector<8x8xf32>
    %c0_39 = arith.constant 0 : index
    %c1_40 = arith.constant 1 : index
    %c0_41 = arith.constant 0 : index
    %c0_42 = arith.constant 0 : index
    %52 = vector.load %arg5[%c0_39, %c1_40, %c0_41, %c0_42] : memref<1x4x32x8xf32, #tpu.memory_space<vmem>>, vector<1x1x32x8xf32>
    %53 = vector.shape_cast %52 : vector<1x1x32x8xf32> to vector<32x8xf32>
    %cst_43 = arith.constant dense<0.000000e+00> : vector<8x8xf32>
    %54 = tpu.matmul %18, %53, %cst_43 {dimension_numbers = #tpu.dot_dimension_numbers<[1], [0], [0], [1], [0, 0, 1, 1], [], []>} : vector<8x32xf32>, vector<32x8xf32>, vector<8x8xf32> -> vector<8x8xf32>
    %c0_44 = arith.constant 0 : index
    %c1_45 = arith.constant 1 : index
    %c0_46 = arith.constant 0 : index
    %c0_47 = arith.constant 0 : index
    %55 = vector.load %arg6[%c0_44, %c1_45, %c0_46, %c0_47] : memref<1x4x32x8xf32, #tpu.memory_space<vmem>>, vector<1x1x32x8xf32>
    %56 = vector.shape_cast %55 : vector<1x1x32x8xf32> to vector<32x8xf32>
    %cst_48 = arith.constant dense<0.000000e+00> : vector<8x8xf32>
    %57 = tpu.matmul %18, %56, %cst_48 {dimension_numbers = #tpu.dot_dimension_numbers<[1], [0], [0], [1], [0, 0, 1, 1], [], []>} : vector<8x32xf32>, vector<32x8xf32>, vector<8x8xf32> -> vector<8x8xf32>
    %cst_49 = arith.constant dense<0.000000e+00> : vector<8x8xf32>
    %58 = tpu.matmul %51, %54, %cst_49 {dimension_numbers = #tpu.dot_dimension_numbers<[1], [1], [0], [0], [0, 0, 1, 0], [], []>} : vector<8x8xf32>, vector<8x8xf32>, vector<8x8xf32> -> vector<8x8xf32>
    %59 = vector.broadcast %20 : vector<1x8xf32> to vector<8x8xf32>
    %60 = arith.addf %58, %59 : vector<8x8xf32>
    %cst_50 = arith.constant dense<0xFF800000> : vector<8xf32>
    %61 = vector.multi_reduction <maximumf>, %60, %cst_50 [1] : vector<8x8xf32> to vector<8xf32>
    %62 = vector.shape_cast %61 : vector<8xf32> to vector<8x1xf32>
    %63 = vector.broadcast %62 : vector<8x1xf32> to vector<8x8xf32>
    %64 = arith.subf %60, %63 : vector<8x8xf32>
    %65 = math.exp %64 : vector<8x8xf32>
    %cst_51 = arith.constant dense<0.000000e+00> : vector<8xf32>
    %66 = vector.multi_reduction <add>, %65, %cst_51 [1] : vector<8x8xf32> to vector<8xf32>
    %67 = vector.shape_cast %66 : vector<8xf32> to vector<8x1xf32>
    %68 = tpu.reciprocal %67 {approx = true} : vector<8x1xf32> -> vector<8x1xf32>
    %69 = vector.broadcast %68 : vector<8x1xf32> to vector<8x8xf32>
    %70 = arith.mulf %65, %69 : vector<8x8xf32>
    %cst_52 = arith.constant dense<0.000000e+00> : vector<8x8xf32>
    %71 = tpu.matmul %70, %57, %cst_52 {dimension_numbers = #tpu.dot_dimension_numbers<[1], [0], [0], [1], [0, 0, 1, 1], [], []>} : vector<8x8xf32>, vector<8x8xf32>, vector<8x8xf32> -> vector<8x8xf32>
    %c0_53 = arith.constant 0 : index
    %c1_54 = arith.constant 1 : index
    %c0_55 = arith.constant 0 : index
    %c0_56 = arith.constant 0 : index
    %72 = vector.load %arg7[%c0_53, %c1_54, %c0_55, %c0_56] : memref<1x4x8x32xf32, #tpu.memory_space<vmem>>, vector<1x1x8x32xf32>
    %73 = vector.shape_cast %72 : vector<1x1x8x32xf32> to vector<8x32xf32>
    %cst_57 = arith.constant dense<0.000000e+00> : vector<8x32xf32>
    %74 = tpu.matmul %71, %73, %cst_57 {dimension_numbers = #tpu.dot_dimension_numbers<[1], [0], [0], [1], [0, 0, 1, 1], [], []>} : vector<8x8xf32>, vector<8x32xf32>, vector<8x32xf32> -> vector<8x32xf32>
    %75 = arith.addf %48, %74 : vector<8x32xf32>
    %c0_58 = arith.constant 0 : index
    %c2 = arith.constant 2 : index
    %c0_59 = arith.constant 0 : index
    %c0_60 = arith.constant 0 : index
    %76 = vector.load %arg4[%c0_58, %c2, %c0_59, %c0_60] : memref<1x4x32x8xf32, #tpu.memory_space<vmem>>, vector<1x1x32x8xf32>
    %77 = vector.shape_cast %76 : vector<1x1x32x8xf32> to vector<32x8xf32>
    %cst_61 = arith.constant dense<0.000000e+00> : vector<8x8xf32>
    %78 = tpu.matmul %18, %77, %cst_61 {dimension_numbers = #tpu.dot_dimension_numbers<[1], [0], [0], [1], [0, 0, 1, 1], [], []>} : vector<8x32xf32>, vector<32x8xf32>, vector<8x8xf32> -> vector<8x8xf32>
    %c0_62 = arith.constant 0 : index
    %c2_63 = arith.constant 2 : index
    %c0_64 = arith.constant 0 : index
    %c0_65 = arith.constant 0 : index
    %79 = vector.load %arg5[%c0_62, %c2_63, %c0_64, %c0_65] : memref<1x4x32x8xf32, #tpu.memory_space<vmem>>, vector<1x1x32x8xf32>
    %80 = vector.shape_cast %79 : vector<1x1x32x8xf32> to vector<32x8xf32>
    %cst_66 = arith.constant dense<0.000000e+00> : vector<8x8xf32>
    %81 = tpu.matmul %18, %80, %cst_66 {dimension_numbers = #tpu.dot_dimension_numbers<[1], [0], [0], [1], [0, 0, 1, 1], [], []>} : vector<8x32xf32>, vector<32x8xf32>, vector<8x8xf32> -> vector<8x8xf32>
    %c0_67 = arith.constant 0 : index
    %c2_68 = arith.constant 2 : index
    %c0_69 = arith.constant 0 : index
    %c0_70 = arith.constant 0 : index
    %82 = vector.load %arg6[%c0_67, %c2_68, %c0_69, %c0_70] : memref<1x4x32x8xf32, #tpu.memory_space<vmem>>, vector<1x1x32x8xf32>
    %83 = vector.shape_cast %82 : vector<1x1x32x8xf32> to vector<32x8xf32>
    %cst_71 = arith.constant dense<0.000000e+00> : vector<8x8xf32>
    %84 = tpu.matmul %18, %83, %cst_71 {dimension_numbers = #tpu.dot_dimension_numbers<[1], [0], [0], [1], [0, 0, 1, 1], [], []>} : vector<8x32xf32>, vector<32x8xf32>, vector<8x8xf32> -> vector<8x8xf32>
    %cst_72 = arith.constant dense<0.000000e+00> : vector<8x8xf32>
    %85 = tpu.matmul %78, %81, %cst_72 {dimension_numbers = #tpu.dot_dimension_numbers<[1], [1], [0], [0], [0, 0, 1, 0], [], []>} : vector<8x8xf32>, vector<8x8xf32>, vector<8x8xf32> -> vector<8x8xf32>
    %86 = vector.broadcast %20 : vector<1x8xf32> to vector<8x8xf32>
    %87 = arith.addf %85, %86 : vector<8x8xf32>
    %cst_73 = arith.constant dense<0xFF800000> : vector<8xf32>
    %88 = vector.multi_reduction <maximumf>, %87, %cst_73 [1] : vector<8x8xf32> to vector<8xf32>
    %89 = vector.shape_cast %88 : vector<8xf32> to vector<8x1xf32>
    %90 = vector.broadcast %89 : vector<8x1xf32> to vector<8x8xf32>
    %91 = arith.subf %87, %90 : vector<8x8xf32>
    %92 = math.exp %91 : vector<8x8xf32>
    %cst_74 = arith.constant dense<0.000000e+00> : vector<8xf32>
    %93 = vector.multi_reduction <add>, %92, %cst_74 [1] : vector<8x8xf32> to vector<8xf32>
    %94 = vector.shape_cast %93 : vector<8xf32> to vector<8x1xf32>
    %95 = tpu.reciprocal %94 {approx = true} : vector<8x1xf32> -> vector<8x1xf32>
    %96 = vector.broadcast %95 : vector<8x1xf32> to vector<8x8xf32>
    %97 = arith.mulf %92, %96 : vector<8x8xf32>
    %cst_75 = arith.constant dense<0.000000e+00> : vector<8x8xf32>
    %98 = tpu.matmul %97, %84, %cst_75 {dimension_numbers = #tpu.dot_dimension_numbers<[1], [0], [0], [1], [0, 0, 1, 1], [], []>} : vector<8x8xf32>, vector<8x8xf32>, vector<8x8xf32> -> vector<8x8xf32>
    %c0_76 = arith.constant 0 : index
    %c2_77 = arith.constant 2 : index
    %c0_78 = arith.constant 0 : index
    %c0_79 = arith.constant 0 : index
    %99 = vector.load %arg7[%c0_76, %c2_77, %c0_78, %c0_79] : memref<1x4x8x32xf32, #tpu.memory_space<vmem>>, vector<1x1x8x32xf32>
    %100 = vector.shape_cast %99 : vector<1x1x8x32xf32> to vector<8x32xf32>
    %cst_80 = arith.constant dense<0.000000e+00> : vector<8x32xf32>
    %101 = tpu.matmul %98, %100, %cst_80 {dimension_numbers = #tpu.dot_dimension_numbers<[1], [0], [0], [1], [0, 0, 1, 1], [], []>} : vector<8x8xf32>, vector<8x32xf32>, vector<8x32xf32> -> vector<8x32xf32>
    %102 = arith.addf %75, %101 : vector<8x32xf32>
    %c0_81 = arith.constant 0 : index
    %c3 = arith.constant 3 : index
    %c0_82 = arith.constant 0 : index
    %c0_83 = arith.constant 0 : index
    %103 = vector.load %arg4[%c0_81, %c3, %c0_82, %c0_83] : memref<1x4x32x8xf32, #tpu.memory_space<vmem>>, vector<1x1x32x8xf32>
    %104 = vector.shape_cast %103 : vector<1x1x32x8xf32> to vector<32x8xf32>
    %cst_84 = arith.constant dense<0.000000e+00> : vector<8x8xf32>
    %105 = tpu.matmul %18, %104, %cst_84 {dimension_numbers = #tpu.dot_dimension_numbers<[1], [0], [0], [1], [0, 0, 1, 1], [], []>} : vector<8x32xf32>, vector<32x8xf32>, vector<8x8xf32> -> vector<8x8xf32>
    %c0_85 = arith.constant 0 : index
    %c3_86 = arith.constant 3 : index
    %c0_87 = arith.constant 0 : index
    %c0_88 = arith.constant 0 : index
    %106 = vector.load %arg5[%c0_85, %c3_86, %c0_87, %c0_88] : memref<1x4x32x8xf32, #tpu.memory_space<vmem>>, vector<1x1x32x8xf32>
    %107 = vector.shape_cast %106 : vector<1x1x32x8xf32> to vector<32x8xf32>
    %cst_89 = arith.constant dense<0.000000e+00> : vector<8x8xf32>
    %108 = tpu.matmul %18, %107, %cst_89 {dimension_numbers = #tpu.dot_dimension_numbers<[1], [0], [0], [1], [0, 0, 1, 1], [], []>} : vector<8x32xf32>, vector<32x8xf32>, vector<8x8xf32> -> vector<8x8xf32>
    %c0_90 = arith.constant 0 : index
    %c3_91 = arith.constant 3 : index
    %c0_92 = arith.constant 0 : index
    %c0_93 = arith.constant 0 : index
    %109 = vector.load %arg6[%c0_90, %c3_91, %c0_92, %c0_93] : memref<1x4x32x8xf32, #tpu.memory_space<vmem>>, vector<1x1x32x8xf32>
    %110 = vector.shape_cast %109 : vector<1x1x32x8xf32> to vector<32x8xf32>
    %cst_94 = arith.constant dense<0.000000e+00> : vector<8x8xf32>
    %111 = tpu.matmul %18, %110, %cst_94 {dimension_numbers = #tpu.dot_dimension_numbers<[1], [0], [0], [1], [0, 0, 1, 1], [], []>} : vector<8x32xf32>, vector<32x8xf32>, vector<8x8xf32> -> vector<8x8xf32>
    %cst_95 = arith.constant dense<0.000000e+00> : vector<8x8xf32>
    %112 = tpu.matmul %105, %108, %cst_95 {dimension_numbers = #tpu.dot_dimension_numbers<[1], [1], [0], [0], [0, 0, 1, 0], [], []>} : vector<8x8xf32>, vector<8x8xf32>, vector<8x8xf32> -> vector<8x8xf32>
    %113 = vector.broadcast %20 : vector<1x8xf32> to vector<8x8xf32>
    %114 = arith.addf %112, %113 : vector<8x8xf32>
    %cst_96 = arith.constant dense<0xFF800000> : vector<8xf32>
    %115 = vector.multi_reduction <maximumf>, %114, %cst_96 [1] : vector<8x8xf32> to vector<8xf32>
    %116 = vector.shape_cast %115 : vector<8xf32> to vector<8x1xf32>
    %117 = vector.broadcast %116 : vector<8x1xf32> to vector<8x8xf32>
    %118 = arith.subf %114, %117 : vector<8x8xf32>
    %119 = math.exp %118 : vector<8x8xf32>
    %cst_97 = arith.constant dense<0.000000e+00> : vector<8xf32>
    %120 = vector.multi_reduction <add>, %119, %cst_97 [1] : vector<8x8xf32> to vector<8xf32>
    %121 = vector.shape_cast %120 : vector<8xf32> to vector<8x1xf32>
    %122 = tpu.reciprocal %121 {approx = true} : vector<8x1xf32> -> vector<8x1xf32>
    %123 = vector.broadcast %122 : vector<8x1xf32> to vector<8x8xf32>
    %124 = arith.mulf %119, %123 : vector<8x8xf32>
    %cst_98 = arith.constant dense<0.000000e+00> : vector<8x8xf32>
    %125 = tpu.matmul %124, %111, %cst_98 {dimension_numbers = #tpu.dot_dimension_numbers<[1], [0], [0], [1], [0, 0, 1, 1], [], []>} : vector<8x8xf32>, vector<8x8xf32>, vector<8x8xf32> -> vector<8x8xf32>
    %c0_99 = arith.constant 0 : index
    %c3_100 = arith.constant 3 : index
    %c0_101 = arith.constant 0 : index
    %c0_102 = arith.constant 0 : index
    %126 = vector.load %arg7[%c0_99, %c3_100, %c0_101, %c0_102] : memref<1x4x8x32xf32, #tpu.memory_space<vmem>>, vector<1x1x8x32xf32>
    %127 = vector.shape_cast %126 : vector<1x1x8x32xf32> to vector<8x32xf32>
    %cst_103 = arith.constant dense<0.000000e+00> : vector<8x32xf32>
    %128 = tpu.matmul %125, %127, %cst_103 {dimension_numbers = #tpu.dot_dimension_numbers<[1], [0], [0], [1], [0, 0, 1, 1], [], []>} : vector<8x8xf32>, vector<8x32xf32>, vector<8x32xf32> -> vector<8x32xf32>
    %129 = arith.addf %102, %128 : vector<8x32xf32>
    %c0_104 = arith.constant 0 : index
    %c0_105 = arith.constant 0 : index
    %130 = vector.load %arg13[%c0_104, %c0_105] : memref<16x32xf32, #tpu.memory_space<vmem>>, vector<8x32xf32>
    tpu.vector_store %arg13[%c0_104, %c0_105], %129 {strides = array<i32>} : memref<16x32xf32, #tpu.memory_space<vmem>>, vector<8x32xf32>,
    %131 = vector.extract_strided_slice %17 {offsets = [8, 0], sizes = [8, 32], strides = [1, 1]} : vector<16x32xf32> to vector<8x32xf32>
    %c1_106 = arith.constant 1 : index
    %c0_107 = arith.constant 0 : index
    %c0_108 = arith.constant 0 : index
    %132 = vector.load %arg2[%c1_106, %c0_107, %c0_108] : memref<2x1x8xf32, #tpu.memory_space<vmem>>, vector<1x1x8xf32>
    %133 = vector.shape_cast %132 : vector<1x1x8xf32> to vector<1x8xf32>
    %cst_109 = arith.constant 0.000000e+00 : f32
    %134 = vector.broadcast %cst_109 : f32 to vector<8x32xf32>
    %c0_110 = arith.constant 0 : index
    %c0_111 = arith.constant 0 : index
    %c0_112 = arith.constant 0 : index
    %c0_113 = arith.constant 0 : index
    %135 = vector.load %arg4[%c0_110, %c0_111, %c0_112, %c0_113] : memref<1x4x32x8xf32, #tpu.memory_space<vmem>>, vector<1x1x32x8xf32>
    %136 = vector.shape_cast %135 : vector<1x1x32x8xf32> to vector<32x8xf32>
    %cst_114 = arith.constant dense<0.000000e+00> : vector<8x8xf32>
    %137 = tpu.matmul %131, %136, %cst_114 {dimension_numbers = #tpu.dot_dimension_numbers<[1], [0], [0], [1], [0, 0, 1, 1], [], []>} : vector<8x32xf32>, vector<32x8xf32>, vector<8x8xf32> -> vector<8x8xf32>
    %c0_115 = arith.constant 0 : index
    %c0_116 = arith.constant 0 : index
    %c0_117 = arith.constant 0 : index
    %c0_118 = arith.constant 0 : index
    %138 = vector.load %arg5[%c0_115, %c0_116, %c0_117, %c0_118] : memref<1x4x32x8xf32, #tpu.memory_space<vmem>>, vector<1x1x32x8xf32>
    %139 = vector.shape_cast %138 : vector<1x1x32x8xf32> to vector<32x8xf32>
    %cst_119 = arith.constant dense<0.000000e+00> : vector<8x8xf32>
    %140 = tpu.matmul %131, %139, %cst_119 {dimension_numbers = #tpu.dot_dimension_numbers<[1], [0], [0], [1], [0, 0, 1, 1], [], []>} : vector<8x32xf32>, vector<32x8xf32>, vector<8x8xf32> -> vector<8x8xf32>
    %c0_120 = arith.constant 0 : index
    %c0_121 = arith.constant 0 : index
    %c0_122 = arith.constant 0 : index
    %c0_123 = arith.constant 0 : index
    %141 = vector.load %arg6[%c0_120, %c0_121, %c0_122, %c0_123] : memref<1x4x32x8xf32, #tpu.memory_space<vmem>>, vector<1x1x32x8xf32>
    %142 = vector.shape_cast %141 : vector<1x1x32x8xf32> to vector<32x8xf32>
    %cst_124 = arith.constant dense<0.000000e+00> : vector<8x8xf32>
    %143 = tpu.matmul %131, %142, %cst_124 {dimension_numbers = #tpu.dot_dimension_numbers<[1], [0], [0], [1], [0, 0, 1, 1], [], []>} : vector<8x32xf32>, vector<32x8xf32>, vector<8x8xf32> -> vector<8x8xf32>
    %cst_125 = arith.constant dense<0.000000e+00> : vector<8x8xf32>
    %144 = tpu.matmul %137, %140, %cst_125 {dimension_numbers = #tpu.dot_dimension_numbers<[1], [1], [0], [0], [0, 0, 1, 0], [], []>} : vector<8x8xf32>, vector<8x8xf32>, vector<8x8xf32> -> vector<8x8xf32>
    %145 = vector.broadcast %133 : vector<1x8xf32> to vector<8x8xf32>
    %146 = arith.addf %144, %145 : vector<8x8xf32>
    %cst_126 = arith.constant dense<0xFF800000> : vector<8xf32>
    %147 = vector.multi_reduction <maximumf>, %146, %cst_126 [1] : vector<8x8xf32> to vector<8xf32>
    %148 = vector.shape_cast %147 : vector<8xf32> to vector<8x1xf32>
    %149 = vector.broadcast %148 : vector<8x1xf32> to vector<8x8xf32>
    %150 = arith.subf %146, %149 : vector<8x8xf32>
    %151 = math.exp %150 : vector<8x8xf32>
    %cst_127 = arith.constant dense<0.000000e+00> : vector<8xf32>
    %152 = vector.multi_reduction <add>, %151, %cst_127 [1] : vector<8x8xf32> to vector<8xf32>
    %153 = vector.shape_cast %152 : vector<8xf32> to vector<8x1xf32>
    %154 = tpu.reciprocal %153 {approx = true} : vector<8x1xf32> -> vector<8x1xf32>
    %155 = vector.broadcast %154 : vector<8x1xf32> to vector<8x8xf32>
    %156 = arith.mulf %151, %155 : vector<8x8xf32>
    %cst_128 = arith.constant dense<0.000000e+00> : vector<8x8xf32>
    %157 = tpu.matmul %156, %143, %cst_128 {dimension_numbers = #tpu.dot_dimension_numbers<[1], [0], [0], [1], [0, 0, 1, 1], [], []>} : vector<8x8xf32>, vector<8x8xf32>, vector<8x8xf32> -> vector<8x8xf32>
    %c0_129 = arith.constant 0 : index
    %c0_130 = arith.constant 0 : index
    %c0_131 = arith.constant 0 : index
    %c0_132 = arith.constant 0 : index
    %158 = vector.load %arg7[%c0_129, %c0_130, %c0_131, %c0_132] : memref<1x4x8x32xf32, #tpu.memory_space<vmem>>, vector<1x1x8x32xf32>
    %159 = vector.shape_cast %158 : vector<1x1x8x32xf32> to vector<8x32xf32>
    %cst_133 = arith.constant dense<0.000000e+00> : vector<8x32xf32>
    %160 = tpu.matmul %157, %159, %cst_133 {dimension_numbers = #tpu.dot_dimension_numbers<[1], [0], [0], [1], [0, 0, 1, 1], [], []>} : vector<8x8xf32>, vector<8x32xf32>, vector<8x32xf32> -> vector<8x32xf32>
    %161 = arith.addf %134, %160 : vector<8x32xf32>
    %c0_134 = arith.constant 0 : index
    %c1_135 = arith.constant 1 : index
    %c0_136 = arith.constant 0 : index
    %c0_137 = arith.constant 0 : index
    %162 = vector.load %arg4[%c0_134, %c1_135, %c0_136, %c0_137] : memref<1x4x32x8xf32, #tpu.memory_space<vmem>>, vector<1x1x32x8xf32>
    %163 = vector.shape_cast %162 : vector<1x1x32x8xf32> to vector<32x8xf32>
    %cst_138 = arith.constant dense<0.000000e+00> : vector<8x8xf32>
    %164 = tpu.matmul %131, %163, %cst_138 {dimension_numbers = #tpu.dot_dimension_numbers<[1], [0], [0], [1], [0, 0, 1, 1], [], []>} : vector<8x32xf32>, vector<32x8xf32>, vector<8x8xf32> -> vector<8x8xf32>
    %c0_139 = arith.constant 0 : index
    %c1_140 = arith.constant 1 : index
    %c0_141 = arith.constant 0 : index
    %c0_142 = arith.constant 0 : index
    %165 = vector.load %arg5[%c0_139, %c1_140, %c0_141, %c0_142] : memref<1x4x32x8xf32, #tpu.memory_space<vmem>>, vector<1x1x32x8xf32>
    %166 = vector.shape_cast %165 : vector<1x1x32x8xf32> to vector<32x8xf32>
    %cst_143 = arith.constant dense<0.000000e+00> : vector<8x8xf32>
    %167 = tpu.matmul %131, %166, %cst_143 {dimension_numbers = #tpu.dot_dimension_numbers<[1], [0], [0], [1], [0, 0, 1, 1], [], []>} : vector<8x32xf32>, vector<32x8xf32>, vector<8x8xf32> -> vector<8x8xf32>
    %c0_144 = arith.constant 0 : index
    %c1_145 = arith.constant 1 : index
    %c0_146 = arith.constant 0 : index
    %c0_147 = arith.constant 0 : index
    %168 = vector.load %arg6[%c0_144, %c1_145, %c0_146, %c0_147] : memref<1x4x32x8xf32, #tpu.memory_space<vmem>>, vector<1x1x32x8xf32>
    %169 = vector.shape_cast %168 : vector<1x1x32x8xf32> to vector<32x8xf32>
    %cst_148 = arith.constant dense<0.000000e+00> : vector<8x8xf32>
    %170 = tpu.matmul %131, %169, %cst_148 {dimension_numbers = #tpu.dot_dimension_numbers<[1], [0], [0], [1], [0, 0, 1, 1], [], []>} : vector<8x32xf32>, vector<32x8xf32>, vector<8x8xf32> -> vector<8x8xf32>
    %cst_149 = arith.constant dense<0.000000e+00> : vector<8x8xf32>
    %171 = tpu.matmul %164, %167, %cst_149 {dimension_numbers = #tpu.dot_dimension_numbers<[1], [1], [0], [0], [0, 0, 1, 0], [], []>} : vector<8x8xf32>, vector<8x8xf32>, vector<8x8xf32> -> vector<8x8xf32>
    %172 = vector.broadcast %133 : vector<1x8xf32> to vector<8x8xf32>
    %173 = arith.addf %171, %172 : vector<8x8xf32>
    %cst_150 = arith.constant dense<0xFF800000> : vector<8xf32>
    %174 = vector.multi_reduction <maximumf>, %173, %cst_150 [1] : vector<8x8xf32> to vector<8xf32>
    %175 = vector.shape_cast %174 : vector<8xf32> to vector<8x1xf32>
    %176 = vector.broadcast %175 : vector<8x1xf32> to vector<8x8xf32>
    %177 = arith.subf %173, %176 : vector<8x8xf32>
    %178 = math.exp %177 : vector<8x8xf32>
    %cst_151 = arith.constant dense<0.000000e+00> : vector<8xf32>
    %179 = vector.multi_reduction <add>, %178, %cst_151 [1] : vector<8x8xf32> to vector<8xf32>
    %180 = vector.shape_cast %179 : vector<8xf32> to vector<8x1xf32>
    %181 = tpu.reciprocal %180 {approx = true} : vector<8x1xf32> -> vector<8x1xf32>
    %182 = vector.broadcast %181 : vector<8x1xf32> to vector<8x8xf32>
    %183 = arith.mulf %178, %182 : vector<8x8xf32>
    %cst_152 = arith.constant dense<0.000000e+00> : vector<8x8xf32>
    %184 = tpu.matmul %183, %170, %cst_152 {dimension_numbers = #tpu.dot_dimension_numbers<[1], [0], [0], [1], [0, 0, 1, 1], [], []>} : vector<8x8xf32>, vector<8x8xf32>, vector<8x8xf32> -> vector<8x8xf32>
    %c0_153 = arith.constant 0 : index
    %c1_154 = arith.constant 1 : index
    %c0_155 = arith.constant 0 : index
    %c0_156 = arith.constant 0 : index
    %185 = vector.load %arg7[%c0_153, %c1_154, %c0_155, %c0_156] : memref<1x4x8x32xf32, #tpu.memory_space<vmem>>, vector<1x1x8x32xf32>
    %186 = vector.shape_cast %185 : vector<1x1x8x32xf32> to vector<8x32xf32>
    %cst_157 = arith.constant dense<0.000000e+00> : vector<8x32xf32>
    %187 = tpu.matmul %184, %186, %cst_157 {dimension_numbers = #tpu.dot_dimension_numbers<[1], [0], [0], [1], [0, 0, 1, 1], [], []>} : vector<8x8xf32>, vector<8x32xf32>, vector<8x32xf32> -> vector<8x32xf32>
    %188 = arith.addf %161, %187 : vector<8x32xf32>
    %c0_158 = arith.constant 0 : index
    %c2_159 = arith.constant 2 : index
    %c0_160 = arith.constant 0 : index
    %c0_161 = arith.constant 0 : index
    %189 = vector.load %arg4[%c0_158, %c2_159, %c0_160, %c0_161] : memref<1x4x32x8xf32, #tpu.memory_space<vmem>>, vector<1x1x32x8xf32>
    %190 = vector.shape_cast %189 : vector<1x1x32x8xf32> to vector<32x8xf32>
    %cst_162 = arith.constant dense<0.000000e+00> : vector<8x8xf32>
    %191 = tpu.matmul %131, %190, %cst_162 {dimension_numbers = #tpu.dot_dimension_numbers<[1], [0], [0], [1], [0, 0, 1, 1], [], []>} : vector<8x32xf32>, vector<32x8xf32>, vector<8x8xf32> -> vector<8x8xf32>
    %c0_163 = arith.constant 0 : index
    %c2_164 = arith.constant 2 : index
    %c0_165 = arith.constant 0 : index
    %c0_166 = arith.constant 0 : index
    %192 = vector.load %arg5[%c0_163, %c2_164, %c0_165, %c0_166] : memref<1x4x32x8xf32, #tpu.memory_space<vmem>>, vector<1x1x32x8xf32>
    %193 = vector.shape_cast %192 : vector<1x1x32x8xf32> to vector<32x8xf32>
    %cst_167 = arith.constant dense<0.000000e+00> : vector<8x8xf32>
    %194 = tpu.matmul %131, %193, %cst_167 {dimension_numbers = #tpu.dot_dimension_numbers<[1], [0], [0], [1], [0, 0, 1, 1], [], []>} : vector<8x32xf32>, vector<32x8xf32>, vector<8x8xf32> -> vector<8x8xf32>
    %c0_168 = arith.constant 0 : index
    %c2_169 = arith.constant 2 : index
    %c0_170 = arith.constant 0 : index
    %c0_171 = arith.constant 0 : index
    %195 = vector.load %arg6[%c0_168, %c2_169, %c0_170, %c0_171] : memref<1x4x32x8xf32, #tpu.memory_space<vmem>>, vector<1x1x32x8xf32>
    %196 = vector.shape_cast %195 : vector<1x1x32x8xf32> to vector<32x8xf32>
    %cst_172 = arith.constant dense<0.000000e+00> : vector<8x8xf32>
    %197 = tpu.matmul %131, %196, %cst_172 {dimension_numbers = #tpu.dot_dimension_numbers<[1], [0], [0], [1], [0, 0, 1, 1], [], []>} : vector<8x32xf32>, vector<32x8xf32>, vector<8x8xf32> -> vector<8x8xf32>
    %cst_173 = arith.constant dense<0.000000e+00> : vector<8x8xf32>
    %198 = tpu.matmul %191, %194, %cst_173 {dimension_numbers = #tpu.dot_dimension_numbers<[1], [1], [0], [0], [0, 0, 1, 0], [], []>} : vector<8x8xf32>, vector<8x8xf32>, vector<8x8xf32> -> vector<8x8xf32>
    %199 = vector.broadcast %133 : vector<1x8xf32> to vector<8x8xf32>
    %200 = arith.addf %198, %199 : vector<8x8xf32>
    %cst_174 = arith.constant dense<0xFF800000> : vector<8xf32>
    %201 = vector.multi_reduction <maximumf>, %200, %cst_174 [1] : vector<8x8xf32> to vector<8xf32>
    %202 = vector.shape_cast %201 : vector<8xf32> to vector<8x1xf32>
    %203 = vector.broadcast %202 : vector<8x1xf32> to vector<8x8xf32>
    %204 = arith.subf %200, %203 : vector<8x8xf32>
    %205 = math.exp %204 : vector<8x8xf32>
    %cst_175 = arith.constant dense<0.000000e+00> : vector<8xf32>
    %206 = vector.multi_reduction <add>, %205, %cst_175 [1] : vector<8x8xf32> to vector<8xf32>
    %207 = vector.shape_cast %206 : vector<8xf32> to vector<8x1xf32>
    %208 = tpu.reciprocal %207 {approx = true} : vector<8x1xf32> -> vector<8x1xf32>
    %209 = vector.broadcast %208 : vector<8x1xf32> to vector<8x8xf32>
    %210 = arith.mulf %205, %209 : vector<8x8xf32>
    %cst_176 = arith.constant dense<0.000000e+00> : vector<8x8xf32>
    %211 = tpu.matmul %210, %197, %cst_176 {dimension_numbers = #tpu.dot_dimension_numbers<[1], [0], [0], [1], [0, 0, 1, 1], [], []>} : vector<8x8xf32>, vector<8x8xf32>, vector<8x8xf32> -> vector<8x8xf32>
    %c0_177 = arith.constant 0 : index
    %c2_178 = arith.constant 2 : index
    %c0_179 = arith.constant 0 : index
    %c0_180 = arith.constant 0 : index
    %212 = vector.load %arg7[%c0_177, %c2_178, %c0_179, %c0_180] : memref<1x4x8x32xf32, #tpu.memory_space<vmem>>, vector<1x1x8x32xf32>
    %213 = vector.shape_cast %212 : vector<1x1x8x32xf32> to vector<8x32xf32>
    %cst_181 = arith.constant dense<0.000000e+00> : vector<8x32xf32>
    %214 = tpu.matmul %211, %213, %cst_181 {dimension_numbers = #tpu.dot_dimension_numbers<[1], [0], [0], [1], [0, 0, 1, 1], [], []>} : vector<8x8xf32>, vector<8x32xf32>, vector<8x32xf32> -> vector<8x32xf32>
    %215 = arith.addf %188, %214 : vector<8x32xf32>
    %c0_182 = arith.constant 0 : index
    %c3_183 = arith.constant 3 : index
    %c0_184 = arith.constant 0 : index
    %c0_185 = arith.constant 0 : index
    %216 = vector.load %arg4[%c0_182, %c3_183, %c0_184, %c0_185] : memref<1x4x32x8xf32, #tpu.memory_space<vmem>>, vector<1x1x32x8xf32>
    %217 = vector.shape_cast %216 : vector<1x1x32x8xf32> to vector<32x8xf32>
    %cst_186 = arith.constant dense<0.000000e+00> : vector<8x8xf32>
    %218 = tpu.matmul %131, %217, %cst_186 {dimension_numbers = #tpu.dot_dimension_numbers<[1], [0], [0], [1], [0, 0, 1, 1], [], []>} : vector<8x32xf32>, vector<32x8xf32>, vector<8x8xf32> -> vector<8x8xf32>
    %c0_187 = arith.constant 0 : index
    %c3_188 = arith.constant 3 : index
    %c0_189 = arith.constant 0 : index
    %c0_190 = arith.constant 0 : index
    %219 = vector.load %arg5[%c0_187, %c3_188, %c0_189, %c0_190] : memref<1x4x32x8xf32, #tpu.memory_space<vmem>>, vector<1x1x32x8xf32>
    %220 = vector.shape_cast %219 : vector<1x1x32x8xf32> to vector<32x8xf32>
    %cst_191 = arith.constant dense<0.000000e+00> : vector<8x8xf32>
    %221 = tpu.matmul %131, %220, %cst_191 {dimension_numbers = #tpu.dot_dimension_numbers<[1], [0], [0], [1], [0, 0, 1, 1], [], []>} : vector<8x32xf32>, vector<32x8xf32>, vector<8x8xf32> -> vector<8x8xf32>
    %c0_192 = arith.constant 0 : index
    %c3_193 = arith.constant 3 : index
    %c0_194 = arith.constant 0 : index
    %c0_195 = arith.constant 0 : index
    %222 = vector.load %arg6[%c0_192, %c3_193, %c0_194, %c0_195] : memref<1x4x32x8xf32, #tpu.memory_space<vmem>>, vector<1x1x32x8xf32>
    %223 = vector.shape_cast %222 : vector<1x1x32x8xf32> to vector<32x8xf32>
    %cst_196 = arith.constant dense<0.000000e+00> : vector<8x8xf32>
    %224 = tpu.matmul %131, %223, %cst_196 {dimension_numbers = #tpu.dot_dimension_numbers<[1], [0], [0], [1], [0, 0, 1, 1], [], []>} : vector<8x32xf32>, vector<32x8xf32>, vector<8x8xf32> -> vector<8x8xf32>
    %cst_197 = arith.constant dense<0.000000e+00> : vector<8x8xf32>
    %225 = tpu.matmul %218, %221, %cst_197 {dimension_numbers = #tpu.dot_dimension_numbers<[1], [1], [0], [0], [0, 0, 1, 0], [], []>} : vector<8x8xf32>, vector<8x8xf32>, vector<8x8xf32> -> vector<8x8xf32>
    %226 = vector.broadcast %133 : vector<1x8xf32> to vector<8x8xf32>
    %227 = arith.addf %225, %226 : vector<8x8xf32>
    %cst_198 = arith.constant dense<0xFF800000> : vector<8xf32>
    %228 = vector.multi_reduction <maximumf>, %227, %cst_198 [1] : vector<8x8xf32> to vector<8xf32>
    %229 = vector.shape_cast %228 : vector<8xf32> to vector<8x1xf32>
    %230 = vector.broadcast %229 : vector<8x1xf32> to vector<8x8xf32>
    %231 = arith.subf %227, %230 : vector<8x8xf32>
    %232 = math.exp %231 : vector<8x8xf32>
    %cst_199 = arith.constant dense<0.000000e+00> : vector<8xf32>
    %233 = vector.multi_reduction <add>, %232, %cst_199 [1] : vector<8x8xf32> to vector<8xf32>
    %234 = vector.shape_cast %233 : vector<8xf32> to vector<8x1xf32>
    %235 = tpu.reciprocal %234 {approx = true} : vector<8x1xf32> -> vector<8x1xf32>
    %236 = vector.broadcast %235 : vector<8x1xf32> to vector<8x8xf32>
    %237 = arith.mulf %232, %236 : vector<8x8xf32>
    %cst_200 = arith.constant dense<0.000000e+00> : vector<8x8xf32>
    %238 = tpu.matmul %237, %224, %cst_200 {dimension_numbers = #tpu.dot_dimension_numbers<[1], [0], [0], [1], [0, 0, 1, 1], [], []>} : vector<8x8xf32>, vector<8x8xf32>, vector<8x8xf32> -> vector<8x8xf32>
    %c0_201 = arith.constant 0 : index
    %c3_202 = arith.constant 3 : index
    %c0_203 = arith.constant 0 : index
    %c0_204 = arith.constant 0 : index
    %239 = vector.load %arg7[%c0_201, %c3_202, %c0_203, %c0_204] : memref<1x4x8x32xf32, #tpu.memory_space<vmem>>, vector<1x1x8x32xf32>
    %240 = vector.shape_cast %239 : vector<1x1x8x32xf32> to vector<8x32xf32>
    %cst_205 = arith.constant dense<0.000000e+00> : vector<8x32xf32>
    %241 = tpu.matmul %238, %240, %cst_205 {dimension_numbers = #tpu.dot_dimension_numbers<[1], [0], [0], [1], [0, 0, 1, 1], [], []>} : vector<8x8xf32>, vector<8x32xf32>, vector<8x32xf32> -> vector<8x32xf32>
    %242 = arith.addf %215, %241 : vector<8x32xf32>
    %c8 = arith.constant 8 : index
    %c0_206 = arith.constant 0 : index
    %243 = vector.load %arg13[%c8, %c0_206] : memref<16x32xf32, #tpu.memory_space<vmem>>, vector<8x32xf32>
    tpu.vector_store %arg13[%c8, %c0_206], %242 {strides = array<i32>} : memref<16x32xf32, #tpu.memory_space<vmem>>, vector<8x32xf32>,
    %c0_207 = arith.constant 0 : index
    %c0_208 = arith.constant 0 : index
    %244 = vector.load %arg13[%c0_207, %c0_208] : memref<16x32xf32, #tpu.memory_space<vmem>>, vector<16x32xf32>
    %245 = arith.addf %3, %244 : vector<16x32xf32>
    %c0_209 = arith.constant 0 : index
    %c0_210 = arith.constant 0 : index
    %c0_211 = arith.constant 0 : index
    %246 = vector.load %arg8[%c0_209, %c0_210, %c0_211] : memref<1x1x32xf32, #tpu.memory_space<vmem>>, vector<1x1x32xf32>
    %247 = vector.shape_cast %246 : vector<1x1x32xf32> to vector<1x32xf32>
    %248 = arith.mulf %245, %245 : vector<16x32xf32>
    %cst_212 = arith.constant dense<0.000000e+00> : vector<16xf32>
    %249 = vector.multi_reduction <add>, %248, %cst_212 [1] : vector<16x32xf32> to vector<16xf32>
    %250 = vector.shape_cast %249 : vector<16xf32> to vector<16x1xf32>
    %cst_213 = arith.constant 3.200000e+01 : f32
    %251 = vector.broadcast %cst_213 : f32 to vector<16x1xf32>
    %252 = arith.divf %250, %251 : vector<16x1xf32>
    %cst_214 = arith.constant 9.99999997E-7 : f32
    %253 = vector.broadcast %cst_214 : f32 to vector<16x1xf32>
    %254 = arith.addf %252, %253 : vector<16x1xf32>
    %255 = math.rsqrt %254 : vector<16x1xf32>
    %256 = vector.broadcast %255 : vector<16x1xf32> to vector<16x32xf32>
    %257 = arith.mulf %245, %256 : vector<16x32xf32>
    %258 = vector.broadcast %247 : vector<1x32xf32> to vector<16x32xf32>
    %259 = arith.mulf %257, %258 : vector<16x32xf32>
    %c0_215 = arith.constant 0 : index
    %c0_216 = arith.constant 0 : index
    %c0_217 = arith.constant 0 : index
    %260 = vector.load %arg9[%c0_215, %c0_216, %c0_217] : memref<1x32x64xf32, #tpu.memory_space<vmem>>, vector<1x32x64xf32>
    %261 = vector.shape_cast %260 : vector<1x32x64xf32> to vector<32x64xf32>
    %cst_218 = arith.constant dense<0.000000e+00> : vector<16x64xf32>
    %262 = tpu.matmul %259, %261, %cst_218 {dimension_numbers = #tpu.dot_dimension_numbers<[1], [0], [0], [1], [0, 0, 1, 1], [], []>} : vector<16x32xf32>, vector<32x64xf32>, vector<16x64xf32> -> vector<16x64xf32>
    %cst_219 = arith.constant 0.000000e+00 : f32
    %263 = vector.broadcast %cst_219 : f32 to vector<16x64xf32>
    %264 = arith.maximumf %262, %263 : vector<16x64xf32>
    %c0_220 = arith.constant 0 : index
    %c0_221 = arith.constant 0 : index
    %c0_222 = arith.constant 0 : index
    %265 = vector.load %arg10[%c0_220, %c0_221, %c0_222] : memref<1x64x32xf32, #tpu.memory_space<vmem>>, vector<1x64x32xf32>
    %266 = vector.shape_cast %265 : vector<1x64x32xf32> to vector<64x32xf32>
    %cst_223 = arith.constant dense<0.000000e+00> : vector<16x32xf32>
    %267 = tpu.matmul %264, %266, %cst_223 {dimension_numbers = #tpu.dot_dimension_numbers<[1], [0], [0], [1], [0, 0, 1, 1], [], []>} : vector<16x64xf32>, vector<64x32xf32>, vector<16x32xf32> -> vector<16x32xf32>
    %268 = arith.addf %245, %267 : vector<16x32xf32>
    %c0_224 = arith.constant 0 : index
    %c0_225 = arith.constant 0 : index
    %269 = vector.load %arg12[%c0_224, %c0_225] : memref<16x32xf32, #tpu.memory_space<vmem>>, vector<16x32xf32>
    tpu.vector_store %arg12[%c0_224, %c0_225], %268 {strides = array<i32>} : memref<16x32xf32, #tpu.memory_space<vmem>>, vector<16x32xf32>,
    %c1_i32 = arith.constant 1 : i32
    %270 = arith.cmpi eq, %arg0, %c1_i32 : i32
    %271 = arith.extui %270 : i1 to i32
    %c0_i32_226 = arith.constant 0 : i32
    %272 = arith.cmpi ne, %271, %c0_i32_226 : i32
    scf.if %272 {
      %c0_227 = arith.constant 0 : index
      %c0_228 = arith.constant 0 : index
      %273 = vector.load %arg12[%c0_227, %c0_228] : memref<16x32xf32, #tpu.memory_space<vmem>>, vector<16x32xf32>
      %c0_229 = arith.constant 0 : index
      %c0_230 = arith.constant 0 : index
      %274 = vector.load %arg11[%c0_229, %c0_230] : memref<1x32xf32, #tpu.memory_space<vmem>>, vector<1x32xf32>
      %275 = arith.mulf %273, %273 : vector<16x32xf32>
      %cst_231 = arith.constant dense<0.000000e+00> : vector<16xf32>
      %276 = vector.multi_reduction <add>, %275, %cst_231 [1] : vector<16x32xf32> to vector<16xf32>
      %277 = vector.shape_cast %276 : vector<16xf32> to vector<16x1xf32>
      %cst_232 = arith.constant 3.200000e+01 : f32
      %278 = vector.broadcast %cst_232 : f32 to vector<16x1xf32>
      %279 = arith.divf %277, %278 : vector<16x1xf32>
      %cst_233 = arith.constant 9.99999997E-7 : f32
      %280 = vector.broadcast %cst_233 : f32 to vector<16x1xf32>
      %281 = arith.addf %279, %280 : vector<16x1xf32>
      %282 = math.rsqrt %281 : vector<16x1xf32>
      %283 = vector.broadcast %282 : vector<16x1xf32> to vector<16x32xf32>
      %284 = arith.mulf %273, %283 : vector<16x32xf32>
      %285 = vector.broadcast %274 : vector<1x32xf32> to vector<16x32xf32>
      %286 = arith.mulf %284, %285 : vector<16x32xf32>
      %c0_234 = arith.constant 0 : index
      %c0_235 = arith.constant 0 : index
      %287 = vector.load %arg12[%c0_234, %c0_235] : memref<16x32xf32, #tpu.memory_space<vmem>>, vector<16x32xf32>
      tpu.vector_store %arg12[%c0_234, %c0_235], %286 {strides = array<i32>} : memref<16x32xf32, #tpu.memory_space<vmem>>, vector<16x32xf32>,
    } else {
    }
    return
  }
  func.func @transform_0(%arg0: i32) -> (i32, i32) {
    %c0_i32 = arith.constant 0 : i32
    %c0_i32_0 = arith.constant 0 : i32
    %c0_i32_1 = arith.constant 0 : i32
    return %c0_i32, %c0_i32_0 : i32, i32
  }
  func.func @transform_1(%arg0: i32) -> (i32, i32, i32) {
    %c0_i32 = arith.constant 0 : i32
    %c0_i32_0 = arith.constant 0 : i32
    %c0_i32_1 = arith.constant 0 : i32
    %c0_i32_2 = arith.constant 0 : i32
    return %c0_i32, %c0_i32_0, %c0_i32_1 : i32, i32, i32
  }
  func.func @transform_2(%arg0: i32) -> (i32, i32, i32) {
    %c0_i32 = arith.constant 0 : i32
    %c0_i32_0 = arith.constant 0 : i32
    %c0_i32_1 = arith.constant 0 : i32
    return %arg0, %c0_i32, %c0_i32_0 : i32, i32, i32
  }
  func.func @transform_3(%arg0: i32) -> (i32, i32, i32, i32) {
    %c0_i32 = arith.constant 0 : i32
    %c0_i32_0 = arith.constant 0 : i32
    %c0_i32_1 = arith.constant 0 : i32
    %c0_i32_2 = arith.constant 0 : i32
    return %arg0, %c0_i32, %c0_i32_0, %c0_i32_1 : i32, i32, i32, i32
  }
  func.func @transform_4(%arg0: i32) -> (i32, i32, i32, i32) {
    %c0_i32 = arith.constant 0 : i32
    %c0_i32_0 = arith.constant 0 : i32
    %c0_i32_1 = arith.constant 0 : i32
    %c0_i32_2 = arith.constant 0 : i32
    return %arg0, %c0_i32, %c0_i32_0, %c0_i32_1 : i32, i32, i32, i32
  }
  func.func @transform_5(%arg0: i32) -> (i32, i32, i32, i32) {
    %c0_i32 = arith.constant 0 : i32
    %c0_i32_0 = arith.constant 0 : i32
    %c0_i32_1 = arith.constant 0 : i32
    %c0_i32_2 = arith.constant 0 : i32
    return %arg0, %c0_i32, %c0_i32_0, %c0_i32_1 : i32, i32, i32, i32
  }
  func.func @transform_6(%arg0: i32) -> (i32, i32, i32, i32) {
    %c0_i32 = arith.constant 0 : i32
    %c0_i32_0 = arith.constant 0 : i32
    %c0_i32_1 = arith.constant 0 : i32
    %c0_i32_2 = arith.constant 0 : i32
    return %arg0, %c0_i32, %c0_i32_0, %c0_i32_1 : i32, i32, i32, i32
  }
  func.func @transform_7(%arg0: i32) -> (i32, i32, i32) {
    %c0_i32 = arith.constant 0 : i32
    %c0_i32_0 = arith.constant 0 : i32
    %c0_i32_1 = arith.constant 0 : i32
    return %arg0, %c0_i32, %c0_i32_0 : i32, i32, i32
  }
  func.func @transform_8(%arg0: i32) -> (i32, i32, i32) {
    %c0_i32 = arith.constant 0 : i32
    %c0_i32_0 = arith.constant 0 : i32
    %c0_i32_1 = arith.constant 0 : i32
    return %arg0, %c0_i32, %c0_i32_0 : i32, i32, i32
  }
  func.func @transform_9(%arg0: i32) -> (i32, i32, i32) {
    %c0_i32 = arith.constant 0 : i32
    %c0_i32_0 = arith.constant 0 : i32
    %c0_i32_1 = arith.constant 0 : i32
    return %arg0, %c0_i32, %c0_i32_0 : i32, i32, i32
  }
  func.func @transform_10(%arg0: i32) -> (i32, i32) {
    %c0_i32 = arith.constant 0 : i32
    %c0_i32_0 = arith.constant 0 : i32
    %c0_i32_1 = arith.constant 0 : i32
    return %c0_i32, %c0_i32_0 : i32, i32
  }
  func.func @transform_11(%arg0: i32) -> (i32, i32) {
    %c0_i32 = arith.constant 0 : i32
    %c0_i32_0 = arith.constant 0 : i32
    %c0_i32_1 = arith.constant 0 : i32
    return %c0_i32, %c0_i32_0 : i32, i32
  }
}

</mosaic_0001>

<llo_original>
// kernel: encoder_forward.1
$region0: #{encoder_forward.1}
  #allocation0 [shape = 'u32[]', space=smem, size = 0x4, offset = 0x4, fixed_abs, tag = 'smem constant byte address 0x4 - core index']
  #allocation1 [shape = 'u32[144,128]{1,0:T(1,128)}', space=vmem, size = 0x12000, scoped, tag = 'internal scratch']
  #allocation2 [shape = 'f32[16,32]{1,0:T(8,128)}', space=vmem, size = 0x2000, scoped, tag = 'scratch operand']
  %s0 = inlined_call_operand.vmem [shape: f32[16,32], index: 0, kind: input, shape index: {}]
  %s1 = inlined_call_operand.vmem [shape: f32[2,1,8], index: 1, kind: input, shape index: {}]
  %s2 = inlined_call_operand.vmem [shape: f32[2,1,32], index: 2, kind: input, shape index: {}]
  %s3 = inlined_call_operand.vmem [shape: f32[2,4,32,8], index: 3, kind: input, shape index: {}]
  %s4 = inlined_call_operand.vmem [shape: f32[2,4,32,8], index: 4, kind: input, shape index: {}]
  %s5 = inlined_call_operand.vmem [shape: f32[2,4,32,8], index: 5, kind: input, shape index: {}]
  %s6 = inlined_call_operand.vmem [shape: f32[2,4,8,32], index: 6, kind: input, shape index: {}]
  %s7 = inlined_call_operand.vmem [shape: f32[2,1,32], index: 7, kind: input, shape index: {}]
  %s8 = inlined_call_operand.vmem [shape: f32[2,32,64], index: 8, kind: input, shape index: {}]
  %s9 = inlined_call_operand.vmem [shape: f32[2,64,32], index: 9, kind: input, shape index: {}]
  %s10 = inlined_call_operand.vmem [shape: f32[1,32], index: 10, kind: input, shape index: {}]
  %s11 = inlined_call_operand.hbm [shape: f32[16,32], index: 11, kind: output, shape index: {}]
  %s12 = sld [smem:[#allocation0]]
  $region85: #{encoder_forward.1} parent=0
    _
  %s14 = ssub.s32 1, %s12
  %s15 = scalar_select 0, %s14, %s12
  $region1: #{encoder_forward.1} parent=0
    #allocation3 [shape = 'u8[8192]{0}', space=vmem, size = 0x2000, scoped, tag = 'output window, operand 0, single buffered']
    #allocation4 [shape = 's32[2]{0}', space=sflag, size = 0x8, scoped, tag = 'scoped memory for encoder_forward.1']
    %16 = vsyncpa [#allocation4], 0
    loop: start=0, step=1, limit=4
    $region2: #{encoder_forward.1} parent=1 // loop_pre_header
      _
    $region3: #{encoder_forward.1} parent=1 // loop_header
      %s18 = sphi 0, %s22
      %p19 = scmp.ge.s32.totalorder %s18, 4
      %s26 = sphi 0, %s26
      %s28 = sphi 0, %s26
      %s29 = sphi 0, %s28
      %s43 = sphi 0, %s29
      %s47 = sphi 0, %s47
      %s49 = sphi 0, %s47
      %s50 = sphi 0, %s49
      %s64 = sphi 0, %s50
      %s70 = sphi 0, %s72
      %s73 = sphi 0, %s70
      %s74 = sphi 0, %s73
      %s90 = sphi 0, %s74
      %s96 = sphi 0, %s98
      %s99 = sphi 0, %s96
      %s100 = sphi 0, %s99
      %s116 = sphi 0, %s100
      %s122 = sphi 0, %s124
      %s125 = sphi 0, %s122
      %s126 = sphi 0, %s125
      %s142 = sphi 0, %s126
      %s148 = sphi 0, %s150
      %s151 = sphi 0, %s148
      %s152 = sphi 0, %s151
      %s168 = sphi 0, %s152
      %s174 = sphi 0, %s176
      %s177 = sphi 0, %s174
      %s178 = sphi 0, %s177
      %s194 = sphi 0, %s178
      %s200 = sphi 0, %s202
      %s203 = sphi 0, %s200
      %s204 = sphi 0, %s203
      %s220 = sphi 0, %s204
      %s226 = sphi 0, %s228
      %s229 = sphi 0, %s226
      %s230 = sphi 0, %s229
      %s246 = sphi 0, %s230
      %s252 = sphi 0, %s254
      %s255 = sphi 0, %s252
      %s256 = sphi 0, %s255
      %s272 = sphi 0, %s256
      %s276 = sphi 0, %s276
      %s278 = sphi 0, %s276
      %s279 = sphi 0, %s278
      %s293 = sphi 0, %s279
      %s297 = sphi 0, %s297
      %s299 = sphi 0, %s297
      %s300 = sphi 0, %s299
      %s314 = sphi 0, %s300
    $region4: #{encoder_forward.1} parent=1 // loop_header_branch
      %21 = sbr.rel (%p19) target = $region8
    $region5: #{encoder_forward.1} parent=1 // loop_body
      %s23 = ssub.s32 %s18, 1
      %s24 = ssub.s32 %s18, 2
      %s25 = sadd.s32 %s18, 1
      %s27 = sadd.s32 %s26, 1
      %p30 = scmp.eq.s32.totalorder %s18, 1
      %p31 = scmp.ne.s32.totalorder %s26, %s28
      %p32 = scmp.eq.s32.totalorder %s18, 0
      %p33 = por %p31, %p32
      %p34 = scmp.ne.s32.totalorder %s26, %s28
      %p35 = scmp.eq.s32.totalorder %s23, 1
      %p36 = por %p34, %p35
      %p37 = scmp.ne.s32.totalorder %s28, %s29
      %p38 = scmp.eq.s32.totalorder %s23, 0
      %p39 = por %p37, %p38
      %p40 = scmp.ne.s32.totalorder %s28, %s29
      %p41 = scmp.eq.s32.totalorder %s24, 1
      %p42 = por %p40, %p41
      %p44 = scmp.ne.s32.totalorder %s29, %s43
      %p45 = scmp.eq.s32.totalorder %s24, 0
      %p46 = por %p44, %p45
      %s48 = sadd.s32 %s47, 1
      %p51 = scmp.eq.s32.totalorder %s18, 1
      %p52 = scmp.ne.s32.totalorder %s47, %s49
      %p53 = scmp.eq.s32.totalorder %s18, 0
      %p54 = por %p52, %p53
      %p55 = scmp.ne.s32.totalorder %s47, %s49
      %p56 = scmp.eq.s32.totalorder %s23, 1
      %p57 = por %p55, %p56
      %p58 = scmp.ne.s32.totalorder %s49, %s50
      %p59 = scmp.eq.s32.totalorder %s23, 0
      %p60 = por %p58, %p59
      %p61 = scmp.ne.s32.totalorder %s49, %s50
      %p62 = scmp.eq.s32.totalorder %s24, 1
      %p63 = por %p61, %p62
      %p65 = scmp.ne.s32.totalorder %s50, %s64
      %p66 = scmp.eq.s32.totalorder %s24, 0
      %p67 = por %p65, %p66
      %s68 = ssub.s32 %s18, %s25
      %p69 = scmp.eq.s32.totalorder %s68, 0
      %s71 = sadd.s32 %s70, 1
      %s72 = scalar_select %p69, %s70, %s71
      %p75 = pneg %p69
      %p76 = scmp.eq.s32.totalorder %s18, 1
      %p77 = por %p75, %p76
      %p78 = scmp.ne.s32.totalorder %s70, %s73
      %p79 = scmp.eq.s32.totalorder %s18, 0
      %p80 = por %p78, %p79
      %p81 = scmp.ne.s32.totalorder %s70, %s73
      %p82 = scmp.eq.s32.totalorder %s23, 1
      %p83 = por %p81, %p82
      %p84 = scmp.ne.s32.totalorder %s73, %s74
      %p85 = scmp.eq.s32.totalorder %s23, 0
      %p86 = por %p84, %p85
      %p87 = scmp.ne.s32.totalorder %s73, %s74
      %p88 = scmp.eq.s32.totalorder %s24, 1
      %p89 = por %p87, %p88
      %p91 = scmp.ne.s32.totalorder %s74, %s90
      %p92 = scmp.eq.s32.totalorder %s24, 0
      %p93 = por %p91, %p92
      %s94 = ssub.s32 %s18, %s25
      %p95 = scmp.eq.s32.totalorder %s94, 0
      %s97 = sadd.s32 %s96, 1
      %s98 = scalar_select %p95, %s96, %s97
      %p101 = pneg %p95
      %p102 = scmp.eq.s32.totalorder %s18, 1
      %p103 = por %p101, %p102
      %p104 = scmp.ne.s32.totalorder %s96, %s99
      %p105 = scmp.eq.s32.totalorder %s18, 0
      %p106 = por %p104, %p105
      %p107 = scmp.ne.s32.totalorder %s96, %s99
      %p108 = scmp.eq.s32.totalorder %s23, 1
      %p109 = por %p107, %p108
      %p110 = scmp.ne.s32.totalorder %s99, %s100
      %p111 = scmp.eq.s32.totalorder %s23, 0
      %p112 = por %p110, %p111
      %p113 = scmp.ne.s32.totalorder %s99, %s100
      %p114 = scmp.eq.s32.totalorder %s24, 1
      %p115 = por %p113, %p114
      %p117 = scmp.ne.s32.totalorder %s100, %s116
      %p118 = scmp.eq.s32.totalorder %s24, 0
      %p119 = por %p117, %p118
      %s120 = ssub.s32 %s18, %s25
      %p121 = scmp.eq.s32.totalorder %s120, 0
      %s123 = sadd.s32 %s122, 1
      %s124 = scalar_select %p121, %s122, %s123
      %p127 = pneg %p121
      %p128 = scmp.eq.s32.totalorder %s18, 1
      %p129 = por %p127, %p128
      %p130 = scmp.ne.s32.totalorder %s122, %s125
      %p131 = scmp.eq.s32.totalorder %s18, 0
      %p132 = por %p130, %p131
      %p133 = scmp.ne.s32.totalorder %s122, %s125
      %p134 = scmp.eq.s32.totalorder %s23, 1
      %p135 = por %p133, %p134
      %p136 = scmp.ne.s32.totalorder %s125, %s126
      %p137 = scmp.eq.s32.totalorder %s23, 0
      %p138 = por %p136, %p137
      %p139 = scmp.ne.s32.totalorder %s125, %s126
      %p140 = scmp.eq.s32.totalorder %s24, 1
      %p141 = por %p139, %p140
      %p143 = scmp.ne.s32.totalorder %s126, %s142
      %p144 = scmp.eq.s32.totalorder %s24, 0
      %p145 = por %p143, %p144
      %s146 = ssub.s32 %s18, %s25
      %p147 = scmp.eq.s32.totalorder %s146, 0
      %s149 = sadd.s32 %s148, 1
      %s150 = scalar_select %p147, %s148, %s149
      %p153 = pneg %p147
      %p154 = scmp.eq.s32.totalorder %s18, 1
      %p155 = por %p153, %p154
      %p156 = scmp.ne.s32.totalorder %s148, %s151
      %p157 = scmp.eq.s32.totalorder %s18, 0
      %p158 = por %p156, %p157
      %p159 = scmp.ne.s32.totalorder %s148, %s151
      %p160 = scmp.eq.s32.totalorder %s23, 1
      %p161 = por %p159, %p160
      %p162 = scmp.ne.s32.totalorder %s151, %s152
      %p163 = scmp.eq.s32.totalorder %s23, 0
      %p164 = por %p162, %p163
      %p165 = scmp.ne.s32.totalorder %s151, %s152
      %p166 = scmp.eq.s32.totalorder %s24, 1
      %p167 = por %p165, %p166
      %p169 = scmp.ne.s32.totalorder %s152, %s168
      %p170 = scmp.eq.s32.totalorder %s24, 0
      %p171 = por %p169, %p170
      %s172 = ssub.s32 %s18, %s25
      %p173 = scmp.eq.s32.totalorder %s172, 0
      %s175 = sadd.s32 %s174, 1
      %s176 = scalar_select %p173, %s174, %s175
      %p179 = pneg %p173
      %p180 = scmp.eq.s32.totalorder %s18, 1
      %p181 = por %p179, %p180
      %p182 = scmp.ne.s32.totalorder %s174, %s177
      %p183 = scmp.eq.s32.totalorder %s18, 0
      %p184 = por %p182, %p183
      %p185 = scmp.ne.s32.totalorder %s174, %s177
      %p186 = scmp.eq.s32.totalorder %s23, 1
      %p187 = por %p185, %p186
      %p188 = scmp.ne.s32.totalorder %s177, %s178
      %p189 = scmp.eq.s32.totalorder %s23, 0
      %p190 = por %p188, %p189
      %p191 = scmp.ne.s32.totalorder %s177, %s178
      %p192 = scmp.eq.s32.totalorder %s24, 1
      %p193 = por %p191, %p192
      %p195 = scmp.ne.s32.totalorder %s178, %s194
      %p196 = scmp.eq.s32.totalorder %s24, 0
      %p197 = por %p195, %p196
      %s198 = ssub.s32 %s18, %s25
      %p199 = scmp.eq.s32.totalorder %s198, 0
      %s201 = sadd.s32 %s200, 1
      %s202 = scalar_select %p199, %s200, %s201
      %p205 = pneg %p199
      %p206 = scmp.eq.s32.totalorder %s18, 1
      %p207 = por %p205, %p206
      %p208 = scmp.ne.s32.totalorder %s200, %s203
      %p209 = scmp.eq.s32.totalorder %s18, 0
      %p210 = por %p208, %p209
      %p211 = scmp.ne.s32.totalorder %s200, %s203
      %p212 = scmp.eq.s32.totalorder %s23, 1
      %p213 = por %p211, %p212
      %p214 = scmp.ne.s32.totalorder %s203, %s204
      %p215 = scmp.eq.s32.totalorder %s23, 0
      %p216 = por %p214, %p215
      %p217 = scmp.ne.s32.totalorder %s203, %s204
      %p218 = scmp.eq.s32.totalorder %s24, 1
      %p219 = por %p217, %p218
      %p221 = scmp.ne.s32.totalorder %s204, %s220
      %p222 = scmp.eq.s32.totalorder %s24, 0
      %p223 = por %p221, %p222
      %s224 = ssub.s32 %s18, %s25
      %p225 = scmp.eq.s32.totalorder %s224, 0
      %s227 = sadd.s32 %s226, 1
      %s228 = scalar_select %p225, %s226, %s227
      %p231 = pneg %p225
      %p232 = scmp.eq.s32.totalorder %s18, 1
      %p233 = por %p231, %p232
      %p234 = scmp.ne.s32.totalorder %s226, %s229
      %p235 = scmp.eq.s32.totalorder %s18, 0
      %p236 = por %p234, %p235
      %p237 = scmp.ne.s32.totalorder %s226, %s229
      %p238 = scmp.eq.s32.totalorder %s23, 1
      %p239 = por %p237, %p238
      %p240 = scmp.ne.s32.totalorder %s229, %s230
      %p241 = scmp.eq.s32.totalorder %s23, 0
      %p242 = por %p240, %p241
      %p243 = scmp.ne.s32.totalorder %s229, %s230
      %p244 = scmp.eq.s32.totalorder %s24, 1
      %p245 = por %p243, %p244
      %p247 = scmp.ne.s32.totalorder %s230, %s246
      %p248 = scmp.eq.s32.totalorder %s24, 0
      %p249 = por %p247, %p248
      %s250 = ssub.s32 %s18, %s25
      %p251 = scmp.eq.s32.totalorder %s250, 0
      %s253 = sadd.s32 %s252, 1
      %s254 = scalar_select %p251, %s252, %s253
      %p257 = pneg %p251
      %p258 = scmp.eq.s32.totalorder %s18, 1
      %p259 = por %p257, %p258
      %p260 = scmp.ne.s32.totalorder %s252, %s255
      %p261 = scmp.eq.s32.totalorder %s18, 0
      %p262 = por %p260, %p261
      %p263 = scmp.ne.s32.totalorder %s252, %s255
      %p264 = scmp.eq.s32.totalorder %s23, 1
      %p265 = por %p263, %p264
      %p266 = scmp.ne.s32.totalorder %s255, %s256
      %p267 = scmp.eq.s32.totalorder %s23, 0
      %p268 = por %p266, %p267
      %p269 = scmp.ne.s32.totalorder %s255, %s256
      %p270 = scmp.eq.s32.totalorder %s24, 1
      %p271 = por %p269, %p270
      %p273 = scmp.ne.s32.totalorder %s256, %s272
      %p274 = scmp.eq.s32.totalorder %s24, 0
      %p275 = por %p273, %p274
      %s277 = sadd.s32 %s276, 1
      %p280 = scmp.eq.s32.totalorder %s18, 1
      %p281 = scmp.ne.s32.totalorder %s276, %s278
      %p282 = scmp.eq.s32.totalorder %s18, 0
      %p283 = por %p281, %p282
      %p284 = scmp.ne.s32.totalorder %s276, %s278
      %p285 = scmp.eq.s32.totalorder %s23, 1
      %p286 = por %p284, %p285
      %p287 = scmp.ne.s32.totalorder %s278, %s279
      %p288 = scmp.eq.s32.totalorder %s23, 0
      %p289 = por %p287, %p288
      %p290 = scmp.ne.s32.totalorder %s278, %s279
      %p291 = scmp.eq.s32.totalorder %s24, 1
      %p292 = por %p290, %p291
      %p294 = scmp.ne.s32.totalorder %s279, %s293
      %p295 = scmp.eq.s32.totalorder %s24, 0
      %p296 = por %p294, %p295
      %s298 = sadd.s32 %s297, 1
      %p301 = scmp.eq.s32.totalorder %s18, 1
      %p302 = scmp.ne.s32.totalorder %s297, %s299
      %p303 = scmp.eq.s32.totalorder %s18, 0
      %p304 = por %p302, %p303
      %p305 = scmp.ne.s32.totalorder %s297, %s299
      %p306 = scmp.eq.s32.totalorder %s23, 1
      %p307 = por %p305, %p306
      %p308 = scmp.ne.s32.totalorder %s299, %s300
      %p309 = scmp.eq.s32.totalorder %s23, 0
      %p310 = por %p308, %p309
      %p311 = scmp.ne.s32.totalorder %s299, %s300
      %p312 = scmp.eq.s32.totalorder %s24, 1
      %p313 = por %p311, %p312
      %p315 = scmp.ne.s32.totalorder %s300, %s314
      %p316 = scmp.eq.s32.totalorder %s24, 0
      %p317 = por %p315, %p316
      %p318 = scmp.le.s32.totalorder 1, %s18
      %p319 = scmp.lt.s32.totalorder %s18, 3
      %p320 = pnand %p318, %p319
      %p321 = pneg %p320
      // Predicated region
      $region9: #{encoder_forward.1} parent=5 // pred_check
        _
      $region10: #{encoder_forward.1} parent=5 // pred_check_branch
        %323 = sbr.rel (%p320) target = $region12
      $region11: #{encoder_forward.1} parent=5 // pred_region
        %s324 = ssub.s32 %s18, 1
        // Predicated region
        $region13: #{encoder_forward.1} parent=11 // pred_check
          %p325 = pneg %p39
        $region14: #{encoder_forward.1} parent=11 // pred_check_branch
          %327 = sbr.rel (%p325) target = $region16
        $region15: #{encoder_forward.1} parent=11 // pred_region
          _
        $region16: #{encoder_forward.1} parent=11 // pred_fallthru
          _
        // Predicated region
        $region17: #{encoder_forward.1} parent=11 // pred_check
          %p328 = pneg %p60
        $region18: #{encoder_forward.1} parent=11 // pred_check_branch
          %330 = sbr.rel (%p328) target = $region20
        $region19: #{encoder_forward.1} parent=11 // pred_region
          _
        $region20: #{encoder_forward.1} parent=11 // pred_fallthru
          _
        // Predicated region
        $region21: #{encoder_forward.1} parent=11 // pred_check
          %p331 = pneg %p289
        $region22: #{encoder_forward.1} parent=11 // pred_check_branch
          %333 = sbr.rel (%p331) target = $region24
        $region23: #{encoder_forward.1} parent=11 // pred_region
          _
        $region24: #{encoder_forward.1} parent=11 // pred_fallthru
          _
      $region12: #{encoder_forward.1} parent=5 // pred_fallthru
        _
      %p334 = scmp.lt.s32.totalorder %s18, 2
      // Predicated region
      $region25: #{encoder_forward.1} parent=5 // pred_check
        %p335 = pneg %p334
      $region26: #{encoder_forward.1} parent=5 // pred_check_branch
        %337 = sbr.rel (%p335) target = $region28
      $region27: #{encoder_forward.1} parent=5 // pred_region
        // Predicated region
        $region29: #{encoder_forward.1} parent=27 // pred_check
          %p338 = pneg %p80
        $region30: #{encoder_forward.1} parent=27 // pred_check_branch
          %340 = sbr.rel (%p338) target = $region32
        $region31: #{encoder_forward.1} parent=27 // pred_region
          %p341 = scmp.lt.s32.totalorder %s18, 1
          %s342 = scalar_select %p341, %s18, 1
          %s343 = scalar_lea.vmem %s2, %s342
        $region32: #{encoder_forward.1} parent=27 // pred_fallthru
          _
        // Predicated region
        $region33: #{encoder_forward.1} parent=27 // pred_check
          %p344 = pneg %p106
        $region34: #{encoder_forward.1} parent=27 // pred_check_branch
          %346 = sbr.rel (%p344) target = $region36
        $region35: #{encoder_forward.1} parent=27 // pred_region
          %p347 = scmp.lt.s32.totalorder %s18, 1
          %s348 = scalar_select %p347, %s18, 1
          %s349 = smul.addr %s348, 16
          %s350 = smul.addr %s349, 8
          %s351 = scalar_lea.vmem %s3, %s350
        $region36: #{encoder_forward.1} parent=27 // pred_fallthru
          _
        // Predicated region
        $region37: #{encoder_forward.1} parent=27 // pred_check
          %p352 = pneg %p132
        $region38: #{encoder_forward.1} parent=27 // pred_check_branch
          %354 = sbr.rel (%p352) target = $region40
        $region39: #{encoder_forward.1} parent=27 // pred_region
          %p355 = scmp.lt.s32.totalorder %s18, 1
          %s356 = scalar_select %p355, %s18, 1
          %s357 = smul.addr %s356, 16
          %s358 = smul.addr %s357, 8
          %s359 = scalar_lea.vmem %s4, %s358
        $region40: #{encoder_forward.1} parent=27 // pred_fallthru
          _
        // Predicated region
        $region41: #{encoder_forward.1} parent=27 // pred_check
          %p360 = pneg %p158
        $region42: #{encoder_forward.1} parent=27 // pred_check_branch
          %362 = sbr.rel (%p360) target = $region44
        $region43: #{encoder_forward.1} parent=27 // pred_region
          %p363 = scmp.lt.s32.totalorder %s18, 1
          %s364 = scalar_select %p363, %s18, 1
          %s365 = smul.addr %s364, 16
          %s366 = smul.addr %s365, 8
          %s367 = scalar_lea.vmem %s5, %s366
        $region44: #{encoder_forward.1} parent=27 // pred_fallthru
          _
        // Predicated region
        $region45: #{encoder_forward.1} parent=27 // pred_check
          %p368 = pneg %p184
        $region46: #{encoder_forward.1} parent=27 // pred_check_branch
          %370 = sbr.rel (%p368) target = $region48
        $region47: #{encoder_forward.1} parent=27 // pred_region
          %p371 = scmp.lt.s32.totalorder %s18, 1
          %s372 = scalar_select %p371, %s18, 1
          %s373 = smul.addr %s372, 4
          %s374 = smul.addr %s373, 8
          %s375 = scalar_lea.vmem %s6, %s374
        $region48: #{encoder_forward.1} parent=27 // pred_fallthru
          _
        // Predicated region
        $region49: #{encoder_forward.1} parent=27 // pred_check
          %p376 = pneg %p210
        $region50: #{encoder_forward.1} parent=27 // pred_check_branch
          %378 = sbr.rel (%p376) target = $region52
        $region51: #{encoder_forward.1} parent=27 // pred_region
          %p379 = scmp.lt.s32.totalorder %s18, 1
          %s380 = scalar_select %p379, %s18, 1
          %s381 = scalar_lea.vmem %s7, %s380
        $region52: #{encoder_forward.1} parent=27 // pred_fallthru
          _
        // Predicated region
        $region53: #{encoder_forward.1} parent=27 // pred_check
          %p382 = pneg %p236
        $region54: #{encoder_forward.1} parent=27 // pred_check_branch
          %384 = sbr.rel (%p382) target = $region56
        $region55: #{encoder_forward.1} parent=27 // pred_region
          %p385 = scmp.lt.s32.totalorder %s18, 1
          %s386 = scalar_select %p385, %s18, 1
          %s387 = smul.addr %s386, 4
          %s388 = smul.addr %s387, 8
          %s389 = scalar_lea.vmem %s8, %s388
        $region56: #{encoder_forward.1} parent=27 // pred_fallthru
          _
        // Predicated region
        $region57: #{encoder_forward.1} parent=27 // pred_check
          %p390 = pneg %p262
        $region58: #{encoder_forward.1} parent=27 // pred_check_branch
          %392 = sbr.rel (%p390) target = $region60
        $region59: #{encoder_forward.1} parent=27 // pred_region
          %p393 = scmp.lt.s32.totalorder %s18, 1
          %s394 = scalar_select %p393, %s18, 1
          %s395 = smul.addr %s394, 8
          %s396 = smul.addr %s395, 8
          %s397 = scalar_lea.vmem %s9, %s396
        $region60: #{encoder_forward.1} parent=27 // pred_fallthru
          _
      $region28: #{encoder_forward.1} parent=5 // pred_fallthru
        _
      %p398 = scmp.le.s32.totalorder 1, %s18
      %p399 = scmp.lt.s32.totalorder %s18, 3
      %p400 = pnand %p398, %p399
      %p401 = pneg %p400
      // Predicated region
      $region61: #{encoder_forward.1} parent=5 // pred_check
        _
      $region62: #{encoder_forward.1} parent=5 // pred_check_branch
        %403 = sbr.rel (%p400) target = $region64
      $region63: #{encoder_forward.1} parent=5 // pred_region
        %s404 = ssub.s32 %s18, 1
        %p405 = pneg %p39
        %p406 = pneg %p36
        %p407 = pneg %p60
        %p408 = pneg %p57
        %p409 = scmp.lt.s32.totalorder %s23, 1
        %s410 = scalar_select %p409, %s23, 1
        %s411 = scalar_lea.vmem %s2, %s410
        %p412 = pneg %p86
        %p413 = pneg %p83
        %p414 = scmp.lt.s32.totalorder %s23, 1
        %s415 = scalar_select %p414, %s23, 1
        %s416 = smul.addr %s415, 16
        %s417 = smul.addr %s416, 8
        %s418 = scalar_lea.vmem %s3, %s417
        %p419 = pneg %p112
        %p420 = pneg %p109
        %p421 = scmp.lt.s32.totalorder %s23, 1
        %s422 = scalar_select %p421, %s23, 1
        %s423 = smul.addr %s422, 16
        %s424 = smul.addr %s423, 8
        %s425 = scalar_lea.vmem %s4, %s424
        %p426 = pneg %p138
        %p427 = pneg %p135
        %p428 = scmp.lt.s32.totalorder %s23, 1
        %s429 = scalar_select %p428, %s23, 1
        %s430 = smul.addr %s429, 16
        %s431 = smul.addr %s430, 8
        %s432 = scalar_lea.vmem %s5, %s431
        %p433 = pneg %p164
        %p434 = pneg %p161
        %p435 = scmp.lt.s32.totalorder %s23, 1
        %s436 = scalar_select %p435, %s23, 1
        %s437 = smul.addr %s436, 4
        %s438 = smul.addr %s437, 8
        %s439 = scalar_lea.vmem %s6, %s438
        %p440 = pneg %p190
        %p441 = pneg %p187
        %p442 = scmp.lt.s32.totalorder %s23, 1
        %s443 = scalar_select %p442, %s23, 1
        %s444 = scalar_lea.vmem %s7, %s443
        %p445 = pneg %p216
        %p446 = pneg %p213
        %p447 = scmp.lt.s32.totalorder %s23, 1
        %s448 = scalar_select %p447, %s23, 1
        %s449 = smul.addr %s448, 4
        %s450 = smul.addr %s449, 8
        %s451 = scalar_lea.vmem %s8, %s450
        %p452 = pneg %p242
        %p453 = pneg %p239
        %p454 = scmp.lt.s32.totalorder %s23, 1
        %s455 = scalar_select %p454, %s23, 1
        %s456 = smul.addr %s455, 8
        %s457 = smul.addr %s456, 8
        %s458 = scalar_lea.vmem %s9, %s457
        %p459 = pneg %p268
        %p460 = pneg %p265
        %p461 = pneg %p289
        %p462 = pneg %p286
        %p463 = pneg %p310
        %p464 = pneg %p307
        %p465 = scmp.lt.s32.totalorder %s23, 1
        %s466 = scalar_select %p465, %s23, 1
        %s467 = scalar_lea.vmem %s2, %s466
        %p468 = scmp.lt.s32.totalorder %s23, 1
        %s469 = scalar_select %p468, %s23, 1
        %s470 = smul.addr %s469, 16
        %s471 = smul.addr %s470, 8
        %s472 = scalar_lea.vmem %s3, %s471
        %p473 = scmp.lt.s32.totalorder %s23, 1
        %s474 = scalar_select %p473, %s23, 1
        %s475 = smul.addr %s474, 16
        %s476 = smul.addr %s475, 8
        %s477 = scalar_lea.vmem %s4, %s476
        %p478 = scmp.lt.s32.totalorder %s23, 1
        %s479 = scalar_select %p478, %s23, 1
        %s480 = smul.addr %s479, 16
        %s481 = smul.addr %s480, 8
        %s482 = scalar_lea.vmem %s5, %s481
        %p483 = scmp.lt.s32.totalorder %s23, 1
        %s484 = scalar_select %p483, %s23, 1
        %s485 = smul.addr %s484, 4
        %s486 = smul.addr %s485, 8
        %s487 = scalar_lea.vmem %s6, %s486
        %p488 = scmp.lt.s32.totalorder %s23, 1
        %s489 = scalar_select %p488, %s23, 1
        %s490 = scalar_lea.vmem %s7, %s489
        %p491 = scmp.lt.s32.totalorder %s23, 1
        %s492 = scalar_select %p491, %s23, 1
        %s493 = smul.addr %s492, 4
        %s494 = smul.addr %s493, 8
        %s495 = scalar_lea.vmem %s8, %s494
        %p496 = scmp.lt.s32.totalorder %s23, 1
        %s497 = scalar_select %p496, %s23, 1
        %s498 = smul.addr %s497, 8
        %s499 = smul.addr %s498, 8
        %s500 = scalar_lea.vmem %s9, %s499
        %p501 = scmp.eq.s32.totalorder %s23, 0
        // Predicated region
        $region65: #{encoder_forward.1} parent=63 // pred_check
          %p502 = pneg %p501
        $region66: #{encoder_forward.1} parent=63 // pred_check_branch
          %504 = sbr.rel (%p502) target = $region68
        $region67: #{encoder_forward.1} parent=63 // pred_region
          %v505 = vld [vmem:[%s0] sm:$0xff]
          %v506 = vld [vmem:[%s0 + $0x8] sm:$0xff]
          %vm507 = vcmask 261120
          %508 = vst.msk [vmem:[#allocation3] sm:$0xff] %vm507, %v505
          %509 = vst.msk [vmem:[#allocation3 + $0x8] sm:$0xff] %vm507, %v506
        $region68: #{encoder_forward.1} parent=63 // pred_fallthru
          _
        %v510 = vld [vmem:[#allocation3] sm:$0xff]
        %v511 = vld [vmem:[#allocation3 + $0x8] sm:$0xff]
        %v512 = vld [vmem:[%s467] sm:$0x1]
        %v513 = vmul.f32 %v510, %v510
        %v514 = vmul.f32 %v511, %v511
        %vm515 = vcmask 261120
        %v516 = vsel %vm515, %v513, 0.0
        %517 = vadd.xlane.f32.xlu0 %v516
        %v518 = vpop.xlane.xlu0 %517
        %v519 = vsel %vm515, %v514, 0.0
        %520 = vadd.xlane.f32.xlu0 %v519
        %v521 = vpop.xlane.xlu0 %520
        %v522 = vrcp.pop 32.0
        %v523 = vmul.f32 %v518, %v522
        %v524 = vmul.f32 %v521, %v522
        %v525 = vadd.f32 %v523, 1e-06
        %v526 = vadd.f32 %v524, 1e-06
        %v527 = vrsqrt.pop %v525
        %v528 = vrsqrt.pop %v526
        %v529 = vmul.f32 %v510, %v527
        %v530 = vmul.f32 %v511, %v528
        %v532 = vlaneseq
        %v533 = vshrl.u32 %v532, 7
        %v534 = vsub.s32 0, %v533
        %v535 = vrot.slane %v512, %v534
        %v537 = vmul.f32 %v529, %v535
        %v538 = vmul.f32 %v530, %v535
        %v539 = vld [vmem:[%s1] sm:$0x1]
        %v540 = vld [vmem:[%s472] sm:$0xff]
        %v541 = vld [vmem:[%s472 + $0x8] sm:$0xff]
        %v542 = vld [vmem:[%s472 + $0x10] sm:$0xff]
        %v543 = vld [vmem:[%s472 + $0x18] sm:$0xff]
        %v545 = vsel %vm515, %v537, 0
        %547 = vmatprep.subr.mxu0 0.0
        %548 = vmatpush1.msra.mxu0 %v540
        %549 = vmatprep.subr.mxu0 0.0
        %550 = vmatpush1.msra.mxu0 %v541
        %551 = vmatprep.subr.mxu0 0.0
        %552 = vmatpush1.msra.mxu0 %v542
        %553 = vmatprep.subr.mxu0 0.0
        %554 = vmatpush1.msra.mxu0 %v543
        %555 = vmatprep.subr.mxu0 0.0
        %556 = vmatpush1.msra.mxu0 0.0
        %557 = vmatprep.subr.mxu0 0.0
        %558 = vmatpush1.msra.mxu0 0.0
        %559 = vmatprep.subr.mxu0 0.0
        %560 = vmatpush1.msra.mxu0 0.0
        %561 = vmatprep.subr.mxu0 0.0
        %562 = vmatpush1.msra.mxu0 0.0
        %563 = vmatprep.subr.mxu0 0.0
        %564 = vmatpush1.msra.mxu0 0.0
        %565 = vmatprep.subr.mxu0 0.0
        %566 = vmatpush1.msra.mxu0 0.0
        %567 = vmatprep.subr.mxu0 0.0
        %568 = vmatpush1.msra.mxu0 0.0
        %569 = vmatprep.subr.mxu0 0.0
        %570 = vmatpush1.msra.mxu0 0.0
        %571 = vmatprep.subr.mxu0 0.0
        %572 = vmatpush1.msra.mxu0 0.0
        %573 = vmatprep.subr.mxu0 0.0
        %574 = vmatpush1.msra.mxu0 0.0
        %575 = vmatprep.subr.mxu0 0.0
        %576 = vmatpush1.msra.mxu0 0.0
        %577 = vmatprep.subr.mxu0 0.0
        %578 = vmatpush1.msra.mxu0 0.0
        %579 = vmatprep.subr.mxu0 0.0
        %580 = vmatpush1.msra.mxu0 0.0
        %581 = vmatprep.subr.mxu0 0.0
        %582 = vmatpush1.msra.mxu0 0.0
        %583 = vmatprep.subr.mxu0 0.0
        %584 = vmatpush1.msra.mxu0 0.0
        %585 = vmatprep.subr.mxu0 0.0
        %586 = vmatpush1.msra.mxu0 0.0
        %587 = vmatprep.subr.mxu0 0.0
        %588 = vmatpush1.msra.mxu0 0.0
        %589 = vmatprep.subr.mxu0 0.0
        %590 = vmatpush1.msra.mxu0 0.0
        %591 = vmatprep.subr.mxu0 0.0
        %592 = vmatpush1.msra.mxu0 0.0
        %593 = vmatprep.subr.mxu0 0.0
        %594 = vmatpush1.msra.mxu0 0.0
        %595 = vmatprep.subr.mxu0 0.0
        %596 = vmatpush1.msra.mxu0 0.0
        %597 = vmatprep.subr.mxu0 0.0
        %598 = vmatpush1.msra.mxu0 0.0
        %599 = vmatprep.subr.mxu0 0.0
        %600 = vmatpush1.msra.mxu0 0.0
        %601 = vmatprep.subr.mxu0 0.0
        %602 = vmatpush1.msra.mxu0 0.0
        %603 = vmatprep.subr.mxu0 0.0
        %604 = vmatpush1.msra.mxu0 0.0
        %605 = vmatprep.subr.mxu0 0.0
        %606 = vmatpush1.msra.mxu0 0.0
        %607 = vmatprep.subr.mxu0 0.0
        %608 = vmatpush1.msra.mxu0 0.0
        %609 = vmatprep.subr.mxu0 0.0
        %610 = vmatpush1.msra.mxu0 0.0
        %611 = vmatprep.mubr.f32.mxu0 0.0
        %612 = vmatmul.mubr.f32.gmra.mrb[0].mxu0 %v545
        %v613 = vpop.f32.mrb[0].mxu0
        %v614 = vadd.f32 0.0, %v613
        %v615 = vpop.f32.mrb[0].mxu0
        %616 = vdwg.mxu0
        %v617 = vld [vmem:[%s477] sm:$0xff]
        %v618 = vld [vmem:[%s477 + $0x8] sm:$0xff]
        %v619 = vld [vmem:[%s477 + $0x10] sm:$0xff]
        %v620 = vld [vmem:[%s477 + $0x18] sm:$0xff]
        %621 = vmatprep.subr.mxu0 0.0
        %622 = vmatpush1.msra.mxu0 %v617
        %623 = vmatprep.subr.mxu0 0.0
        %624 = vmatpush1.msra.mxu0 %v618
        %625 = vmatprep.subr.mxu0 0.0
        %626 = vmatpush1.msra.mxu0 %v619
        %627 = vmatprep.subr.mxu0 0.0
        %628 = vmatpush1.msra.mxu0 %v620
        %629 = vmatprep.subr.mxu0 0.0
        %630 = vmatpush1.msra.mxu0 0.0
        %631 = vmatprep.subr.mxu0 0.0
        %632 = vmatpush1.msra.mxu0 0.0
        %633 = vmatprep.subr.mxu0 0.0
        %634 = vmatpush1.msra.mxu0 0.0
        %635 = vmatprep.subr.mxu0 0.0
        %636 = vmatpush1.msra.mxu0 0.0
        %637 = vmatprep.subr.mxu0 0.0
        %638 = vmatpush1.msra.mxu0 0.0
        %639 = vmatprep.subr.mxu0 0.0
        %640 = vmatpush1.msra.mxu0 0.0
        %641 = vmatprep.subr.mxu0 0.0
        %642 = vmatpush1.msra.mxu0 0.0
        %643 = vmatprep.subr.mxu0 0.0
        %644 = vmatpush1.msra.mxu0 0.0
        %645 = vmatprep.subr.mxu0 0.0
        %646 = vmatpush1.msra.mxu0 0.0
        %647 = vmatprep.subr.mxu0 0.0
        %648 = vmatpush1.msra.mxu0 0.0
        %649 = vmatprep.subr.mxu0 0.0
        %650 = vmatpush1.msra.mxu0 0.0
        %651 = vmatprep.subr.mxu0 0.0
        %652 = vmatpush1.msra.mxu0 0.0
        %653 = vmatprep.subr.mxu0 0.0
        %654 = vmatpush1.msra.mxu0 0.0
        %655 = vmatprep.subr.mxu0 0.0
        %656 = vmatpush1.msra.mxu0 0.0
        %657 = vmatprep.subr.mxu0 0.0
        %658 = vmatpush1.msra.mxu0 0.0
        %659 = vmatprep.subr.mxu0 0.0
        %660 = vmatpush1.msra.mxu0 0.0
        %661 = vmatprep.subr.mxu0 0.0
        %662 = vmatpush1.msra.mxu0 0.0
        %663 = vmatprep.subr.mxu0 0.0
        %664 = vmatpush1.msra.mxu0 0.0
        %665 = vmatprep.subr.mxu0 0.0
        %666 = vmatpush1.msra.mxu0 0.0
        %667 = vmatprep.subr.mxu0 0.0
        %668 = vmatpush1.msra.mxu0 0.0
        %669 = vmatprep.subr.mxu0 0.0
        %670 = vmatpush1.msra.mxu0 0.0
        %671 = vmatprep.subr.mxu0 0.0
        %672 = vmatpush1.msra.mxu0 0.0
        %673 = vmatprep.subr.mxu0 0.0
        %674 = vmatpush1.msra.mxu0 0.0
        %675 = vmatprep.subr.mxu0 0.0
        %676 = vmatpush1.msra.mxu0 0.0
        %677 = vmatprep.subr.mxu0 0.0
        %678 = vmatpush1.msra.mxu0 0.0
        %679 = vmatprep.subr.mxu0 0.0
        %680 = vmatpush1.msra.mxu0 0.0
        %681 = vmatprep.subr.mxu0 0.0
        %682 = vmatpush1.msra.mxu0 0.0
        %683 = vmatprep.subr.mxu0 0.0
        %684 = vmatpush1.msra.mxu0 0.0
        %685 = vmatprep.mubr.f32.mxu0 0.0
        %686 = vmatmul.mubr.f32.gmra.mrb[0].mxu0 %v545
        %v687 = vpop.f32.mrb[0].mxu0
        %v688 = vadd.f32 0.0, %v687
        %v689 = vpop.f32.mrb[0].mxu0
        %690 = vdwg.mxu0
        %v691 = vld [vmem:[%s482] sm:$0xff]
        %v692 = vld [vmem:[%s482 + $0x8] sm:$0xff]
        %v693 = vld [vmem:[%s482 + $0x10] sm:$0xff]
        %v694 = vld [vmem:[%s482 + $0x18] sm:$0xff]
        %695 = vmatprep.subr.mxu0 0.0
        %696 = vmatpush1.msra.mxu0 %v691
        %697 = vmatprep.subr.mxu0 0.0
        %698 = vmatpush1.msra.mxu0 %v692
        %699 = vmatprep.subr.mxu0 0.0
        %700 = vmatpush1.msra.mxu0 %v693
        %701 = vmatprep.subr.mxu0 0.0
        %702 = vmatpush1.msra.mxu0 %v694
        %703 = vmatprep.subr.mxu0 0.0
        %704 = vmatpush1.msra.mxu0 0.0
        %705 = vmatprep.subr.mxu0 0.0
        %706 = vmatpush1.msra.mxu0 0.0
        %707 = vmatprep.subr.mxu0 0.0
        %708 = vmatpush1.msra.mxu0 0.0
        %709 = vmatprep.subr.mxu0 0.0
        %710 = vmatpush1.msra.mxu0 0.0
        %711 = vmatprep.subr.mxu0 0.0
        %712 = vmatpush1.msra.mxu0 0.0
        %713 = vmatprep.subr.mxu0 0.0
        %714 = vmatpush1.msra.mxu0 0.0
        %715 = vmatprep.subr.mxu0 0.0
        %716 = vmatpush1.msra.mxu0 0.0
        %717 = vmatprep.subr.mxu0 0.0
        %718 = vmatpush1.msra.mxu0 0.0
        %719 = vmatprep.subr.mxu0 0.0
        %720 = vmatpush1.msra.mxu0 0.0
        %721 = vmatprep.subr.mxu0 0.0
        %722 = vmatpush1.msra.mxu0 0.0
        %723 = vmatprep.subr.mxu0 0.0
        %724 = vmatpush1.msra.mxu0 0.0
        %725 = vmatprep.subr.mxu0 0.0
        %726 = vmatpush1.msra.mxu0 0.0
        %727 = vmatprep.subr.mxu0 0.0
        %728 = vmatpush1.msra.mxu0 0.0
        %729 = vmatprep.subr.mxu0 0.0
        %730 = vmatpush1.msra.mxu0 0.0
        %731 = vmatprep.subr.mxu0 0.0
        %732 = vmatpush1.msra.mxu0 0.0
        %733 = vmatprep.subr.mxu0 0.0
        %734 = vmatpush1.msra.mxu0 0.0
        %735 = vmatprep.subr.mxu0 0.0
        %736 = vmatpush1.msra.mxu0 0.0
        %737 = vmatprep.subr.mxu0 0.0
        %738 = vmatpush1.msra.mxu0 0.0
        %739 = vmatprep.subr.mxu0 0.0
        %740 = vmatpush1.msra.mxu0 0.0
        %741 = vmatprep.subr.mxu0 0.0
        %742 = vmatpush1.msra.mxu0 0.0
        %743 = vmatprep.subr.mxu0 0.0
        %744 = vmatpush1.msra.mxu0 0.0
        %745 = vmatprep.subr.mxu0 0.0
        %746 = vmatpush1.msra.mxu0 0.0
        %747 = vmatprep.subr.mxu0 0.0
        %748 = vmatpush1.msra.mxu0 0.0
        %749 = vmatprep.subr.mxu0 0.0
        %750 = vmatpush1.msra.mxu0 0.0
        %751 = vmatprep.subr.mxu0 0.0
        %752 = vmatpush1.msra.mxu0 0.0
        %753 = vmatprep.subr.mxu0 0.0
        %754 = vmatpush1.msra.mxu0 0.0
        %755 = vmatprep.subr.mxu0 0.0
        %756 = vmatpush1.msra.mxu0 0.0
        %757 = vmatprep.subr.mxu0 0.0
        %758 = vmatpush1.msra.mxu0 0.0
        %759 = vmatprep.mubr.f32.mxu0 0.0
        %760 = vmatmul.mubr.f32.gmra.mrb[0].mxu0 %v545
        %v761 = vpop.f32.mrb[0].mxu0
        %v762 = vadd.f32 0.0, %v761
        %v763 = vpop.f32.mrb[0].mxu0
        %764 = vdwg.mxu0
        %v766 = vlaneseq
        %v767 = vshrl.u32 %v766, 7
        %v768 = vsub.s32 0, %v767
        %v769 = vrot.slane %v539, %v768
        %vm771 = vcmask 64512
        %v773 = vsel %vm771, %v614, 0
        %v776 = vsel %vm771, %v688, 0
        %778 = vmatprep.subr.mxu0 0.0
        %779 = vmatpush1.xpose.msra.mxu0 %v776
        %780 = vmatprep.subr.mxu0 0.0
        %781 = vmatpush1.xpose.msra.mxu0 0.0
        %782 = vmatprep.subr.mxu0 0.0
        %783 = vmatpush1.xpose.msra.mxu0 0.0
        %784 = vmatprep.subr.mxu0 0.0
        %785 = vmatpush1.xpose.msra.mxu0 0.0
        %786 = vmatprep.subr.mxu0 0.0
        %787 = vmatpush1.xpose.msra.mxu0 0.0
        %788 = vmatprep.subr.mxu0 0.0
        %789 = vmatpush1.xpose.msra.mxu0 0.0
        %790 = vmatprep.subr.mxu0 0.0
        %791 = vmatpush1.xpose.msra.mxu0 0.0
        %792 = vmatprep.subr.mxu0 0.0
        %793 = vmatpush1.xpose.msra.mxu0 0.0
        %794 = vmatprep.subr.mxu0 0.0
        %795 = vmatpush1.xpose.msra.mxu0 0.0
        %796 = vmatprep.subr.mxu0 0.0
        %797 = vmatpush1.xpose.msra.mxu0 0.0
        %798 = vmatprep.subr.mxu0 0.0
        %799 = vmatpush1.xpose.msra.mxu0 0.0
        %800 = vmatprep.subr.mxu0 0.0
        %801 = vmatpush1.xpose.msra.mxu0 0.0
        %802 = vmatprep.subr.mxu0 0.0
        %803 = vmatpush1.xpose.msra.mxu0 0.0
        %804 = vmatprep.subr.mxu0 0.0
        %805 = vmatpush1.xpose.msra.mxu0 0.0
        %806 = vmatprep.subr.mxu0 0.0
        %807 = vmatpush1.xpose.msra.mxu0 0.0
        %808 = vmatprep.subr.mxu0 0.0
        %809 = vmatpush1.xpose.msra.mxu0 0.0
        %810 = vmatprep.subr.mxu0 0.0
        %811 = vmatpush1.xpose.msra.mxu0 0.0
        %812 = vmatprep.subr.mxu0 0.0
        %813 = vmatpush1.xpose.msra.mxu0 0.0
        %814 = vmatprep.subr.mxu0 0.0
        %815 = vmatpush1.xpose.msra.mxu0 0.0
        %816 = vmatprep.subr.mxu0 0.0
        %817 = vmatpush1.xpose.msra.mxu0 0.0
        %818 = vmatprep.subr.mxu0 0.0
        %819 = vmatpush1.xpose.msra.mxu0 0.0
        %820 = vmatprep.subr.mxu0 0.0
        %821 = vmatpush1.xpose.msra.mxu0 0.0
        %822 = vmatprep.subr.mxu0 0.0
        %823 = vmatpush1.xpose.msra.mxu0 0.0
        %824 = vmatprep.subr.mxu0 0.0
        %825 = vmatpush1.xpose.msra.mxu0 0.0
        %826 = vmatprep.subr.mxu0 0.0
        %827 = vmatpush1.xpose.msra.mxu0 0.0
        %828 = vmatprep.subr.mxu0 0.0
        %829 = vmatpush1.xpose.msra.mxu0 0.0
        %830 = vmatprep.subr.mxu0 0.0
        %831 = vmatpush1.xpose.msra.mxu0 0.0
        %832 = vmatprep.subr.mxu0 0.0
        %833 = vmatpush1.xpose.msra.mxu0 0.0
        %834 = vmatprep.subr.mxu0 0.0
        %835 = vmatpush1.xpose.msra.mxu0 0.0
        %836 = vmatprep.subr.mxu0 0.0
        %837 = vmatpush1.xpose.msra.mxu0 0.0
        %838 = vmatprep.subr.mxu0 0.0
        %839 = vmatpush1.xpose.msra.mxu0 0.0
        %840 = vmatprep.subr.mxu0 0.0
        %841 = vmatpush1.xpose.msra.mxu0 0.0
        %842 = vmatprep.mubr.f32.mxu0 0.0
        %843 = vmatmul.mubr.f32.gmra.mrb[0].mxu0 %v773
        %v844 = vpop.f32.mrb[0].mxu0
        %v845 = vadd.f32 %v769, %v844
        %v846 = vpop.f32.mrb[0].mxu0
        %847 = vdwg.mxu0
        %v848 = vsel %vm771, %v845, -inf
        %849 = vmax.xlane.f32.xlu0 %v848
        %v850 = vpop.xlane.xlu0 %849
        %v851 = vsub.f32 %v845, %v850
        %v852 = vmul.f32 %v851, 1.442695
        %v853 = vpow.pop %v852
        %v854 = vsel %vm771, %v853, 0.0
        %855 = vadd.xlane.f32.xlu0 %v854
        %v856 = vpop.xlane.xlu0 %855
        %v857 = vrcp.pop %v856
        %v858 = vmul.f32 %v853, %v857
        %v860 = vsel %vm771, %v858, 0
        %862 = vmatprep.subr.mxu0 0.0
        %863 = vmatpush1.msra.mxu0 %v762
        %864 = vmatprep.subr.mxu0 0.0
        %865 = vmatpush1.msra.mxu0 0.0
        %866 = vmatprep.subr.mxu0 0.0
        %867 = vmatpush1.msra.mxu0 0.0
        %868 = vmatprep.subr.mxu0 0.0
        %869 = vmatpush1.msra.mxu0 0.0
        %870 = vmatprep.subr.mxu0 0.0
        %871 = vmatpush1.msra.mxu0 0.0
        %872 = vmatprep.subr.mxu0 0.0
        %873 = vmatpush1.msra.mxu0 0.0
        %874 = vmatprep.subr.mxu0 0.0
        %875 = vmatpush1.msra.mxu0 0.0
        %876 = vmatprep.subr.mxu0 0.0
        %877 = vmatpush1.msra.mxu0 0.0
        %878 = vmatprep.subr.mxu0 0.0
        %879 = vmatpush1.msra.mxu0 0.0
        %880 = vmatprep.subr.mxu0 0.0
        %881 = vmatpush1.msra.mxu0 0.0
        %882 = vmatprep.subr.mxu0 0.0
        %883 = vmatpush1.msra.mxu0 0.0
        %884 = vmatprep.subr.mxu0 0.0
        %885 = vmatpush1.msra.mxu0 0.0
        %886 = vmatprep.subr.mxu0 0.0
        %887 = vmatpush1.msra.mxu0 0.0
        %888 = vmatprep.subr.mxu0 0.0
        %889 = vmatpush1.msra.mxu0 0.0
        %890 = vmatprep.subr.mxu0 0.0
        %891 = vmatpush1.msra.mxu0 0.0
        %892 = vmatprep.subr.mxu0 0.0
        %893 = vmatpush1.msra.mxu0 0.0
        %894 = vmatprep.subr.mxu0 0.0
        %895 = vmatpush1.msra.mxu0 0.0
        %896 = vmatprep.subr.mxu0 0.0
        %897 = vmatpush1.msra.mxu0 0.0
        %898 = vmatprep.subr.mxu0 0.0
        %899 = vmatpush1.msra.mxu0 0.0
        %900 = vmatprep.subr.mxu0 0.0
        %901 = vmatpush1.msra.mxu0 0.0
        %902 = vmatprep.subr.mxu0 0.0
        %903 = vmatpush1.msra.mxu0 0.0
        %904 = vmatprep.subr.mxu0 0.0
        %905 = vmatpush1.msra.mxu0 0.0
        %906 = vmatprep.subr.mxu0 0.0
        %907 = vmatpush1.msra.mxu0 0.0
        %908 = vmatprep.subr.mxu0 0.0
        %909 = vmatpush1.msra.mxu0 0.0
        %910 = vmatprep.subr.mxu0 0.0
        %911 = vmatpush1.msra.mxu0 0.0
        %912 = vmatprep.subr.mxu0 0.0
        %913 = vmatpush1.msra.mxu0 0.0
        %914 = vmatprep.subr.mxu0 0.0
        %915 = vmatpush1.msra.mxu0 0.0
        %916 = vmatprep.subr.mxu0 0.0
        %917 = vmatpush1.msra.mxu0 0.0
        %918 = vmatprep.subr.mxu0 0.0
        %919 = vmatpush1.msra.mxu0 0.0
        %920 = vmatprep.subr.mxu0 0.0
        %921 = vmatpush1.msra.mxu0 0.0
        %922 = vmatprep.subr.mxu0 0.0
        %923 = vmatpush1.msra.mxu0 0.0
        %924 = vmatprep.subr.mxu0 0.0
        %925 = vmatpush1.msra.mxu0 0.0
        %926 = vmatprep.mubr.f32.mxu0 0.0
        %927 = vmatmul.mubr.f32.gmra.mrb[0].mxu0 %v860
        %v928 = vpop.f32.mrb[0].mxu0
        %v929 = vadd.f32 0.0, %v928
        %v930 = vpop.f32.mrb[0].mxu0
        %931 = vdwg.mxu0
        %v932 = vld [vmem:[%s487] sm:$0xff]
        %s933 = scalar_lea.vmem %s472, 32
        %v934 = vld [vmem:[%s933] sm:$0xff]
        %v935 = vld [vmem:[%s933 + $0x8] sm:$0xff]
        %v936 = vld [vmem:[%s933 + $0x10] sm:$0xff]
        %v937 = vld [vmem:[%s933 + $0x18] sm:$0xff]
        %938 = vmatprep.subr.mxu0 0.0
        %939 = vmatpush1.msra.mxu0 %v934
        %940 = vmatprep.subr.mxu0 0.0
        %941 = vmatpush1.msra.mxu0 %v935
        %942 = vmatprep.subr.mxu0 0.0
        %943 = vmatpush1.msra.mxu0 %v936
        %944 = vmatprep.subr.mxu0 0.0
        %945 = vmatpush1.msra.mxu0 %v937
        %946 = vmatprep.subr.mxu0 0.0
        %947 = vmatpush1.msra.mxu0 0.0
        %948 = vmatprep.subr.mxu0 0.0
        %949 = vmatpush1.msra.mxu0 0.0
        %950 = vmatprep.subr.mxu0 0.0
        %951 = vmatpush1.msra.mxu0 0.0
        %952 = vmatprep.subr.mxu0 0.0
        %953 = vmatpush1.msra.mxu0 0.0
        %954 = vmatprep.subr.mxu0 0.0
        %955 = vmatpush1.msra.mxu0 0.0
        %956 = vmatprep.subr.mxu0 0.0
        %957 = vmatpush1.msra.mxu0 0.0
        %958 = vmatprep.subr.mxu0 0.0
        %959 = vmatpush1.msra.mxu0 0.0
        %960 = vmatprep.subr.mxu0 0.0
        %961 = vmatpush1.msra.mxu0 0.0
        %962 = vmatprep.subr.mxu0 0.0
        %963 = vmatpush1.msra.mxu0 0.0
        %964 = vmatprep.subr.mxu0 0.0
        %965 = vmatpush1.msra.mxu0 0.0
        %966 = vmatprep.subr.mxu0 0.0
        %967 = vmatpush1.msra.mxu0 0.0
        %968 = vmatprep.subr.mxu0 0.0
        %969 = vmatpush1.msra.mxu0 0.0
        %970 = vmatprep.subr.mxu0 0.0
        %971 = vmatpush1.msra.mxu0 0.0
        %972 = vmatprep.subr.mxu0 0.0
        %973 = vmatpush1.msra.mxu0 0.0
        %974 = vmatprep.subr.mxu0 0.0
        %975 = vmatpush1.msra.mxu0 0.0
        %976 = vmatprep.subr.mxu0 0.0
        %977 = vmatpush1.msra.mxu0 0.0
        %978 = vmatprep.subr.mxu0 0.0
        %979 = vmatpush1.msra.mxu0 0.0
        %980 = vmatprep.subr.mxu0 0.0
        %981 = vmatpush1.msra.mxu0 0.0
        %982 = vmatprep.subr.mxu0 0.0
        %983 = vmatpush1.msra.mxu0 0.0
        %984 = vmatprep.subr.mxu0 0.0
        %985 = vmatpush1.msra.mxu0 0.0
        %986 = vmatprep.subr.mxu0 0.0
        %987 = vmatpush1.msra.mxu0 0.0
        %988 = vmatprep.subr.mxu0 0.0
        %989 = vmatpush1.msra.mxu0 0.0
        %990 = vmatprep.subr.mxu0 0.0
        %991 = vmatpush1.msra.mxu0 0.0
        %992 = vmatprep.subr.mxu0 0.0
        %993 = vmatpush1.msra.mxu0 0.0
        %994 = vmatprep.subr.mxu0 0.0
        %995 = vmatpush1.msra.mxu0 0.0
        %996 = vmatprep.subr.mxu0 0.0
        %997 = vmatpush1.msra.mxu0 0.0
        %998 = vmatprep.subr.mxu0 0.0
        %999 = vmatpush1.msra.mxu0 0.0
        %1000 = vmatprep.subr.mxu0 0.0
        %1001 = vmatpush1.msra.mxu0 0.0
        %1002 = vmatprep.mubr.f32.mxu0 0.0
        %1003 = vmatmul.mubr.f32.gmra.mrb[0].mxu0 %v545
        %v1004 = vpop.f32.mrb[0].mxu0
        %v1005 = vadd.f32 0.0, %v1004
        %v1006 = vpop.f32.mrb[0].mxu0
        %1007 = vdwg.mxu0
        %s1008 = scalar_lea.vmem %s477, 32
        %v1009 = vld [vmem:[%s1008] sm:$0xff]
        %v1010 = vld [vmem:[%s1008 + $0x8] sm:$0xff]
        %v1011 = vld [vmem:[%s1008 + $0x10] sm:$0xff]
        %v1012 = vld [vmem:[%s1008 + $0x18] sm:$0xff]
        %1013 = vmatprep.subr.mxu0 0.0
        %1014 = vmatpush1.msra.mxu0 %v1009
        %1015 = vmatprep.subr.mxu0 0.0
        %1016 = vmatpush1.msra.mxu0 %v1010
        %1017 = vmatprep.subr.mxu0 0.0
        %1018 = vmatpush1.msra.mxu0 %v1011
        %1019 = vmatprep.subr.mxu0 0.0
        %1020 = vmatpush1.msra.mxu0 %v1012
        %1021 = vmatprep.subr.mxu0 0.0
        %1022 = vmatpush1.msra.mxu0 0.0
        %1023 = vmatprep.subr.mxu0 0.0
        %1024 = vmatpush1.msra.mxu0 0.0
        %1025 = vmatprep.subr.mxu0 0.0
        %1026 = vmatpush1.msra.mxu0 0.0
        %1027 = vmatprep.subr.mxu0 0.0
        %1028 = vmatpush1.msra.mxu0 0.0
        %1029 = vmatprep.subr.mxu0 0.0
        %1030 = vmatpush1.msra.mxu0 0.0
        %1031 = vmatprep.subr.mxu0 0.0
        %1032 = vmatpush1.msra.mxu0 0.0
        %1033 = vmatprep.subr.mxu0 0.0
        %1034 = vmatpush1.msra.mxu0 0.0
        %1035 = vmatprep.subr.mxu0 0.0
        %1036 = vmatpush1.msra.mxu0 0.0
        %1037 = vmatprep.subr.mxu0 0.0
        %1038 = vmatpush1.msra.mxu0 0.0
        %1039 = vmatprep.subr.mxu0 0.0
        %1040 = vmatpush1.msra.mxu0 0.0
        %1041 = vmatprep.subr.mxu0 0.0
        %1042 = vmatpush1.msra.mxu0 0.0
        %1043 = vmatprep.subr.mxu0 0.0
        %1044 = vmatpush1.msra.mxu0 0.0
        %1045 = vmatprep.subr.mxu0 0.0
        %1046 = vmatpush1.msra.mxu0 0.0
        %1047 = vmatprep.subr.mxu0 0.0
        %1048 = vmatpush1.msra.mxu0 0.0
        %1049 = vmatprep.subr.mxu0 0.0
        %1050 = vmatpush1.msra.mxu0 0.0
        %1051 = vmatprep.subr.mxu0 0.0
        %1052 = vmatpush1.msra.mxu0 0.0
        %1053 = vmatprep.subr.mxu0 0.0
        %1054 = vmatpush1.msra.mxu0 0.0
        %1055 = vmatprep.subr.mxu0 0.0
        %1056 = vmatpush1.msra.mxu0 0.0
        %1057 = vmatprep.subr.mxu0 0.0
        %1058 = vmatpush1.msra.mxu0 0.0
        %1059 = vmatprep.subr.mxu0 0.0
        %1060 = vmatpush1.msra.mxu0 0.0
        %1061 = vmatprep.subr.mxu0 0.0
        %1062 = vmatpush1.msra.mxu0 0.0
        %1063 = vmatprep.subr.mxu0 0.0
        %1064 = vmatpush1.msra.mxu0 0.0
        %1065 = vmatprep.subr.mxu0 0.0
        %1066 = vmatpush1.msra.mxu0 0.0
        %1067 = vmatprep.subr.mxu0 0.0
        %1068 = vmatpush1.msra.mxu0 0.0
        %1069 = vmatprep.subr.mxu0 0.0
        %1070 = vmatpush1.msra.mxu0 0.0
        %1071 = vmatprep.subr.mxu0 0.0
        %1072 = vmatpush1.msra.mxu0 0.0
        %1073 = vmatprep.subr.mxu0 0.0
        %1074 = vmatpush1.msra.mxu0 0.0
        %1075 = vmatprep.subr.mxu0 0.0
        %1076 = vmatpush1.msra.mxu0 0.0
        %1077 = vmatprep.mubr.f32.mxu0 0.0
        %1078 = vmatmul.mubr.f32.gmra.mrb[0].mxu0 %v545
        %v1079 = vpop.f32.mrb[0].mxu0
        %v1080 = vadd.f32 0.0, %v1079
        %v1081 = vpop.f32.mrb[0].mxu0
        %1082 = vdwg.mxu0
        %s1083 = scalar_lea.vmem %s482, 32
        %v1084 = vld [vmem:[%s1083] sm:$0xff]
        %v1085 = vld [vmem:[%s1083 + $0x8] sm:$0xff]
        %v1086 = vld [vmem:[%s1083 + $0x10] sm:$0xff]
        %v1087 = vld [vmem:[%s1083 + $0x18] sm:$0xff]
        %1088 = vmatprep.subr.mxu0 0.0
        %1089 = vmatpush1.msra.mxu0 %v1084
        %1090 = vmatprep.subr.mxu0 0.0
        %1091 = vmatpush1.msra.mxu0 %v1085
        %1092 = vmatprep.subr.mxu0 0.0
        %1093 = vmatpush1.msra.mxu0 %v1086
        %1094 = vmatprep.subr.mxu0 0.0
        %1095 = vmatpush1.msra.mxu0 %v1087
        %1096 = vmatprep.subr.mxu0 0.0
        %1097 = vmatpush1.msra.mxu0 0.0
        %1098 = vmatprep.subr.mxu0 0.0
        %1099 = vmatpush1.msra.mxu0 0.0
        %1100 = vmatprep.subr.mxu0 0.0
        %1101 = vmatpush1.msra.mxu0 0.0
        %1102 = vmatprep.subr.mxu0 0.0
        %1103 = vmatpush1.msra.mxu0 0.0
        %1104 = vmatprep.subr.mxu0 0.0
        %1105 = vmatpush1.msra.mxu0 0.0
        %1106 = vmatprep.subr.mxu0 0.0
        %1107 = vmatpush1.msra.mxu0 0.0
        %1108 = vmatprep.subr.mxu0 0.0
        %1109 = vmatpush1.msra.mxu0 0.0
        %1110 = vmatprep.subr.mxu0 0.0
        %1111 = vmatpush1.msra.mxu0 0.0
        %1112 = vmatprep.subr.mxu0 0.0
        %1113 = vmatpush1.msra.mxu0 0.0
        %1114 = vmatprep.subr.mxu0 0.0
        %1115 = vmatpush1.msra.mxu0 0.0
        %1116 = vmatprep.subr.mxu0 0.0
        %1117 = vmatpush1.msra.mxu0 0.0
        %1118 = vmatprep.subr.mxu0 0.0
        %1119 = vmatpush1.msra.mxu0 0.0
        %1120 = vmatprep.subr.mxu0 0.0
        %1121 = vmatpush1.msra.mxu0 0.0
        %1122 = vmatprep.subr.mxu0 0.0
        %1123 = vmatpush1.msra.mxu0 0.0
        %1124 = vmatprep.subr.mxu0 0.0
        %1125 = vmatpush1.msra.mxu0 0.0
        %1126 = vmatprep.subr.mxu0 0.0
        %1127 = vmatpush1.msra.mxu0 0.0
        %1128 = vmatprep.subr.mxu0 0.0
        %1129 = vmatpush1.msra.mxu0 0.0
        %1130 = vmatprep.subr.mxu0 0.0
        %1131 = vmatpush1.msra.mxu0 0.0
        %1132 = vmatprep.subr.mxu0 0.0
        %1133 = vmatpush1.msra.mxu0 0.0
        %1134 = vmatprep.subr.mxu0 0.0
        %1135 = vmatpush1.msra.mxu0 0.0
        %1136 = vmatprep.subr.mxu0 0.0
        %1137 = vmatpush1.msra.mxu0 0.0
        %1138 = vmatprep.subr.mxu0 0.0
        %1139 = vmatpush1.msra.mxu0 0.0
        %1140 = vmatprep.subr.mxu0 0.0
        %1141 = vmatpush1.msra.mxu0 0.0
        %1142 = vmatprep.subr.mxu0 0.0
        %1143 = vmatpush1.msra.mxu0 0.0
        %1144 = vmatprep.subr.mxu0 0.0
        %1145 = vmatpush1.msra.mxu0 0.0
        %1146 = vmatprep.subr.mxu0 0.0
        %1147 = vmatpush1.msra.mxu0 0.0
        %1148 = vmatprep.subr.mxu0 0.0
        %1149 = vmatpush1.msra.mxu0 0.0
        %1150 = vmatprep.subr.mxu0 0.0
        %1151 = vmatpush1.msra.mxu0 0.0
        %1152 = vmatprep.mubr.f32.mxu0 0.0
        %1153 = vmatmul.mubr.f32.gmra.mrb[0].mxu0 %v545
        %v1154 = vpop.f32.mrb[0].mxu0
        %v1155 = vadd.f32 0.0, %v1154
        %v1156 = vpop.f32.mrb[0].mxu0
        %1157 = vdwg.mxu0
        %v1159 = vsel %vm771, %v1005, 0
        %v1162 = vsel %vm771, %v1080, 0
        %1164 = vmatprep.subr.mxu0 0.0
        %1165 = vmatpush1.xpose.msra.mxu0 %v1162
        %1166 = vmatprep.subr.mxu0 0.0
        %1167 = vmatpush1.xpose.msra.mxu0 0.0
        %1168 = vmatprep.subr.mxu0 0.0
        %1169 = vmatpush1.xpose.msra.mxu0 0.0
        %1170 = vmatprep.subr.mxu0 0.0
        %1171 = vmatpush1.xpose.msra.mxu0 0.0
        %1172 = vmatprep.subr.mxu0 0.0
        %1173 = vmatpush1.xpose.msra.mxu0 0.0
        %1174 = vmatprep.subr.mxu0 0.0
        %1175 = vmatpush1.xpose.msra.mxu0 0.0
        %1176 = vmatprep.subr.mxu0 0.0
        %1177 = vmatpush1.xpose.msra.mxu0 0.0
        %1178 = vmatprep.subr.mxu0 0.0
        %1179 = vmatpush1.xpose.msra.mxu0 0.0
        %1180 = vmatprep.subr.mxu0 0.0
        %1181 = vmatpush1.xpose.msra.mxu0 0.0
        %1182 = vmatprep.subr.mxu0 0.0
        %1183 = vmatpush1.xpose.msra.mxu0 0.0
        %1184 = vmatprep.subr.mxu0 0.0
        %1185 = vmatpush1.xpose.msra.mxu0 0.0
        %1186 = vmatprep.subr.mxu0 0.0
        %1187 = vmatpush1.xpose.msra.mxu0 0.0
        %1188 = vmatprep.subr.mxu0 0.0
        %1189 = vmatpush1.xpose.msra.mxu0 0.0
        %1190 = vmatprep.subr.mxu0 0.0
        %1191 = vmatpush1.xpose.msra.mxu0 0.0
        %1192 = vmatprep.subr.mxu0 0.0
        %1193 = vmatpush1.xpose.msra.mxu0 0.0
        %1194 = vmatprep.subr.mxu0 0.0
        %1195 = vmatpush1.xpose.msra.mxu0 0.0
        %1196 = vmatprep.subr.mxu0 0.0
        %1197 = vmatpush1.xpose.msra.mxu0 0.0
        %1198 = vmatprep.subr.mxu0 0.0
        %1199 = vmatpush1.xpose.msra.mxu0 0.0
        %1200 = vmatprep.subr.mxu0 0.0
        %1201 = vmatpush1.xpose.msra.mxu0 0.0
        %1202 = vmatprep.subr.mxu0 0.0
        %1203 = vmatpush1.xpose.msra.mxu0 0.0
        %1204 = vmatprep.subr.mxu0 0.0
        %1205 = vmatpush1.xpose.msra.mxu0 0.0
        %1206 = vmatprep.subr.mxu0 0.0
        %1207 = vmatpush1.xpose.msra.mxu0 0.0
        %1208 = vmatprep.subr.mxu0 0.0
        %1209 = vmatpush1.xpose.msra.mxu0 0.0
        %1210 = vmatprep.subr.mxu0 0.0
        %1211 = vmatpush1.xpose.msra.mxu0 0.0
        %1212 = vmatprep.subr.mxu0 0.0
        %1213 = vmatpush1.xpose.msra.mxu0 0.0
        %1214 = vmatprep.subr.mxu0 0.0
        %1215 = vmatpush1.xpose.msra.mxu0 0.0
        %1216 = vmatprep.subr.mxu0 0.0
        %1217 = vmatpush1.xpose.msra.mxu0 0.0
        %1218 = vmatprep.subr.mxu0 0.0
        %1219 = vmatpush1.xpose.msra.mxu0 0.0
        %1220 = vmatprep.subr.mxu0 0.0
        %1221 = vmatpush1.xpose.msra.mxu0 0.0
        %1222 = vmatprep.subr.mxu0 0.0
        %1223 = vmatpush1.xpose.msra.mxu0 0.0
        %1224 = vmatprep.subr.mxu0 0.0
        %1225 = vmatpush1.xpose.msra.mxu0 0.0
        %1226 = vmatprep.subr.mxu0 0.0
        %1227 = vmatpush1.xpose.msra.mxu0 0.0
        %1228 = vmatprep.mubr.f32.mxu0 0.0
        %1229 = vmatmul.mubr.f32.gmra.mrb[0].mxu0 %v1159
        %v1230 = vpop.f32.mrb[0].mxu0
        %v1231 = vadd.f32 %v769, %v1230
        %v1232 = vpop.f32.mrb[0].mxu0
        %1233 = vdwg.mxu0
        %v1234 = vsel %vm771, %v1231, -inf
        %1235 = vmax.xlane.f32.xlu0 %v1234
        %v1236 = vpop.xlane.xlu0 %1235
        %v1237 = vsub.f32 %v1231, %v1236
        %v1238 = vmul.f32 %v1237, 1.442695
        %v1239 = vpow.pop %v1238
        %v1240 = vsel %vm771, %v1239, 0.0
        %1241 = vadd.xlane.f32.xlu0 %v1240
        %v1242 = vpop.xlane.xlu0 %1241
        %v1243 = vrcp.pop %v1242
        %v1244 = vmul.f32 %v1239, %v1243
        %v1246 = vsel %vm771, %v1244, 0
        %1248 = vmatprep.subr.mxu0 0.0
        %1249 = vmatpush1.msra.mxu0 %v1155
        %1250 = vmatprep.subr.mxu0 0.0
        %1251 = vmatpush1.msra.mxu0 0.0
        %1252 = vmatprep.subr.mxu0 0.0
        %1253 = vmatpush1.msra.mxu0 0.0
        %1254 = vmatprep.subr.mxu0 0.0
        %1255 = vmatpush1.msra.mxu0 0.0
        %1256 = vmatprep.subr.mxu0 0.0
        %1257 = vmatpush1.msra.mxu0 0.0
        %1258 = vmatprep.subr.mxu0 0.0
        %1259 = vmatpush1.msra.mxu0 0.0
        %1260 = vmatprep.subr.mxu0 0.0
        %1261 = vmatpush1.msra.mxu0 0.0
        %1262 = vmatprep.subr.mxu0 0.0
        %1263 = vmatpush1.msra.mxu0 0.0
        %1264 = vmatprep.subr.mxu0 0.0
        %1265 = vmatpush1.msra.mxu0 0.0
        %1266 = vmatprep.subr.mxu0 0.0
        %1267 = vmatpush1.msra.mxu0 0.0
        %1268 = vmatprep.subr.mxu0 0.0
        %1269 = vmatpush1.msra.mxu0 0.0
        %1270 = vmatprep.subr.mxu0 0.0
        %1271 = vmatpush1.msra.mxu0 0.0
        %1272 = vmatprep.subr.mxu0 0.0
        %1273 = vmatpush1.msra.mxu0 0.0
        %1274 = vmatprep.subr.mxu0 0.0
        %1275 = vmatpush1.msra.mxu0 0.0
        %1276 = vmatprep.subr.mxu0 0.0
        %1277 = vmatpush1.msra.mxu0 0.0
        %1278 = vmatprep.subr.mxu0 0.0
        %1279 = vmatpush1.msra.mxu0 0.0
        %1280 = vmatprep.subr.mxu0 0.0
        %1281 = vmatpush1.msra.mxu0 0.0
        %1282 = vmatprep.subr.mxu0 0.0
        %1283 = vmatpush1.msra.mxu0 0.0
        %1284 = vmatprep.subr.mxu0 0.0
        %1285 = vmatpush1.msra.mxu0 0.0
        %1286 = vmatprep.subr.mxu0 0.0
        %1287 = vmatpush1.msra.mxu0 0.0
        %1288 = vmatprep.subr.mxu0 0.0
        %1289 = vmatpush1.msra.mxu0 0.0
        %1290 = vmatprep.subr.mxu0 0.0
        %1291 = vmatpush1.msra.mxu0 0.0
        %1292 = vmatprep.subr.mxu0 0.0
        %1293 = vmatpush1.msra.mxu0 0.0
        %1294 = vmatprep.subr.mxu0 0.0
        %1295 = vmatpush1.msra.mxu0 0.0
        %1296 = vmatprep.subr.mxu0 0.0
        %1297 = vmatpush1.msra.mxu0 0.0
        %1298 = vmatprep.subr.mxu0 0.0
        %1299 = vmatpush1.msra.mxu0 0.0
        %1300 = vmatprep.subr.mxu0 0.0
        %1301 = vmatpush1.msra.mxu0 0.0
        %1302 = vmatprep.subr.mxu0 0.0
        %1303 = vmatpush1.msra.mxu0 0.0
        %1304 = vmatprep.subr.mxu0 0.0
        %1305 = vmatpush1.msra.mxu0 0.0
        %1306 = vmatprep.subr.mxu0 0.0
        %1307 = vmatpush1.msra.mxu0 0.0
        %1308 = vmatprep.subr.mxu0 0.0
        %1309 = vmatpush1.msra.mxu0 0.0
        %1310 = vmatprep.subr.mxu0 0.0
        %1311 = vmatpush1.msra.mxu0 0.0
        %1312 = vmatprep.mubr.f32.mxu0 0.0
        %1313 = vmatmul.mubr.f32.gmra.mrb[0].mxu0 %v1246
        %v1314 = vpop.f32.mrb[0].mxu0
        %v1315 = vadd.f32 0.0, %v1314
        %v1316 = vpop.f32.mrb[0].mxu0
        %1317 = vdwg.mxu0
        %s1318 = scalar_lea.vmem %s487, 8
        %v1319 = vld [vmem:[%s1318] sm:$0xff]
        %v1321 = vsel %vm771, %v1315, 0
        %1323 = vmatprep.subr.mxu0 0.0
        %1324 = vmatpush1.msra.mxu0 %v1319
        %1325 = vmatprep.subr.mxu0 0.0
        %1326 = vmatpush1.msra.mxu0 0.0
        %1327 = vmatprep.subr.mxu0 0.0
        %1328 = vmatpush1.msra.mxu0 0.0
        %1329 = vmatprep.subr.mxu0 0.0
        %1330 = vmatpush1.msra.mxu0 0.0
        %1331 = vmatprep.subr.mxu0 0.0
        %1332 = vmatpush1.msra.mxu0 0.0
        %1333 = vmatprep.subr.mxu0 0.0
        %1334 = vmatpush1.msra.mxu0 0.0
        %1335 = vmatprep.subr.mxu0 0.0
        %1336 = vmatpush1.msra.mxu0 0.0
        %1337 = vmatprep.subr.mxu0 0.0
        %1338 = vmatpush1.msra.mxu0 0.0
        %1339 = vmatprep.subr.mxu0 0.0
        %1340 = vmatpush1.msra.mxu0 0.0
        %1341 = vmatprep.subr.mxu0 0.0
        %1342 = vmatpush1.msra.mxu0 0.0
        %1343 = vmatprep.subr.mxu0 0.0
        %1344 = vmatpush1.msra.mxu0 0.0
        %1345 = vmatprep.subr.mxu0 0.0
        %1346 = vmatpush1.msra.mxu0 0.0
        %1347 = vmatprep.subr.mxu0 0.0
        %1348 = vmatpush1.msra.mxu0 0.0
        %1349 = vmatprep.subr.mxu0 0.0
        %1350 = vmatpush1.msra.mxu0 0.0
        %1351 = vmatprep.subr.mxu0 0.0
        %1352 = vmatpush1.msra.mxu0 0.0
        %1353 = vmatprep.subr.mxu0 0.0
        %1354 = vmatpush1.msra.mxu0 0.0
        %1355 = vmatprep.subr.mxu0 0.0
        %1356 = vmatpush1.msra.mxu0 0.0
        %1357 = vmatprep.subr.mxu0 0.0
        %1358 = vmatpush1.msra.mxu0 0.0
        %1359 = vmatprep.subr.mxu0 0.0
        %1360 = vmatpush1.msra.mxu0 0.0
        %1361 = vmatprep.subr.mxu0 0.0
        %1362 = vmatpush1.msra.mxu0 0.0
        %1363 = vmatprep.subr.mxu0 0.0
        %1364 = vmatpush1.msra.mxu0 0.0
        %1365 = vmatprep.subr.mxu0 0.0
        %1366 = vmatpush1.msra.mxu0 0.0
        %1367 = vmatprep.subr.mxu0 0.0
        %1368 = vmatpush1.msra.mxu0 0.0
        %1369 = vmatprep.subr.mxu0 0.0
        %1370 = vmatpush1.msra.mxu0 0.0
        %1371 = vmatprep.subr.mxu0 0.0
        %1372 = vmatpush1.msra.mxu0 0.0
        %1373 = vmatprep.subr.mxu0 0.0
        %1374 = vmatpush1.msra.mxu0 0.0
        %1375 = vmatprep.subr.mxu0 0.0
        %1376 = vmatpush1.msra.mxu0 0.0
        %1377 = vmatprep.subr.mxu0 0.0
        %1378 = vmatpush1.msra.mxu0 0.0
        %1379 = vmatprep.subr.mxu0 0.0
        %1380 = vmatpush1.msra.mxu0 0.0
        %1381 = vmatprep.subr.mxu0 0.0
        %1382 = vmatpush1.msra.mxu0 0.0
        %1383 = vmatprep.subr.mxu0 0.0
        %1384 = vmatpush1.msra.mxu0 0.0
        %1385 = vmatprep.subr.mxu0 0.0
        %1386 = vmatpush1.msra.mxu0 0.0
        %1387 = vmatprep.mubr.f32.mxu0 0.0
        %1388 = vmatmul.mubr.f32.gmra.mrb[0].mxu0 %v1321
        %v1389 = vpop.f32.mrb[0].mxu0
        %v1390 = vadd.f32 0.0, %v1389
        %v1391 = vpop.f32.mrb[0].mxu0
        %1392 = vdwg.mxu0
        %v1394 = vsel %vm771, %v929, 0
        %1396 = vmatprep.subr.mxu0 0.0
        %1397 = vmatpush1.msra.mxu0 %v932
        %1398 = vmatprep.subr.mxu0 0.0
        %1399 = vmatpush1.msra.mxu0 0.0
        %1400 = vmatprep.subr.mxu0 0.0
        %1401 = vmatpush1.msra.mxu0 0.0
        %1402 = vmatprep.subr.mxu0 0.0
        %1403 = vmatpush1.msra.mxu0 0.0
        %1404 = vmatprep.subr.mxu0 0.0
        %1405 = vmatpush1.msra.mxu0 0.0
        %1406 = vmatprep.subr.mxu0 0.0
        %1407 = vmatpush1.msra.mxu0 0.0
        %1408 = vmatprep.subr.mxu0 0.0
        %1409 = vmatpush1.msra.mxu0 0.0
        %1410 = vmatprep.subr.mxu0 0.0
        %1411 = vmatpush1.msra.mxu0 0.0
        %1412 = vmatprep.subr.mxu0 0.0
        %1413 = vmatpush1.msra.mxu0 0.0
        %1414 = vmatprep.subr.mxu0 0.0
        %1415 = vmatpush1.msra.mxu0 0.0
        %1416 = vmatprep.subr.mxu0 0.0
        %1417 = vmatpush1.msra.mxu0 0.0
        %1418 = vmatprep.subr.mxu0 0.0
        %1419 = vmatpush1.msra.mxu0 0.0
        %1420 = vmatprep.subr.mxu0 0.0
        %1421 = vmatpush1.msra.mxu0 0.0
        %1422 = vmatprep.subr.mxu0 0.0
        %1423 = vmatpush1.msra.mxu0 0.0
        %1424 = vmatprep.subr.mxu0 0.0
        %1425 = vmatpush1.msra.mxu0 0.0
        %1426 = vmatprep.subr.mxu0 0.0
        %1427 = vmatpush1.msra.mxu0 0.0
        %1428 = vmatprep.subr.mxu0 0.0
        %1429 = vmatpush1.msra.mxu0 0.0
        %1430 = vmatprep.subr.mxu0 0.0
        %1431 = vmatpush1.msra.mxu0 0.0
        %1432 = vmatprep.subr.mxu0 0.0
        %1433 = vmatpush1.msra.mxu0 0.0
        %1434 = vmatprep.subr.mxu0 0.0
        %1435 = vmatpush1.msra.mxu0 0.0
        %1436 = vmatprep.subr.mxu0 0.0
        %1437 = vmatpush1.msra.mxu0 0.0
        %1438 = vmatprep.subr.mxu0 0.0
        %1439 = vmatpush1.msra.mxu0 0.0
        %1440 = vmatprep.subr.mxu0 0.0
        %1441 = vmatpush1.msra.mxu0 0.0
        %1442 = vmatprep.subr.mxu0 0.0
        %1443 = vmatpush1.msra.mxu0 0.0
        %1444 = vmatprep.subr.mxu0 0.0
        %1445 = vmatpush1.msra.mxu0 0.0
        %1446 = vmatprep.subr.mxu0 0.0
        %1447 = vmatpush1.msra.mxu0 0.0
        %1448 = vmatprep.subr.mxu0 0.0
        %1449 = vmatpush1.msra.mxu0 0.0
        %1450 = vmatprep.subr.mxu0 0.0
        %1451 = vmatpush1.msra.mxu0 0.0
        %1452 = vmatprep.subr.mxu0 0.0
        %1453 = vmatpush1.msra.mxu0 0.0
        %1454 = vmatprep.subr.mxu0 0.0
        %1455 = vmatpush1.msra.mxu0 0.0
        %1456 = vmatprep.subr.mxu0 0.0
        %1457 = vmatpush1.msra.mxu0 0.0
        %1458 = vmatprep.subr.mxu0 0.0
        %1459 = vmatpush1.msra.mxu0 0.0
        %1460 = vmatprep.mubr.f32.mxu0 0.0
        %1461 = vmatmul.mubr.f32.gmra.mrb[0].mxu0 %v1394
        %v1462 = vpop.f32.mrb[0].mxu0
        %v1463 = vadd.f32 %v1390, %v1462
        %v1464 = vpop.f32.mrb[0].mxu0
        %1465 = vdwg.mxu0
        %s1466 = scalar_lea.vmem %s472, 64
        %v1467 = vld [vmem:[%s1466] sm:$0xff]
        %v1468 = vld [vmem:[%s1466 + $0x8] sm:$0xff]
        %v1469 = vld [vmem:[%s1466 + $0x10] sm:$0xff]
        %v1470 = vld [vmem:[%s1466 + $0x18] sm:$0xff]
        %1471 = vmatprep.subr.mxu0 0.0
        %1472 = vmatpush1.msra.mxu0 %v1467
        %1473 = vmatprep.subr.mxu0 0.0
        %1474 = vmatpush1.msra.mxu0 %v1468
        %1475 = vmatprep.subr.mxu0 0.0
        %1476 = vmatpush1.msra.mxu0 %v1469
        %1477 = vmatprep.subr.mxu0 0.0
        %1478 = vmatpush1.msra.mxu0 %v1470
        %1479 = vmatprep.subr.mxu0 0.0
        %1480 = vmatpush1.msra.mxu0 0.0
        %1481 = vmatprep.subr.mxu0 0.0
        %1482 = vmatpush1.msra.mxu0 0.0
        %1483 = vmatprep.subr.mxu0 0.0
        %1484 = vmatpush1.msra.mxu0 0.0
        %1485 = vmatprep.subr.mxu0 0.0
        %1486 = vmatpush1.msra.mxu0 0.0
        %1487 = vmatprep.subr.mxu0 0.0
        %1488 = vmatpush1.msra.mxu0 0.0
        %1489 = vmatprep.subr.mxu0 0.0
        %1490 = vmatpush1.msra.mxu0 0.0
        %1491 = vmatprep.subr.mxu0 0.0
        %1492 = vmatpush1.msra.mxu0 0.0
        %1493 = vmatprep.subr.mxu0 0.0
        %1494 = vmatpush1.msra.mxu0 0.0
        %1495 = vmatprep.subr.mxu0 0.0
        %1496 = vmatpush1.msra.mxu0 0.0
        %1497 = vmatprep.subr.mxu0 0.0
        %1498 = vmatpush1.msra.mxu0 0.0
        %1499 = vmatprep.subr.mxu0 0.0
        %1500 = vmatpush1.msra.mxu0 0.0
        %1501 = vmatprep.subr.mxu0 0.0
        %1502 = vmatpush1.msra.mxu0 0.0
        %1503 = vmatprep.subr.mxu0 0.0
        %1504 = vmatpush1.msra.mxu0 0.0
        %1505 = vmatprep.subr.mxu0 0.0
        %1506 = vmatpush1.msra.mxu0 0.0
        %1507 = vmatprep.subr.mxu0 0.0
        %1508 = vmatpush1.msra.mxu0 0.0
        %1509 = vmatprep.subr.mxu0 0.0
        %1510 = vmatpush1.msra.mxu0 0.0
        %1511 = vmatprep.subr.mxu0 0.0
        %1512 = vmatpush1.msra.mxu0 0.0
        %1513 = vmatprep.subr.mxu0 0.0
        %1514 = vmatpush1.msra.mxu0 0.0
        %1515 = vmatprep.subr.mxu0 0.0
        %1516 = vmatpush1.msra.mxu0 0.0
        %1517 = vmatprep.subr.mxu0 0.0
        %1518 = vmatpush1.msra.mxu0 0.0
        %1519 = vmatprep.subr.mxu0 0.0
        %1520 = vmatpush1.msra.mxu0 0.0
        %1521 = vmatprep.subr.mxu0 0.0
        %1522 = vmatpush1.msra.mxu0 0.0
        %1523 = vmatprep.subr.mxu0 0.0
        %1524 = vmatpush1.msra.mxu0 0.0
        %1525 = vmatprep.subr.mxu0 0.0
        %1526 = vmatpush1.msra.mxu0 0.0
        %1527 = vmatprep.subr.mxu0 0.0
        %1528 = vmatpush1.msra.mxu0 0.0
        %1529 = vmatprep.subr.mxu0 0.0
        %1530 = vmatpush1.msra.mxu0 0.0
        %1531 = vmatprep.subr.mxu0 0.0
        %1532 = vmatpush1.msra.mxu0 0.0
        %1533 = vmatprep.subr.mxu0 0.0
        %1534 = vmatpush1.msra.mxu0 0.0
        %1535 = vmatprep.mubr.f32.mxu0 0.0
        %1536 = vmatmul.mubr.f32.gmra.mrb[0].mxu0 %v545
        %v1537 = vpop.f32.mrb[0].mxu0
        %v1538 = vadd.f32 0.0, %v1537
        %v1539 = vpop.f32.mrb[0].mxu0
        %1540 = vdwg.mxu0
        %s1541 = scalar_lea.vmem %s477, 64
        %v1542 = vld [vmem:[%s1541] sm:$0xff]
        %v1543 = vld [vmem:[%s1541 + $0x8] sm:$0xff]
        %v1544 = vld [vmem:[%s1541 + $0x10] sm:$0xff]
        %v1545 = vld [vmem:[%s1541 + $0x18] sm:$0xff]
        %1546 = vmatprep.subr.mxu0 0.0
        %1547 = vmatpush1.msra.mxu0 %v1542
        %1548 = vmatprep.subr.mxu0 0.0
        %1549 = vmatpush1.msra.mxu0 %v1543
        %1550 = vmatprep.subr.mxu0 0.0
        %1551 = vmatpush1.msra.mxu0 %v1544
        %1552 = vmatprep.subr.mxu0 0.0
        %1553 = vmatpush1.msra.mxu0 %v1545
        %1554 = vmatprep.subr.mxu0 0.0
        %1555 = vmatpush1.msra.mxu0 0.0
        %1556 = vmatprep.subr.mxu0 0.0
        %1557 = vmatpush1.msra.mxu0 0.0
        %1558 = vmatprep.subr.mxu0 0.0
        %1559 = vmatpush1.msra.mxu0 0.0
        %1560 = vmatprep.subr.mxu0 0.0
        %1561 = vmatpush1.msra.mxu0 0.0
        %1562 = vmatprep.subr.mxu0 0.0
        %1563 = vmatpush1.msra.mxu0 0.0
        %1564 = vmatprep.subr.mxu0 0.0
        %1565 = vmatpush1.msra.mxu0 0.0
        %1566 = vmatprep.subr.mxu0 0.0
        %1567 = vmatpush1.msra.mxu0 0.0
        %1568 = vmatprep.subr.mxu0 0.0
        %1569 = vmatpush1.msra.mxu0 0.0
        %1570 = vmatprep.subr.mxu0 0.0
        %1571 = vmatpush1.msra.mxu0 0.0
        %1572 = vmatprep.subr.mxu0 0.0
        %1573 = vmatpush1.msra.mxu0 0.0
        %1574 = vmatprep.subr.mxu0 0.0
        %1575 = vmatpush1.msra.mxu0 0.0
        %1576 = vmatprep.subr.mxu0 0.0
        %1577 = vmatpush1.msra.mxu0 0.0
        %1578 = vmatprep.subr.mxu0 0.0
        %1579 = vmatpush1.msra.mxu0 0.0
        %1580 = vmatprep.subr.mxu0 0.0
        %1581 = vmatpush1.msra.mxu0 0.0
        %1582 = vmatprep.subr.mxu0 0.0
        %1583 = vmatpush1.msra.mxu0 0.0
        %1584 = vmatprep.subr.mxu0 0.0
        %1585 = vmatpush1.msra.mxu0 0.0
        %1586 = vmatprep.subr.mxu0 0.0
        %1587 = vmatpush1.msra.mxu0 0.0
        %1588 = vmatprep.subr.mxu0 0.0
        %1589 = vmatpush1.msra.mxu0 0.0
        %1590 = vmatprep.subr.mxu0 0.0
        %1591 = vmatpush1.msra.mxu0 0.0
        %1592 = vmatprep.subr.mxu0 0.0
        %1593 = vmatpush1.msra.mxu0 0.0
        %1594 = vmatprep.subr.mxu0 0.0
        %1595 = vmatpush1.msra.mxu0 0.0
        %1596 = vmatprep.subr.mxu0 0.0
        %1597 = vmatpush1.msra.mxu0 0.0
        %1598 = vmatprep.subr.mxu0 0.0
        %1599 = vmatpush1.msra.mxu0 0.0
        %1600 = vmatprep.subr.mxu0 0.0
        %1601 = vmatpush1.msra.mxu0 0.0
        %1602 = vmatprep.subr.mxu0 0.0
        %1603 = vmatpush1.msra.mxu0 0.0
        %1604 = vmatprep.subr.mxu0 0.0
        %1605 = vmatpush1.msra.mxu0 0.0
        %1606 = vmatprep.subr.mxu0 0.0
        %1607 = vmatpush1.msra.mxu0 0.0
        %1608 = vmatprep.subr.mxu0 0.0
        %1609 = vmatpush1.msra.mxu0 0.0
        %1610 = vmatprep.mubr.f32.mxu0 0.0
        %1611 = vmatmul.mubr.f32.gmra.mrb[0].mxu0 %v545
        %v1612 = vpop.f32.mrb[0].mxu0
        %v1613 = vadd.f32 0.0, %v1612
        %v1614 = vpop.f32.mrb[0].mxu0
        %1615 = vdwg.mxu0
        %s1616 = scalar_lea.vmem %s482, 64
        %v1617 = vld [vmem:[%s1616] sm:$0xff]
        %v1618 = vld [vmem:[%s1616 + $0x8] sm:$0xff]
        %v1619 = vld [vmem:[%s1616 + $0x10] sm:$0xff]
        %v1620 = vld [vmem:[%s1616 + $0x18] sm:$0xff]
        %1621 = vmatprep.subr.mxu0 0.0
        %1622 = vmatpush1.msra.mxu0 %v1617
        %1623 = vmatprep.subr.mxu0 0.0
        %1624 = vmatpush1.msra.mxu0 %v1618
        %1625 = vmatprep.subr.mxu0 0.0
        %1626 = vmatpush1.msra.mxu0 %v1619
        %1627 = vmatprep.subr.mxu0 0.0
        %1628 = vmatpush1.msra.mxu0 %v1620
        %1629 = vmatprep.subr.mxu0 0.0
        %1630 = vmatpush1.msra.mxu0 0.0
        %1631 = vmatprep.subr.mxu0 0.0
        %1632 = vmatpush1.msra.mxu0 0.0
        %1633 = vmatprep.subr.mxu0 0.0
        %1634 = vmatpush1.msra.mxu0 0.0
        %1635 = vmatprep.subr.mxu0 0.0
        %1636 = vmatpush1.msra.mxu0 0.0
        %1637 = vmatprep.subr.mxu0 0.0
        %1638 = vmatpush1.msra.mxu0 0.0
        %1639 = vmatprep.subr.mxu0 0.0
        %1640 = vmatpush1.msra.mxu0 0.0
        %1641 = vmatprep.subr.mxu0 0.0
        %1642 = vmatpush1.msra.mxu0 0.0
        %1643 = vmatprep.subr.mxu0 0.0
        %1644 = vmatpush1.msra.mxu0 0.0
        %1645 = vmatprep.subr.mxu0 0.0
        %1646 = vmatpush1.msra.mxu0 0.0
        %1647 = vmatprep.subr.mxu0 0.0
        %1648 = vmatpush1.msra.mxu0 0.0
        %1649 = vmatprep.subr.mxu0 0.0
        %1650 = vmatpush1.msra.mxu0 0.0
        %1651 = vmatprep.subr.mxu0 0.0
        %1652 = vmatpush1.msra.mxu0 0.0
        %1653 = vmatprep.subr.mxu0 0.0
        %1654 = vmatpush1.msra.mxu0 0.0
        %1655 = vmatprep.subr.mxu0 0.0
        %1656 = vmatpush1.msra.mxu0 0.0
        %1657 = vmatprep.subr.mxu0 0.0
        %1658 = vmatpush1.msra.mxu0 0.0
        %1659 = vmatprep.subr.mxu0 0.0
        %1660 = vmatpush1.msra.mxu0 0.0
        %1661 = vmatprep.subr.mxu0 0.0
        %1662 = vmatpush1.msra.mxu0 0.0
        %1663 = vmatprep.subr.mxu0 0.0
        %1664 = vmatpush1.msra.mxu0 0.0
        %1665 = vmatprep.subr.mxu0 0.0
        %1666 = vmatpush1.msra.mxu0 0.0
        %1667 = vmatprep.subr.mxu0 0.0
        %1668 = vmatpush1.msra.mxu0 0.0
        %1669 = vmatprep.subr.mxu0 0.0
        %1670 = vmatpush1.msra.mxu0 0.0
        %1671 = vmatprep.subr.mxu0 0.0
        %1672 = vmatpush1.msra.mxu0 0.0
        %1673 = vmatprep.subr.mxu0 0.0
        %1674 = vmatpush1.msra.mxu0 0.0
        %1675 = vmatprep.subr.mxu0 0.0
        %1676 = vmatpush1.msra.mxu0 0.0
        %1677 = vmatprep.subr.mxu0 0.0
        %1678 = vmatpush1.msra.mxu0 0.0
        %1679 = vmatprep.subr.mxu0 0.0
        %1680 = vmatpush1.msra.mxu0 0.0
        %1681 = vmatprep.subr.mxu0 0.0
        %1682 = vmatpush1.msra.mxu0 0.0
        %1683 = vmatprep.subr.mxu0 0.0
        %1684 = vmatpush1.msra.mxu0 0.0
        %1685 = vmatprep.mubr.f32.mxu0 0.0
        %1686 = vmatmul.mubr.f32.gmra.mrb[0].mxu0 %v545
        %v1687 = vpop.f32.mrb[0].mxu0
        %v1688 = vadd.f32 0.0, %v1687
        %v1689 = vpop.f32.mrb[0].mxu0
        %1690 = vdwg.mxu0
        %v1692 = vsel %vm771, %v1538, 0
        %v1695 = vsel %vm771, %v1613, 0
        %1697 = vmatprep.subr.mxu0 0.0
        %1698 = vmatpush1.xpose.msra.mxu0 %v1695
        %1699 = vmatprep.subr.mxu0 0.0
        %1700 = vmatpush1.xpose.msra.mxu0 0.0
        %1701 = vmatprep.subr.mxu0 0.0
        %1702 = vmatpush1.xpose.msra.mxu0 0.0
        %1703 = vmatprep.subr.mxu0 0.0
        %1704 = vmatpush1.xpose.msra.mxu0 0.0
        %1705 = vmatprep.subr.mxu0 0.0
        %1706 = vmatpush1.xpose.msra.mxu0 0.0
        %1707 = vmatprep.subr.mxu0 0.0
        %1708 = vmatpush1.xpose.msra.mxu0 0.0
        %1709 = vmatprep.subr.mxu0 0.0
        %1710 = vmatpush1.xpose.msra.mxu0 0.0
        %1711 = vmatprep.subr.mxu0 0.0
        %1712 = vmatpush1.xpose.msra.mxu0 0.0
        %1713 = vmatprep.subr.mxu0 0.0
        %1714 = vmatpush1.xpose.msra.mxu0 0.0
        %1715 = vmatprep.subr.mxu0 0.0
        %1716 = vmatpush1.xpose.msra.mxu0 0.0
        %1717 = vmatprep.subr.mxu0 0.0
        %1718 = vmatpush1.xpose.msra.mxu0 0.0
        %1719 = vmatprep.subr.mxu0 0.0
        %1720 = vmatpush1.xpose.msra.mxu0 0.0
        %1721 = vmatprep.subr.mxu0 0.0
        %1722 = vmatpush1.xpose.msra.mxu0 0.0
        %1723 = vmatprep.subr.mxu0 0.0
        %1724 = vmatpush1.xpose.msra.mxu0 0.0
        %1725 = vmatprep.subr.mxu0 0.0
        %1726 = vmatpush1.xpose.msra.mxu0 0.0
        %1727 = vmatprep.subr.mxu0 0.0
        %1728 = vmatpush1.xpose.msra.mxu0 0.0
        %1729 = vmatprep.subr.mxu0 0.0
        %1730 = vmatpush1.xpose.msra.mxu0 0.0
        %1731 = vmatprep.subr.mxu0 0.0
        %1732 = vmatpush1.xpose.msra.mxu0 0.0
        %1733 = vmatprep.subr.mxu0 0.0
        %1734 = vmatpush1.xpose.msra.mxu0 0.0
        %1735 = vmatprep.subr.mxu0 0.0
        %1736 = vmatpush1.xpose.msra.mxu0 0.0
        %1737 = vmatprep.subr.mxu0 0.0
        %1738 = vmatpush1.xpose.msra.mxu0 0.0
        %1739 = vmatprep.subr.mxu0 0.0
        %1740 = vmatpush1.xpose.msra.mxu0 0.0
        %1741 = vmatprep.subr.mxu0 0.0
        %1742 = vmatpush1.xpose.msra.mxu0 0.0
        %1743 = vmatprep.subr.mxu0 0.0
        %1744 = vmatpush1.xpose.msra.mxu0 0.0
        %1745 = vmatprep.subr.mxu0 0.0
        %1746 = vmatpush1.xpose.msra.mxu0 0.0
        %1747 = vmatprep.subr.mxu0 0.0
        %1748 = vmatpush1.xpose.msra.mxu0 0.0
        %1749 = vmatprep.subr.mxu0 0.0
        %1750 = vmatpush1.xpose.msra.mxu0 0.0
        %1751 = vmatprep.subr.mxu0 0.0
        %1752 = vmatpush1.xpose.msra.mxu0 0.0
        %1753 = vmatprep.subr.mxu0 0.0
        %1754 = vmatpush1.xpose.msra.mxu0 0.0
        %1755 = vmatprep.subr.mxu0 0.0
        %1756 = vmatpush1.xpose.msra.mxu0 0.0
        %1757 = vmatprep.subr.mxu0 0.0
        %1758 = vmatpush1.xpose.msra.mxu0 0.0
        %1759 = vmatprep.subr.mxu0 0.0
        %1760 = vmatpush1.xpose.msra.mxu0 0.0
        %1761 = vmatprep.mubr.f32.mxu0 0.0
        %1762 = vmatmul.mubr.f32.gmra.mrb[0].mxu0 %v1692
        %v1763 = vpop.f32.mrb[0].mxu0
        %v1764 = vadd.f32 %v769, %v1763
        %v1765 = vpop.f32.mrb[0].mxu0
        %1766 = vdwg.mxu0
        %v1767 = vsel %vm771, %v1764, -inf
        %1768 = vmax.xlane.f32.xlu0 %v1767
        %v1769 = vpop.xlane.xlu0 %1768
        %v1770 = vsub.f32 %v1764, %v1769
        %v1771 = vmul.f32 %v1770, 1.442695
        %v1772 = vpow.pop %v1771
        %v1773 = vsel %vm771, %v1772, 0.0
        %1774 = vadd.xlane.f32.xlu0 %v1773
        %v1775 = vpop.xlane.xlu0 %1774
        %v1776 = vrcp.pop %v1775
        %v1777 = vmul.f32 %v1772, %v1776
        %v1779 = vsel %vm771, %v1777, 0
        %1781 = vmatprep.subr.mxu0 0.0
        %1782 = vmatpush1.msra.mxu0 %v1688
        %1783 = vmatprep.subr.mxu0 0.0
        %1784 = vmatpush1.msra.mxu0 0.0
        %1785 = vmatprep.subr.mxu0 0.0
        %1786 = vmatpush1.msra.mxu0 0.0
        %1787 = vmatprep.subr.mxu0 0.0
        %1788 = vmatpush1.msra.mxu0 0.0
        %1789 = vmatprep.subr.mxu0 0.0
        %1790 = vmatpush1.msra.mxu0 0.0
        %1791 = vmatprep.subr.mxu0 0.0
        %1792 = vmatpush1.msra.mxu0 0.0
        %1793 = vmatprep.subr.mxu0 0.0
        %1794 = vmatpush1.msra.mxu0 0.0
        %1795 = vmatprep.subr.mxu0 0.0
        %1796 = vmatpush1.msra.mxu0 0.0
        %1797 = vmatprep.subr.mxu0 0.0
        %1798 = vmatpush1.msra.mxu0 0.0
        %1799 = vmatprep.subr.mxu0 0.0
        %1800 = vmatpush1.msra.mxu0 0.0
        %1801 = vmatprep.subr.mxu0 0.0
        %1802 = vmatpush1.msra.mxu0 0.0
        %1803 = vmatprep.subr.mxu0 0.0
        %1804 = vmatpush1.msra.mxu0 0.0
        %1805 = vmatprep.subr.mxu0 0.0
        %1806 = vmatpush1.msra.mxu0 0.0
        %1807 = vmatprep.subr.mxu0 0.0
        %1808 = vmatpush1.msra.mxu0 0.0
        %1809 = vmatprep.subr.mxu0 0.0
        %1810 = vmatpush1.msra.mxu0 0.0
        %1811 = vmatprep.subr.mxu0 0.0
        %1812 = vmatpush1.msra.mxu0 0.0
        %1813 = vmatprep.subr.mxu0 0.0
        %1814 = vmatpush1.msra.mxu0 0.0
        %1815 = vmatprep.subr.mxu0 0.0
        %1816 = vmatpush1.msra.mxu0 0.0
        %1817 = vmatprep.subr.mxu0 0.0
        %1818 = vmatpush1.msra.mxu0 0.0
        %1819 = vmatprep.subr.mxu0 0.0
        %1820 = vmatpush1.msra.mxu0 0.0
        %1821 = vmatprep.subr.mxu0 0.0
        %1822 = vmatpush1.msra.mxu0 0.0
        %1823 = vmatprep.subr.mxu0 0.0
        %1824 = vmatpush1.msra.mxu0 0.0
        %1825 = vmatprep.subr.mxu0 0.0
        %1826 = vmatpush1.msra.mxu0 0.0
        %1827 = vmatprep.subr.mxu0 0.0
        %1828 = vmatpush1.msra.mxu0 0.0
        %1829 = vmatprep.subr.mxu0 0.0
        %1830 = vmatpush1.msra.mxu0 0.0
        %1831 = vmatprep.subr.mxu0 0.0
        %1832 = vmatpush1.msra.mxu0 0.0
        %1833 = vmatprep.subr.mxu0 0.0
        %1834 = vmatpush1.msra.mxu0 0.0
        %1835 = vmatprep.subr.mxu0 0.0
        %1836 = vmatpush1.msra.mxu0 0.0
        %1837 = vmatprep.subr.mxu0 0.0
        %1838 = vmatpush1.msra.mxu0 0.0
        %1839 = vmatprep.subr.mxu0 0.0
        %1840 = vmatpush1.msra.mxu0 0.0
        %1841 = vmatprep.subr.mxu0 0.0
        %1842 = vmatpush1.msra.mxu0 0.0
        %1843 = vmatprep.subr.mxu0 0.0
        %1844 = vmatpush1.msra.mxu0 0.0
        %1845 = vmatprep.mubr.f32.mxu0 0.0
        %1846 = vmatmul.mubr.f32.gmra.mrb[0].mxu0 %v1779
        %v1847 = vpop.f32.mrb[0].mxu0
        %v1848 = vadd.f32 0.0, %v1847
        %v1849 = vpop.f32.mrb[0].mxu0
        %1850 = vdwg.mxu0
        %s1851 = scalar_lea.vmem %s487, 16
        %v1852 = vld [vmem:[%s1851] sm:$0xff]
        %v1854 = vsel %vm771, %v1848, 0
        %1856 = vmatprep.subr.mxu0 0.0
        %1857 = vmatpush1.msra.mxu0 %v1852
        %1858 = vmatprep.subr.mxu0 0.0
        %1859 = vmatpush1.msra.mxu0 0.0
        %1860 = vmatprep.subr.mxu0 0.0
        %1861 = vmatpush1.msra.mxu0 0.0
        %1862 = vmatprep.subr.mxu0 0.0
        %1863 = vmatpush1.msra.mxu0 0.0
        %1864 = vmatprep.subr.mxu0 0.0
        %1865 = vmatpush1.msra.mxu0 0.0
        %1866 = vmatprep.subr.mxu0 0.0
        %1867 = vmatpush1.msra.mxu0 0.0
        %1868 = vmatprep.subr.mxu0 0.0
        %1869 = vmatpush1.msra.mxu0 0.0
        %1870 = vmatprep.subr.mxu0 0.0
        %1871 = vmatpush1.msra.mxu0 0.0
        %1872 = vmatprep.subr.mxu0 0.0
        %1873 = vmatpush1.msra.mxu0 0.0
        %1874 = vmatprep.subr.mxu0 0.0
        %1875 = vmatpush1.msra.mxu0 0.0
        %1876 = vmatprep.subr.mxu0 0.0
        %1877 = vmatpush1.msra.mxu0 0.0
        %1878 = vmatprep.subr.mxu0 0.0
        %1879 = vmatpush1.msra.mxu0 0.0
        %1880 = vmatprep.subr.mxu0 0.0
        %1881 = vmatpush1.msra.mxu0 0.0
        %1882 = vmatprep.subr.mxu0 0.0
        %1883 = vmatpush1.msra.mxu0 0.0
        %1884 = vmatprep.subr.mxu0 0.0
        %1885 = vmatpush1.msra.mxu0 0.0
        %1886 = vmatprep.subr.mxu0 0.0
        %1887 = vmatpush1.msra.mxu0 0.0
        %1888 = vmatprep.subr.mxu0 0.0
        %1889 = vmatpush1.msra.mxu0 0.0
        %1890 = vmatprep.subr.mxu0 0.0
        %1891 = vmatpush1.msra.mxu0 0.0
        %1892 = vmatprep.subr.mxu0 0.0
        %1893 = vmatpush1.msra.mxu0 0.0
        %1894 = vmatprep.subr.mxu0 0.0
        %1895 = vmatpush1.msra.mxu0 0.0
        %1896 = vmatprep.subr.mxu0 0.0
        %1897 = vmatpush1.msra.mxu0 0.0
        %1898 = vmatprep.subr.mxu0 0.0
        %1899 = vmatpush1.msra.mxu0 0.0
        %1900 = vmatprep.subr.mxu0 0.0
        %1901 = vmatpush1.msra.mxu0 0.0
        %1902 = vmatprep.subr.mxu0 0.0
        %1903 = vmatpush1.msra.mxu0 0.0
        %1904 = vmatprep.subr.mxu0 0.0
        %1905 = vmatpush1.msra.mxu0 0.0
        %1906 = vmatprep.subr.mxu0 0.0
        %1907 = vmatpush1.msra.mxu0 0.0
        %1908 = vmatprep.subr.mxu0 0.0
        %1909 = vmatpush1.msra.mxu0 0.0
        %1910 = vmatprep.subr.mxu0 0.0
        %1911 = vmatpush1.msra.mxu0 0.0
        %1912 = vmatprep.subr.mxu0 0.0
        %1913 = vmatpush1.msra.mxu0 0.0
        %1914 = vmatprep.subr.mxu0 0.0
        %1915 = vmatpush1.msra.mxu0 0.0
        %1916 = vmatprep.subr.mxu0 0.0
        %1917 = vmatpush1.msra.mxu0 0.0
        %1918 = vmatprep.subr.mxu0 0.0
        %1919 = vmatpush1.msra.mxu0 0.0
        %1920 = vmatprep.mubr.f32.mxu0 0.0
        %1921 = vmatmul.mubr.f32.gmra.mrb[0].mxu0 %v1854
        %v1922 = vpop.f32.mrb[0].mxu0
        %v1923 = vadd.f32 0.0, %v1922
        %v1924 = vpop.f32.mrb[0].mxu0
        %1925 = vdwg.mxu0
        %v1926 = vadd.f32 %v1463, %v1923
        %s1927 = scalar_lea.vmem %s472, 96
        %v1928 = vld [vmem:[%s1927] sm:$0xff]
        %v1929 = vld [vmem:[%s1927 + $0x8] sm:$0xff]
        %v1930 = vld [vmem:[%s1927 + $0x10] sm:$0xff]
        %v1931 = vld [vmem:[%s1927 + $0x18] sm:$0xff]
        %1932 = vmatprep.subr.mxu0 0.0
        %1933 = vmatpush1.msra.mxu0 %v1928
        %1934 = vmatprep.subr.mxu0 0.0
        %1935 = vmatpush1.msra.mxu0 %v1929
        %1936 = vmatprep.subr.mxu0 0.0
        %1937 = vmatpush1.msra.mxu0 %v1930
        %1938 = vmatprep.subr.mxu0 0.0
        %1939 = vmatpush1.msra.mxu0 %v1931
        %1940 = vmatprep.subr.mxu0 0.0
        %1941 = vmatpush1.msra.mxu0 0.0
        %1942 = vmatprep.subr.mxu0 0.0
        %1943 = vmatpush1.msra.mxu0 0.0
        %1944 = vmatprep.subr.mxu0 0.0
        %1945 = vmatpush1.msra.mxu0 0.0
        %1946 = vmatprep.subr.mxu0 0.0
        %1947 = vmatpush1.msra.mxu0 0.0
        %1948 = vmatprep.subr.mxu0 0.0
        %1949 = vmatpush1.msra.mxu0 0.0
        %1950 = vmatprep.subr.mxu0 0.0
        %1951 = vmatpush1.msra.mxu0 0.0
        %1952 = vmatprep.subr.mxu0 0.0
        %1953 = vmatpush1.msra.mxu0 0.0
        %1954 = vmatprep.subr.mxu0 0.0
        %1955 = vmatpush1.msra.mxu0 0.0
        %1956 = vmatprep.subr.mxu0 0.0
        %1957 = vmatpush1.msra.mxu0 0.0
        %1958 = vmatprep.subr.mxu0 0.0
        %1959 = vmatpush1.msra.mxu0 0.0
        %1960 = vmatprep.subr.mxu0 0.0
        %1961 = vmatpush1.msra.mxu0 0.0
        %1962 = vmatprep.subr.mxu0 0.0
        %1963 = vmatpush1.msra.mxu0 0.0
        %1964 = vmatprep.subr.mxu0 0.0
        %1965 = vmatpush1.msra.mxu0 0.0
        %1966 = vmatprep.subr.mxu0 0.0
        %1967 = vmatpush1.msra.mxu0 0.0
        %1968 = vmatprep.subr.mxu0 0.0
        %1969 = vmatpush1.msra.mxu0 0.0
        %1970 = vmatprep.subr.mxu0 0.0
        %1971 = vmatpush1.msra.mxu0 0.0
        %1972 = vmatprep.subr.mxu0 0.0
        %1973 = vmatpush1.msra.mxu0 0.0
        %1974 = vmatprep.subr.mxu0 0.0
        %1975 = vmatpush1.msra.mxu0 0.0
        %1976 = vmatprep.subr.mxu0 0.0
        %1977 = vmatpush1.msra.mxu0 0.0
        %1978 = vmatprep.subr.mxu0 0.0
        %1979 = vmatpush1.msra.mxu0 0.0
        %1980 = vmatprep.subr.mxu0 0.0
        %1981 = vmatpush1.msra.mxu0 0.0
        %1982 = vmatprep.subr.mxu0 0.0
        %1983 = vmatpush1.msra.mxu0 0.0
        %1984 = vmatprep.subr.mxu0 0.0
        %1985 = vmatpush1.msra.mxu0 0.0
        %1986 = vmatprep.subr.mxu0 0.0
        %1987 = vmatpush1.msra.mxu0 0.0
        %1988 = vmatprep.subr.mxu0 0.0
        %1989 = vmatpush1.msra.mxu0 0.0
        %1990 = vmatprep.subr.mxu0 0.0
        %1991 = vmatpush1.msra.mxu0 0.0
        %1992 = vmatprep.subr.mxu0 0.0
        %1993 = vmatpush1.msra.mxu0 0.0
        %1994 = vmatprep.subr.mxu0 0.0
        %1995 = vmatpush1.msra.mxu0 0.0
        %1996 = vmatprep.mubr.f32.mxu0 0.0
        %1997 = vmatmul.mubr.f32.gmra.mrb[0].mxu0 %v545
        %v1998 = vpop.f32.mrb[0].mxu0
        %v1999 = vadd.f32 0.0, %v1998
        %v2000 = vpop.f32.mrb[0].mxu0
        %2001 = vdwg.mxu0
        %s2002 = scalar_lea.vmem %s477, 96
        %v2003 = vld [vmem:[%s2002] sm:$0xff]
        %v2004 = vld [vmem:[%s2002 + $0x8] sm:$0xff]
        %v2005 = vld [vmem:[%s2002 + $0x10] sm:$0xff]
        %v2006 = vld [vmem:[%s2002 + $0x18] sm:$0xff]
        %2007 = vmatprep.subr.mxu0 0.0
        %2008 = vmatpush1.msra.mxu0 %v2003
        %2009 = vmatprep.subr.mxu0 0.0
        %2010 = vmatpush1.msra.mxu0 %v2004
        %2011 = vmatprep.subr.mxu0 0.0
        %2012 = vmatpush1.msra.mxu0 %v2005
        %2013 = vmatprep.subr.mxu0 0.0
        %2014 = vmatpush1.msra.mxu0 %v2006
        %2015 = vmatprep.subr.mxu0 0.0
        %2016 = vmatpush1.msra.mxu0 0.0
        %2017 = vmatprep.subr.mxu0 0.0
        %2018 = vmatpush1.msra.mxu0 0.0
        %2019 = vmatprep.subr.mxu0 0.0
        %2020 = vmatpush1.msra.mxu0 0.0
        %2021 = vmatprep.subr.mxu0 0.0
        %2022 = vmatpush1.msra.mxu0 0.0
        %2023 = vmatprep.subr.mxu0 0.0
        %2024 = vmatpush1.msra.mxu0 0.0
        %2025 = vmatprep.subr.mxu0 0.0
        %2026 = vmatpush1.msra.mxu0 0.0
        %2027 = vmatprep.subr.mxu0 0.0
        %2028 = vmatpush1.msra.mxu0 0.0
        %2029 = vmatprep.subr.mxu0 0.0
        %2030 = vmatpush1.msra.mxu0 0.0
        %2031 = vmatprep.subr.mxu0 0.0
        %2032 = vmatpush1.msra.mxu0 0.0
        %2033 = vmatprep.subr.mxu0 0.0
        %2034 = vmatpush1.msra.mxu0 0.0
        %2035 = vmatprep.subr.mxu0 0.0
        %2036 = vmatpush1.msra.mxu0 0.0
        %2037 = vmatprep.subr.mxu0 0.0
        %2038 = vmatpush1.msra.mxu0 0.0
        %2039 = vmatprep.subr.mxu0 0.0
        %2040 = vmatpush1.msra.mxu0 0.0
        %2041 = vmatprep.subr.mxu0 0.0
        %2042 = vmatpush1.msra.mxu0 0.0
        %2043 = vmatprep.subr.mxu0 0.0
        %2044 = vmatpush1.msra.mxu0 0.0
        %2045 = vmatprep.subr.mxu0 0.0
        %2046 = vmatpush1.msra.mxu0 0.0
        %2047 = vmatprep.subr.mxu0 0.0
        %2048 = vmatpush1.msra.mxu0 0.0
        %2049 = vmatprep.subr.mxu0 0.0
        %2050 = vmatpush1.msra.mxu0 0.0
        %2051 = vmatprep.subr.mxu0 0.0
        %2052 = vmatpush1.msra.mxu0 0.0
        %2053 = vmatprep.subr.mxu0 0.0
        %2054 = vmatpush1.msra.mxu0 0.0
        %2055 = vmatprep.subr.mxu0 0.0
        %2056 = vmatpush1.msra.mxu0 0.0
        %2057 = vmatprep.subr.mxu0 0.0
        %2058 = vmatpush1.msra.mxu0 0.0
        %2059 = vmatprep.subr.mxu0 0.0
        %2060 = vmatpush1.msra.mxu0 0.0
        %2061 = vmatprep.subr.mxu0 0.0
        %2062 = vmatpush1.msra.mxu0 0.0
        %2063 = vmatprep.subr.mxu0 0.0
        %2064 = vmatpush1.msra.mxu0 0.0
        %2065 = vmatprep.subr.mxu0 0.0
        %2066 = vmatpush1.msra.mxu0 0.0
        %2067 = vmatprep.subr.mxu0 0.0
        %2068 = vmatpush1.msra.mxu0 0.0
        %2069 = vmatprep.subr.mxu0 0.0
        %2070 = vmatpush1.msra.mxu0 0.0
        %2071 = vmatprep.mubr.f32.mxu0 0.0
        %2072 = vmatmul.mubr.f32.gmra.mrb[0].mxu0 %v545
        %v2073 = vpop.f32.mrb[0].mxu0
        %v2074 = vadd.f32 0.0, %v2073
        %v2075 = vpop.f32.mrb[0].mxu0
        %2076 = vdwg.mxu0
        %s2077 = scalar_lea.vmem %s482, 96
        %v2078 = vld [vmem:[%s2077] sm:$0xff]
        %v2079 = vld [vmem:[%s2077 + $0x8] sm:$0xff]
        %v2080 = vld [vmem:[%s2077 + $0x10] sm:$0xff]
        %v2081 = vld [vmem:[%s2077 + $0x18] sm:$0xff]
        %2082 = vmatprep.subr.mxu0 0.0
        %2083 = vmatpush1.msra.mxu0 %v2078
        %2084 = vmatprep.subr.mxu0 0.0
        %2085 = vmatpush1.msra.mxu0 %v2079
        %2086 = vmatprep.subr.mxu0 0.0
        %2087 = vmatpush1.msra.mxu0 %v2080
        %2088 = vmatprep.subr.mxu0 0.0
        %2089 = vmatpush1.msra.mxu0 %v2081
        %2090 = vmatprep.subr.mxu0 0.0
        %2091 = vmatpush1.msra.mxu0 0.0
        %2092 = vmatprep.subr.mxu0 0.0
        %2093 = vmatpush1.msra.mxu0 0.0
        %2094 = vmatprep.subr.mxu0 0.0
        %2095 = vmatpush1.msra.mxu0 0.0
        %2096 = vmatprep.subr.mxu0 0.0
        %2097 = vmatpush1.msra.mxu0 0.0
        %2098 = vmatprep.subr.mxu0 0.0
        %2099 = vmatpush1.msra.mxu0 0.0
        %2100 = vmatprep.subr.mxu0 0.0
        %2101 = vmatpush1.msra.mxu0 0.0
        %2102 = vmatprep.subr.mxu0 0.0
        %2103 = vmatpush1.msra.mxu0 0.0
        %2104 = vmatprep.subr.mxu0 0.0
        %2105 = vmatpush1.msra.mxu0 0.0
        %2106 = vmatprep.subr.mxu0 0.0
        %2107 = vmatpush1.msra.mxu0 0.0
        %2108 = vmatprep.subr.mxu0 0.0
        %2109 = vmatpush1.msra.mxu0 0.0
        %2110 = vmatprep.subr.mxu0 0.0
        %2111 = vmatpush1.msra.mxu0 0.0
        %2112 = vmatprep.subr.mxu0 0.0
        %2113 = vmatpush1.msra.mxu0 0.0
        %2114 = vmatprep.subr.mxu0 0.0
        %2115 = vmatpush1.msra.mxu0 0.0
        %2116 = vmatprep.subr.mxu0 0.0
        %2117 = vmatpush1.msra.mxu0 0.0
        %2118 = vmatprep.subr.mxu0 0.0
        %2119 = vmatpush1.msra.mxu0 0.0
        %2120 = vmatprep.subr.mxu0 0.0
        %2121 = vmatpush1.msra.mxu0 0.0
        %2122 = vmatprep.subr.mxu0 0.0
        %2123 = vmatpush1.msra.mxu0 0.0
        %2124 = vmatprep.subr.mxu0 0.0
        %2125 = vmatpush1.msra.mxu0 0.0
        %2126 = vmatprep.subr.mxu0 0.0
        %2127 = vmatpush1.msra.mxu0 0.0
        %2128 = vmatprep.subr.mxu0 0.0
        %2129 = vmatpush1.msra.mxu0 0.0
        %2130 = vmatprep.subr.mxu0 0.0
        %2131 = vmatpush1.msra.mxu0 0.0
        %2132 = vmatprep.subr.mxu0 0.0
        %2133 = vmatpush1.msra.mxu0 0.0
        %2134 = vmatprep.subr.mxu0 0.0
        %2135 = vmatpush1.msra.mxu0 0.0
        %2136 = vmatprep.subr.mxu0 0.0
        %2137 = vmatpush1.msra.mxu0 0.0
        %2138 = vmatprep.subr.mxu0 0.0
        %2139 = vmatpush1.msra.mxu0 0.0
        %2140 = vmatprep.subr.mxu0 0.0
        %2141 = vmatpush1.msra.mxu0 0.0
        %2142 = vmatprep.subr.mxu0 0.0
        %2143 = vmatpush1.msra.mxu0 0.0
        %2144 = vmatprep.subr.mxu0 0.0
        %2145 = vmatpush1.msra.mxu0 0.0
        %2146 = vmatprep.mubr.f32.mxu0 0.0
        %2147 = vmatmul.mubr.f32.gmra.mrb[0].mxu0 %v545
        %v2148 = vpop.f32.mrb[0].mxu0
        %v2149 = vadd.f32 0.0, %v2148
        %v2150 = vpop.f32.mrb[0].mxu0
        %2151 = vdwg.mxu0
        %v2153 = vsel %vm771, %v1999, 0
        %v2156 = vsel %vm771, %v2074, 0
        %2158 = vmatprep.subr.mxu0 0.0
        %2159 = vmatpush1.xpose.msra.mxu0 %v2156
        %2160 = vmatprep.subr.mxu0 0.0
        %2161 = vmatpush1.xpose.msra.mxu0 0.0
        %2162 = vmatprep.subr.mxu0 0.0
        %2163 = vmatpush1.xpose.msra.mxu0 0.0
        %2164 = vmatprep.subr.mxu0 0.0
        %2165 = vmatpush1.xpose.msra.mxu0 0.0
        %2166 = vmatprep.subr.mxu0 0.0
        %2167 = vmatpush1.xpose.msra.mxu0 0.0
        %2168 = vmatprep.subr.mxu0 0.0
        %2169 = vmatpush1.xpose.msra.mxu0 0.0
        %2170 = vmatprep.subr.mxu0 0.0
        %2171 = vmatpush1.xpose.msra.mxu0 0.0
        %2172 = vmatprep.subr.mxu0 0.0
        %2173 = vmatpush1.xpose.msra.mxu0 0.0
        %2174 = vmatprep.subr.mxu0 0.0
        %2175 = vmatpush1.xpose.msra.mxu0 0.0
        %2176 = vmatprep.subr.mxu0 0.0
        %2177 = vmatpush1.xpose.msra.mxu0 0.0
        %2178 = vmatprep.subr.mxu0 0.0
        %2179 = vmatpush1.xpose.msra.mxu0 0.0
        %2180 = vmatprep.subr.mxu0 0.0
        %2181 = vmatpush1.xpose.msra.mxu0 0.0
        %2182 = vmatprep.subr.mxu0 0.0
        %2183 = vmatpush1.xpose.msra.mxu0 0.0
        %2184 = vmatprep.subr.mxu0 0.0
        %2185 = vmatpush1.xpose.msra.mxu0 0.0
        %2186 = vmatprep.subr.mxu0 0.0
        %2187 = vmatpush1.xpose.msra.mxu0 0.0
        %2188 = vmatprep.subr.mxu0 0.0
        %2189 = vmatpush1.xpose.msra.mxu0 0.0
        %2190 = vmatprep.subr.mxu0 0.0
        %2191 = vmatpush1.xpose.msra.mxu0 0.0
        %2192 = vmatprep.subr.mxu0 0.0
        %2193 = vmatpush1.xpose.msra.mxu0 0.0
        %2194 = vmatprep.subr.mxu0 0.0
        %2195 = vmatpush1.xpose.msra.mxu0 0.0
        %2196 = vmatprep.subr.mxu0 0.0
        %2197 = vmatpush1.xpose.msra.mxu0 0.0
        %2198 = vmatprep.subr.mxu0 0.0
        %2199 = vmatpush1.xpose.msra.mxu0 0.0
        %2200 = vmatprep.subr.mxu0 0.0
        %2201 = vmatpush1.xpose.msra.mxu0 0.0
        %2202 = vmatprep.subr.mxu0 0.0
        %2203 = vmatpush1.xpose.msra.mxu0 0.0
        %2204 = vmatprep.subr.mxu0 0.0
        %2205 = vmatpush1.xpose.msra.mxu0 0.0
        %2206 = vmatprep.subr.mxu0 0.0
        %2207 = vmatpush1.xpose.msra.mxu0 0.0
        %2208 = vmatprep.subr.mxu0 0.0
        %2209 = vmatpush1.xpose.msra.mxu0 0.0
        %2210 = vmatprep.subr.mxu0 0.0
        %2211 = vmatpush1.xpose.msra.mxu0 0.0
        %2212 = vmatprep.subr.mxu0 0.0
        %2213 = vmatpush1.xpose.msra.mxu0 0.0
        %2214 = vmatprep.subr.mxu0 0.0
        %2215 = vmatpush1.xpose.msra.mxu0 0.0
        %2216 = vmatprep.subr.mxu0 0.0
        %2217 = vmatpush1.xpose.msra.mxu0 0.0
        %2218 = vmatprep.subr.mxu0 0.0
        %2219 = vmatpush1.xpose.msra.mxu0 0.0
        %2220 = vmatprep.subr.mxu0 0.0
        %2221 = vmatpush1.xpose.msra.mxu0 0.0
        %2222 = vmatprep.mubr.f32.mxu0 0.0
        %2223 = vmatmul.mubr.f32.gmra.mrb[0].mxu0 %v2153
        %v2224 = vpop.f32.mrb[0].mxu0
        %v2225 = vadd.f32 %v769, %v2224
        %v2226 = vpop.f32.mrb[0].mxu0
        %2227 = vdwg.mxu0
        %v2228 = vsel %vm771, %v2225, -inf
        %2229 = vmax.xlane.f32.xlu0 %v2228
        %v2230 = vpop.xlane.xlu0 %2229
        %v2231 = vsub.f32 %v2225, %v2230
        %v2232 = vmul.f32 %v2231, 1.442695
        %v2233 = vpow.pop %v2232
        %v2234 = vsel %vm771, %v2233, 0.0
        %2235 = vadd.xlane.f32.xlu0 %v2234
        %v2236 = vpop.xlane.xlu0 %2235
        %v2237 = vrcp.pop %v2236
        %v2238 = vmul.f32 %v2233, %v2237
        %v2240 = vsel %vm771, %v2238, 0
        %2242 = vmatprep.subr.mxu0 0.0
        %2243 = vmatpush1.msra.mxu0 %v2149
        %2244 = vmatprep.subr.mxu0 0.0
        %2245 = vmatpush1.msra.mxu0 0.0
        %2246 = vmatprep.subr.mxu0 0.0
        %2247 = vmatpush1.msra.mxu0 0.0
        %2248 = vmatprep.subr.mxu0 0.0
        %2249 = vmatpush1.msra.mxu0 0.0
        %2250 = vmatprep.subr.mxu0 0.0
        %2251 = vmatpush1.msra.mxu0 0.0
        %2252 = vmatprep.subr.mxu0 0.0
        %2253 = vmatpush1.msra.mxu0 0.0
        %2254 = vmatprep.subr.mxu0 0.0
        %2255 = vmatpush1.msra.mxu0 0.0
        %2256 = vmatprep.subr.mxu0 0.0
        %2257 = vmatpush1.msra.mxu0 0.0
        %2258 = vmatprep.subr.mxu0 0.0
        %2259 = vmatpush1.msra.mxu0 0.0
        %2260 = vmatprep.subr.mxu0 0.0
        %2261 = vmatpush1.msra.mxu0 0.0
        %2262 = vmatprep.subr.mxu0 0.0
        %2263 = vmatpush1.msra.mxu0 0.0
        %2264 = vmatprep.subr.mxu0 0.0
        %2265 = vmatpush1.msra.mxu0 0.0
        %2266 = vmatprep.subr.mxu0 0.0
        %2267 = vmatpush1.msra.mxu0 0.0
        %2268 = vmatprep.subr.mxu0 0.0
        %2269 = vmatpush1.msra.mxu0 0.0
        %2270 = vmatprep.subr.mxu0 0.0
        %2271 = vmatpush1.msra.mxu0 0.0
        %2272 = vmatprep.subr.mxu0 0.0
        %2273 = vmatpush1.msra.mxu0 0.0
        %2274 = vmatprep.subr.mxu0 0.0
        %2275 = vmatpush1.msra.mxu0 0.0
        %2276 = vmatprep.subr.mxu0 0.0
        %2277 = vmatpush1.msra.mxu0 0.0
        %2278 = vmatprep.subr.mxu0 0.0
        %2279 = vmatpush1.msra.mxu0 0.0
        %2280 = vmatprep.subr.mxu0 0.0
        %2281 = vmatpush1.msra.mxu0 0.0
        %2282 = vmatprep.subr.mxu0 0.0
        %2283 = vmatpush1.msra.mxu0 0.0
        %2284 = vmatprep.subr.mxu0 0.0
        %2285 = vmatpush1.msra.mxu0 0.0
        %2286 = vmatprep.subr.mxu0 0.0
        %2287 = vmatpush1.msra.mxu0 0.0
        %2288 = vmatprep.subr.mxu0 0.0
        %2289 = vmatpush1.msra.mxu0 0.0
        %2290 = vmatprep.subr.mxu0 0.0
        %2291 = vmatpush1.msra.mxu0 0.0
        %2292 = vmatprep.subr.mxu0 0.0
        %2293 = vmatpush1.msra.mxu0 0.0
        %2294 = vmatprep.subr.mxu0 0.0
        %2295 = vmatpush1.msra.mxu0 0.0
        %2296 = vmatprep.subr.mxu0 0.0
        %2297 = vmatpush1.msra.mxu0 0.0
        %2298 = vmatprep.subr.mxu0 0.0
        %2299 = vmatpush1.msra.mxu0 0.0
        %2300 = vmatprep.subr.mxu0 0.0
        %2301 = vmatpush1.msra.mxu0 0.0
        %2302 = vmatprep.subr.mxu0 0.0
        %2303 = vmatpush1.msra.mxu0 0.0
        %2304 = vmatprep.subr.mxu0 0.0
        %2305 = vmatpush1.msra.mxu0 0.0
        %2306 = vmatprep.mubr.f32.mxu0 0.0
        %2307 = vmatmul.mubr.f32.gmra.mrb[0].mxu0 %v2240
        %v2308 = vpop.f32.mrb[0].mxu0
        %v2309 = vadd.f32 0.0, %v2308
        %v2310 = vpop.f32.mrb[0].mxu0
        %2311 = vdwg.mxu0
        %s2312 = scalar_lea.vmem %s487, 24
        %v2313 = vld [vmem:[%s2312] sm:$0xff]
        %v2315 = vsel %vm771, %v2309, 0
        %2317 = vmatprep.subr.mxu0 0.0
        %2318 = vmatpush1.msra.mxu0 %v2313
        %2319 = vmatprep.subr.mxu0 0.0
        %2320 = vmatpush1.msra.mxu0 0.0
        %2321 = vmatprep.subr.mxu0 0.0
        %2322 = vmatpush1.msra.mxu0 0.0
        %2323 = vmatprep.subr.mxu0 0.0
        %2324 = vmatpush1.msra.mxu0 0.0
        %2325 = vmatprep.subr.mxu0 0.0
        %2326 = vmatpush1.msra.mxu0 0.0
        %2327 = vmatprep.subr.mxu0 0.0
        %2328 = vmatpush1.msra.mxu0 0.0
        %2329 = vmatprep.subr.mxu0 0.0
        %2330 = vmatpush1.msra.mxu0 0.0
        %2331 = vmatprep.subr.mxu0 0.0
        %2332 = vmatpush1.msra.mxu0 0.0
        %2333 = vmatprep.subr.mxu0 0.0
        %2334 = vmatpush1.msra.mxu0 0.0
        %2335 = vmatprep.subr.mxu0 0.0
        %2336 = vmatpush1.msra.mxu0 0.0
        %2337 = vmatprep.subr.mxu0 0.0
        %2338 = vmatpush1.msra.mxu0 0.0
        %2339 = vmatprep.subr.mxu0 0.0
        %2340 = vmatpush1.msra.mxu0 0.0
        %2341 = vmatprep.subr.mxu0 0.0
        %2342 = vmatpush1.msra.mxu0 0.0
        %2343 = vmatprep.subr.mxu0 0.0
        %2344 = vmatpush1.msra.mxu0 0.0
        %2345 = vmatprep.subr.mxu0 0.0
        %2346 = vmatpush1.msra.mxu0 0.0
        %2347 = vmatprep.subr.mxu0 0.0
        %2348 = vmatpush1.msra.mxu0 0.0
        %2349 = vmatprep.subr.mxu0 0.0
        %2350 = vmatpush1.msra.mxu0 0.0
        %2351 = vmatprep.subr.mxu0 0.0
        %2352 = vmatpush1.msra.mxu0 0.0
        %2353 = vmatprep.subr.mxu0 0.0
        %2354 = vmatpush1.msra.mxu0 0.0
        %2355 = vmatprep.subr.mxu0 0.0
        %2356 = vmatpush1.msra.mxu0 0.0
        %2357 = vmatprep.subr.mxu0 0.0
        %2358 = vmatpush1.msra.mxu0 0.0
        %2359 = vmatprep.subr.mxu0 0.0
        %2360 = vmatpush1.msra.mxu0 0.0
        %2361 = vmatprep.subr.mxu0 0.0
        %2362 = vmatpush1.msra.mxu0 0.0
        %2363 = vmatprep.subr.mxu0 0.0
        %2364 = vmatpush1.msra.mxu0 0.0
        %2365 = vmatprep.subr.mxu0 0.0
        %2366 = vmatpush1.msra.mxu0 0.0
        %2367 = vmatprep.subr.mxu0 0.0
        %2368 = vmatpush1.msra.mxu0 0.0
        %2369 = vmatprep.subr.mxu0 0.0
        %2370 = vmatpush1.msra.mxu0 0.0
        %2371 = vmatprep.subr.mxu0 0.0
        %2372 = vmatpush1.msra.mxu0 0.0
        %2373 = vmatprep.subr.mxu0 0.0
        %2374 = vmatpush1.msra.mxu0 0.0
        %2375 = vmatprep.subr.mxu0 0.0
        %2376 = vmatpush1.msra.mxu0 0.0
        %2377 = vmatprep.subr.mxu0 0.0
        %2378 = vmatpush1.msra.mxu0 0.0
        %2379 = vmatprep.subr.mxu0 0.0
        %2380 = vmatpush1.msra.mxu0 0.0
        %2381 = vmatprep.mubr.f32.mxu0 0.0
        %2382 = vmatmul.mubr.f32.gmra.mrb[0].mxu0 %v2315
        %v2383 = vpop.f32.mrb[0].mxu0
        %v2384 = vadd.f32 0.0, %v2383
        %v2385 = vpop.f32.mrb[0].mxu0
        %2386 = vdwg.mxu0
        %v2387 = vadd.f32 %v1926, %v2384
        %2388 = vst.msk [vmem:[#allocation2] sm:$0xff] %vm515, %v2387
        %s2389 = scalar_lea.vmem %s1, 1
        %v2390 = vld [vmem:[%s2389] sm:$0x1]
        %v2391 = vld [vmem:[%s472] sm:$0xff]
        %v2392 = vld [vmem:[%s472 + $0x8] sm:$0xff]
        %v2393 = vld [vmem:[%s472 + $0x10] sm:$0xff]
        %v2394 = vld [vmem:[%s472 + $0x18] sm:$0xff]
        %v2396 = vsel %vm515, %v538, 0
        %2398 = vmatprep.subr.mxu0 0.0
        %2399 = vmatpush1.msra.mxu0 %v2391
        %2400 = vmatprep.subr.mxu0 0.0
        %2401 = vmatpush1.msra.mxu0 %v2392
        %2402 = vmatprep.subr.mxu0 0.0
        %2403 = vmatpush1.msra.mxu0 %v2393
        %2404 = vmatprep.subr.mxu0 0.0
        %2405 = vmatpush1.msra.mxu0 %v2394
        %2406 = vmatprep.subr.mxu0 0.0
        %2407 = vmatpush1.msra.mxu0 0.0
        %2408 = vmatprep.subr.mxu0 0.0
        %2409 = vmatpush1.msra.mxu0 0.0
        %2410 = vmatprep.subr.mxu0 0.0
        %2411 = vmatpush1.msra.mxu0 0.0
        %2412 = vmatprep.subr.mxu0 0.0
        %2413 = vmatpush1.msra.mxu0 0.0
        %2414 = vmatprep.subr.mxu0 0.0
        %2415 = vmatpush1.msra.mxu0 0.0
        %2416 = vmatprep.subr.mxu0 0.0
        %2417 = vmatpush1.msra.mxu0 0.0
        %2418 = vmatprep.subr.mxu0 0.0
        %2419 = vmatpush1.msra.mxu0 0.0
        %2420 = vmatprep.subr.mxu0 0.0
        %2421 = vmatpush1.msra.mxu0 0.0
        %2422 = vmatprep.subr.mxu0 0.0
        %2423 = vmatpush1.msra.mxu0 0.0
        %2424 = vmatprep.subr.mxu0 0.0
        %2425 = vmatpush1.msra.mxu0 0.0
        %2426 = vmatprep.subr.mxu0 0.0
        %2427 = vmatpush1.msra.mxu0 0.0
        %2428 = vmatprep.subr.mxu0 0.0
        %2429 = vmatpush1.msra.mxu0 0.0
        %2430 = vmatprep.subr.mxu0 0.0
        %2431 = vmatpush1.msra.mxu0 0.0
        %2432 = vmatprep.subr.mxu0 0.0
        %2433 = vmatpush1.msra.mxu0 0.0
        %2434 = vmatprep.subr.mxu0 0.0
        %2435 = vmatpush1.msra.mxu0 0.0
        %2436 = vmatprep.subr.mxu0 0.0
        %2437 = vmatpush1.msra.mxu0 0.0
        %2438 = vmatprep.subr.mxu0 0.0
        %2439 = vmatpush1.msra.mxu0 0.0
        %2440 = vmatprep.subr.mxu0 0.0
        %2441 = vmatpush1.msra.mxu0 0.0
        %2442 = vmatprep.subr.mxu0 0.0
        %2443 = vmatpush1.msra.mxu0 0.0
        %2444 = vmatprep.subr.mxu0 0.0
        %2445 = vmatpush1.msra.mxu0 0.0
        %2446 = vmatprep.subr.mxu0 0.0
        %2447 = vmatpush1.msra.mxu0 0.0
        %2448 = vmatprep.subr.mxu0 0.0
        %2449 = vmatpush1.msra.mxu0 0.0
        %2450 = vmatprep.subr.mxu0 0.0
        %2451 = vmatpush1.msra.mxu0 0.0
        %2452 = vmatprep.subr.mxu0 0.0
        %2453 = vmatpush1.msra.mxu0 0.0
        %2454 = vmatprep.subr.mxu0 0.0
        %2455 = vmatpush1.msra.mxu0 0.0
        %2456 = vmatprep.subr.mxu0 0.0
        %2457 = vmatpush1.msra.mxu0 0.0
        %2458 = vmatprep.subr.mxu0 0.0
        %2459 = vmatpush1.msra.mxu0 0.0
        %2460 = vmatprep.subr.mxu0 0.0
        %2461 = vmatpush1.msra.mxu0 0.0
        %2462 = vmatprep.mubr.f32.mxu0 0.0
        %2463 = vmatmul.mubr.f32.gmra.mrb[0].mxu0 %v2396
        %v2464 = vpop.f32.mrb[0].mxu0
        %v2465 = vadd.f32 0.0, %v2464
        %v2466 = vpop.f32.mrb[0].mxu0
        %2467 = vdwg.mxu0
        %v2468 = vld [vmem:[%s477] sm:$0xff]
        %v2469 = vld [vmem:[%s477 + $0x8] sm:$0xff]
        %v2470 = vld [vmem:[%s477 + $0x10] sm:$0xff]
        %v2471 = vld [vmem:[%s477 + $0x18] sm:$0xff]
        %2472 = vmatprep.subr.mxu0 0.0
        %2473 = vmatpush1.msra.mxu0 %v2468
        %2474 = vmatprep.subr.mxu0 0.0
        %2475 = vmatpush1.msra.mxu0 %v2469
        %2476 = vmatprep.subr.mxu0 0.0
        %2477 = vmatpush1.msra.mxu0 %v2470
        %2478 = vmatprep.subr.mxu0 0.0
        %2479 = vmatpush1.msra.mxu0 %v2471
        %2480 = vmatprep.subr.mxu0 0.0
        %2481 = vmatpush1.msra.mxu0 0.0
        %2482 = vmatprep.subr.mxu0 0.0
        %2483 = vmatpush1.msra.mxu0 0.0
        %2484 = vmatprep.subr.mxu0 0.0
        %2485 = vmatpush1.msra.mxu0 0.0
        %2486 = vmatprep.subr.mxu0 0.0
        %2487 = vmatpush1.msra.mxu0 0.0
        %2488 = vmatprep.subr.mxu0 0.0
        %2489 = vmatpush1.msra.mxu0 0.0
        %2490 = vmatprep.subr.mxu0 0.0
        %2491 = vmatpush1.msra.mxu0 0.0
        %2492 = vmatprep.subr.mxu0 0.0
        %2493 = vmatpush1.msra.mxu0 0.0
        %2494 = vmatprep.subr.mxu0 0.0
        %2495 = vmatpush1.msra.mxu0 0.0
        %2496 = vmatprep.subr.mxu0 0.0
        %2497 = vmatpush1.msra.mxu0 0.0
        %2498 = vmatprep.subr.mxu0 0.0
        %2499 = vmatpush1.msra.mxu0 0.0
        %2500 = vmatprep.subr.mxu0 0.0
        %2501 = vmatpush1.msra.mxu0 0.0
        %2502 = vmatprep.subr.mxu0 0.0
        %2503 = vmatpush1.msra.mxu0 0.0
        %2504 = vmatprep.subr.mxu0 0.0
        %2505 = vmatpush1.msra.mxu0 0.0
        %2506 = vmatprep.subr.mxu0 0.0
        %2507 = vmatpush1.msra.mxu0 0.0
        %2508 = vmatprep.subr.mxu0 0.0
        %2509 = vmatpush1.msra.mxu0 0.0
        %2510 = vmatprep.subr.mxu0 0.0
        %2511 = vmatpush1.msra.mxu0 0.0
        %2512 = vmatprep.subr.mxu0 0.0
        %2513 = vmatpush1.msra.mxu0 0.0
        %2514 = vmatprep.subr.mxu0 0.0
        %2515 = vmatpush1.msra.mxu0 0.0
        %2516 = vmatprep.subr.mxu0 0.0
        %2517 = vmatpush1.msra.mxu0 0.0
        %2518 = vmatprep.subr.mxu0 0.0
        %2519 = vmatpush1.msra.mxu0 0.0
        %2520 = vmatprep.subr.mxu0 0.0
        %2521 = vmatpush1.msra.mxu0 0.0
        %2522 = vmatprep.subr.mxu0 0.0
        %2523 = vmatpush1.msra.mxu0 0.0
        %2524 = vmatprep.subr.mxu0 0.0
        %2525 = vmatpush1.msra.mxu0 0.0
        %2526 = vmatprep.subr.mxu0 0.0
        %2527 = vmatpush1.msra.mxu0 0.0
        %2528 = vmatprep.subr.mxu0 0.0
        %2529 = vmatpush1.msra.mxu0 0.0
        %2530 = vmatprep.subr.mxu0 0.0
        %2531 = vmatpush1.msra.mxu0 0.0
        %2532 = vmatprep.subr.mxu0 0.0
        %2533 = vmatpush1.msra.mxu0 0.0
        %2534 = vmatprep.subr.mxu0 0.0
        %2535 = vmatpush1.msra.mxu0 0.0
        %2536 = vmatprep.mubr.f32.mxu0 0.0
        %2537 = vmatmul.mubr.f32.gmra.mrb[0].mxu0 %v2396
        %v2538 = vpop.f32.mrb[0].mxu0
        %v2539 = vadd.f32 0.0, %v2538
        %v2540 = vpop.f32.mrb[0].mxu0
        %2541 = vdwg.mxu0
        %v2542 = vld [vmem:[%s482] sm:$0xff]
        %v2543 = vld [vmem:[%s482 + $0x8] sm:$0xff]
        %v2544 = vld [vmem:[%s482 + $0x10] sm:$0xff]
        %v2545 = vld [vmem:[%s482 + $0x18] sm:$0xff]
        %2546 = vmatprep.subr.mxu0 0.0
        %2547 = vmatpush1.msra.mxu0 %v2542
        %2548 = vmatprep.subr.mxu0 0.0
        %2549 = vmatpush1.msra.mxu0 %v2543
        %2550 = vmatprep.subr.mxu0 0.0
        %2551 = vmatpush1.msra.mxu0 %v2544
        %2552 = vmatprep.subr.mxu0 0.0
        %2553 = vmatpush1.msra.mxu0 %v2545
        %2554 = vmatprep.subr.mxu0 0.0
        %2555 = vmatpush1.msra.mxu0 0.0
        %2556 = vmatprep.subr.mxu0 0.0
        %2557 = vmatpush1.msra.mxu0 0.0
        %2558 = vmatprep.subr.mxu0 0.0
        %2559 = vmatpush1.msra.mxu0 0.0
        %2560 = vmatprep.subr.mxu0 0.0
        %2561 = vmatpush1.msra.mxu0 0.0
        %2562 = vmatprep.subr.mxu0 0.0
        %2563 = vmatpush1.msra.mxu0 0.0
        %2564 = vmatprep.subr.mxu0 0.0
        %2565 = vmatpush1.msra.mxu0 0.0
        %2566 = vmatprep.subr.mxu0 0.0
        %2567 = vmatpush1.msra.mxu0 0.0
        %2568 = vmatprep.subr.mxu0 0.0
        %2569 = vmatpush1.msra.mxu0 0.0
        %2570 = vmatprep.subr.mxu0 0.0
        %2571 = vmatpush1.msra.mxu0 0.0
        %2572 = vmatprep.subr.mxu0 0.0
        %2573 = vmatpush1.msra.mxu0 0.0
        %2574 = vmatprep.subr.mxu0 0.0
        %2575 = vmatpush1.msra.mxu0 0.0
        %2576 = vmatprep.subr.mxu0 0.0
        %2577 = vmatpush1.msra.mxu0 0.0
        %2578 = vmatprep.subr.mxu0 0.0
        %2579 = vmatpush1.msra.mxu0 0.0
        %2580 = vmatprep.subr.mxu0 0.0
        %2581 = vmatpush1.msra.mxu0 0.0
        %2582 = vmatprep.subr.mxu0 0.0
        %2583 = vmatpush1.msra.mxu0 0.0
        %2584 = vmatprep.subr.mxu0 0.0
        %2585 = vmatpush1.msra.mxu0 0.0
        %2586 = vmatprep.subr.mxu0 0.0
        %2587 = vmatpush1.msra.mxu0 0.0
        %2588 = vmatprep.subr.mxu0 0.0
        %2589 = vmatpush1.msra.mxu0 0.0
        %2590 = vmatprep.subr.mxu0 0.0
        %2591 = vmatpush1.msra.mxu0 0.0
        %2592 = vmatprep.subr.mxu0 0.0
        %2593 = vmatpush1.msra.mxu0 0.0
        %2594 = vmatprep.subr.mxu0 0.0
        %2595 = vmatpush1.msra.mxu0 0.0
        %2596 = vmatprep.subr.mxu0 0.0
        %2597 = vmatpush1.msra.mxu0 0.0
        %2598 = vmatprep.subr.mxu0 0.0
        %2599 = vmatpush1.msra.mxu0 0.0
        %2600 = vmatprep.subr.mxu0 0.0
        %2601 = vmatpush1.msra.mxu0 0.0
        %2602 = vmatprep.subr.mxu0 0.0
        %2603 = vmatpush1.msra.mxu0 0.0
        %2604 = vmatprep.subr.mxu0 0.0
        %2605 = vmatpush1.msra.mxu0 0.0
        %2606 = vmatprep.subr.mxu0 0.0
        %2607 = vmatpush1.msra.mxu0 0.0
        %2608 = vmatprep.subr.mxu0 0.0
        %2609 = vmatpush1.msra.mxu0 0.0
        %2610 = vmatprep.mubr.f32.mxu0 0.0
        %2611 = vmatmul.mubr.f32.gmra.mrb[0].mxu0 %v2396
        %v2612 = vpop.f32.mrb[0].mxu0
        %v2613 = vadd.f32 0.0, %v2612
        %v2614 = vpop.f32.mrb[0].mxu0
        %2615 = vdwg.mxu0
        %v2617 = vlaneseq
        %v2618 = vshrl.u32 %v2617, 7
        %v2619 = vsub.s32 0, %v2618
        %v2620 = vrot.slane %v2390, %v2619
        %v2623 = vsel %vm771, %v2465, 0
        %v2626 = vsel %vm771, %v2539, 0
        %2628 = vmatprep.subr.mxu0 0.0
        %2629 = vmatpush1.xpose.msra.mxu0 %v2626
        %2630 = vmatprep.subr.mxu0 0.0
        %2631 = vmatpush1.xpose.msra.mxu0 0.0
        %2632 = vmatprep.subr.mxu0 0.0
        %2633 = vmatpush1.xpose.msra.mxu0 0.0
        %2634 = vmatprep.subr.mxu0 0.0
        %2635 = vmatpush1.xpose.msra.mxu0 0.0
        %2636 = vmatprep.subr.mxu0 0.0
        %2637 = vmatpush1.xpose.msra.mxu0 0.0
        %2638 = vmatprep.subr.mxu0 0.0
        %2639 = vmatpush1.xpose.msra.mxu0 0.0
        %2640 = vmatprep.subr.mxu0 0.0
        %2641 = vmatpush1.xpose.msra.mxu0 0.0
        %2642 = vmatprep.subr.mxu0 0.0
        %2643 = vmatpush1.xpose.msra.mxu0 0.0
        %2644 = vmatprep.subr.mxu0 0.0
        %2645 = vmatpush1.xpose.msra.mxu0 0.0
        %2646 = vmatprep.subr.mxu0 0.0
        %2647 = vmatpush1.xpose.msra.mxu0 0.0
        %2648 = vmatprep.subr.mxu0 0.0
        %2649 = vmatpush1.xpose.msra.mxu0 0.0
        %2650 = vmatprep.subr.mxu0 0.0
        %2651 = vmatpush1.xpose.msra.mxu0 0.0
        %2652 = vmatprep.subr.mxu0 0.0
        %2653 = vmatpush1.xpose.msra.mxu0 0.0
        %2654 = vmatprep.subr.mxu0 0.0
        %2655 = vmatpush1.xpose.msra.mxu0 0.0
        %2656 = vmatprep.subr.mxu0 0.0
        %2657 = vmatpush1.xpose.msra.mxu0 0.0
        %2658 = vmatprep.subr.mxu0 0.0
        %2659 = vmatpush1.xpose.msra.mxu0 0.0
        %2660 = vmatprep.subr.mxu0 0.0
        %2661 = vmatpush1.xpose.msra.mxu0 0.0
        %2662 = vmatprep.subr.mxu0 0.0
        %2663 = vmatpush1.xpose.msra.mxu0 0.0
        %2664 = vmatprep.subr.mxu0 0.0
        %2665 = vmatpush1.xpose.msra.mxu0 0.0
        %2666 = vmatprep.subr.mxu0 0.0
        %2667 = vmatpush1.xpose.msra.mxu0 0.0
        %2668 = vmatprep.subr.mxu0 0.0
        %2669 = vmatpush1.xpose.msra.mxu0 0.0
        %2670 = vmatprep.subr.mxu0 0.0
        %2671 = vmatpush1.xpose.msra.mxu0 0.0
        %2672 = vmatprep.subr.mxu0 0.0
        %2673 = vmatpush1.xpose.msra.mxu0 0.0
        %2674 = vmatprep.subr.mxu0 0.0
        %2675 = vmatpush1.xpose.msra.mxu0 0.0
        %2676 = vmatprep.subr.mxu0 0.0
        %2677 = vmatpush1.xpose.msra.mxu0 0.0
        %2678 = vmatprep.subr.mxu0 0.0
        %2679 = vmatpush1.xpose.msra.mxu0 0.0
        %2680 = vmatprep.subr.mxu0 0.0
        %2681 = vmatpush1.xpose.msra.mxu0 0.0
        %2682 = vmatprep.subr.mxu0 0.0
        %2683 = vmatpush1.xpose.msra.mxu0 0.0
        %2684 = vmatprep.subr.mxu0 0.0
        %2685 = vmatpush1.xpose.msra.mxu0 0.0
        %2686 = vmatprep.subr.mxu0 0.0
        %2687 = vmatpush1.xpose.msra.mxu0 0.0
        %2688 = vmatprep.subr.mxu0 0.0
        %2689 = vmatpush1.xpose.msra.mxu0 0.0
        %2690 = vmatprep.subr.mxu0 0.0
        %2691 = vmatpush1.xpose.msra.mxu0 0.0
        %2692 = vmatprep.mubr.f32.mxu0 0.0
        %2693 = vmatmul.mubr.f32.gmra.mrb[0].mxu0 %v2623
        %v2694 = vpop.f32.mrb[0].mxu0
        %v2695 = vadd.f32 %v2620, %v2694
        %v2696 = vpop.f32.mrb[0].mxu0
        %2697 = vdwg.mxu0
        %v2698 = vsel %vm771, %v2695, -inf
        %2699 = vmax.xlane.f32.xlu0 %v2698
        %v2700 = vpop.xlane.xlu0 %2699
        %v2701 = vsub.f32 %v2695, %v2700
        %v2702 = vmul.f32 %v2701, 1.442695
        %v2703 = vpow.pop %v2702
        %v2704 = vsel %vm771, %v2703, 0.0
        %2705 = vadd.xlane.f32.xlu0 %v2704
        %v2706 = vpop.xlane.xlu0 %2705
        %v2707 = vrcp.pop %v2706
        %v2708 = vmul.f32 %v2703, %v2707
        %v2710 = vsel %vm771, %v2708, 0
        %2712 = vmatprep.subr.mxu0 0.0
        %2713 = vmatpush1.msra.mxu0 %v2613
        %2714 = vmatprep.subr.mxu0 0.0
        %2715 = vmatpush1.msra.mxu0 0.0
        %2716 = vmatprep.subr.mxu0 0.0
        %2717 = vmatpush1.msra.mxu0 0.0
        %2718 = vmatprep.subr.mxu0 0.0
        %2719 = vmatpush1.msra.mxu0 0.0
        %2720 = vmatprep.subr.mxu0 0.0
        %2721 = vmatpush1.msra.mxu0 0.0
        %2722 = vmatprep.subr.mxu0 0.0
        %2723 = vmatpush1.msra.mxu0 0.0
        %2724 = vmatprep.subr.mxu0 0.0
        %2725 = vmatpush1.msra.mxu0 0.0
        %2726 = vmatprep.subr.mxu0 0.0
        %2727 = vmatpush1.msra.mxu0 0.0
        %2728 = vmatprep.subr.mxu0 0.0
        %2729 = vmatpush1.msra.mxu0 0.0
        %2730 = vmatprep.subr.mxu0 0.0
        %2731 = vmatpush1.msra.mxu0 0.0
        %2732 = vmatprep.subr.mxu0 0.0
        %2733 = vmatpush1.msra.mxu0 0.0
        %2734 = vmatprep.subr.mxu0 0.0
        %2735 = vmatpush1.msra.mxu0 0.0
        %2736 = vmatprep.subr.mxu0 0.0
        %2737 = vmatpush1.msra.mxu0 0.0
        %2738 = vmatprep.subr.mxu0 0.0
        %2739 = vmatpush1.msra.mxu0 0.0
        %2740 = vmatprep.subr.mxu0 0.0
        %2741 = vmatpush1.msra.mxu0 0.0
        %2742 = vmatprep.subr.mxu0 0.0
        %2743 = vmatpush1.msra.mxu0 0.0
        %2744 = vmatprep.subr.mxu0 0.0
        %2745 = vmatpush1.msra.mxu0 0.0
        %2746 = vmatprep.subr.mxu0 0.0
        %2747 = vmatpush1.msra.mxu0 0.0
        %2748 = vmatprep.subr.mxu0 0.0
        %2749 = vmatpush1.msra.mxu0 0.0
        %2750 = vmatprep.subr.mxu0 0.0
        %2751 = vmatpush1.msra.mxu0 0.0
        %2752 = vmatprep.subr.mxu0 0.0
        %2753 = vmatpush1.msra.mxu0 0.0
        %2754 = vmatprep.subr.mxu0 0.0
        %2755 = vmatpush1.msra.mxu0 0.0
        %2756 = vmatprep.subr.mxu0 0.0
        %2757 = vmatpush1.msra.mxu0 0.0
        %2758 = vmatprep.subr.mxu0 0.0
        %2759 = vmatpush1.msra.mxu0 0.0
        %2760 = vmatprep.subr.mxu0 0.0
        %2761 = vmatpush1.msra.mxu0 0.0
        %2762 = vmatprep.subr.mxu0 0.0
        %2763 = vmatpush1.msra.mxu0 0.0
        %2764 = vmatprep.subr.mxu0 0.0
        %2765 = vmatpush1.msra.mxu0 0.0
        %2766 = vmatprep.subr.mxu0 0.0
        %2767 = vmatpush1.msra.mxu0 0.0
        %2768 = vmatprep.subr.mxu0 0.0
        %2769 = vmatpush1.msra.mxu0 0.0
        %2770 = vmatprep.subr.mxu0 0.0
        %2771 = vmatpush1.msra.mxu0 0.0
        %2772 = vmatprep.subr.mxu0 0.0
        %2773 = vmatpush1.msra.mxu0 0.0
        %2774 = vmatprep.subr.mxu0 0.0
        %2775 = vmatpush1.msra.mxu0 0.0
        %2776 = vmatprep.mubr.f32.mxu0 0.0
        %2777 = vmatmul.mubr.f32.gmra.mrb[0].mxu0 %v2710
        %v2778 = vpop.f32.mrb[0].mxu0
        %v2779 = vadd.f32 0.0, %v2778
        %v2780 = vpop.f32.mrb[0].mxu0
        %2781 = vdwg.mxu0
        %v2782 = vld [vmem:[%s487] sm:$0xff]
        %v2783 = vld [vmem:[%s933] sm:$0xff]
        %v2784 = vld [vmem:[%s933 + $0x8] sm:$0xff]
        %v2785 = vld [vmem:[%s933 + $0x10] sm:$0xff]
        %v2786 = vld [vmem:[%s933 + $0x18] sm:$0xff]
        %2787 = vmatprep.subr.mxu0 0.0
        %2788 = vmatpush1.msra.mxu0 %v2783
        %2789 = vmatprep.subr.mxu0 0.0
        %2790 = vmatpush1.msra.mxu0 %v2784
        %2791 = vmatprep.subr.mxu0 0.0
        %2792 = vmatpush1.msra.mxu0 %v2785
        %2793 = vmatprep.subr.mxu0 0.0
        %2794 = vmatpush1.msra.mxu0 %v2786
        %2795 = vmatprep.subr.mxu0 0.0
        %2796 = vmatpush1.msra.mxu0 0.0
        %2797 = vmatprep.subr.mxu0 0.0
        %2798 = vmatpush1.msra.mxu0 0.0
        %2799 = vmatprep.subr.mxu0 0.0
        %2800 = vmatpush1.msra.mxu0 0.0
        %2801 = vmatprep.subr.mxu0 0.0
        %2802 = vmatpush1.msra.mxu0 0.0
        %2803 = vmatprep.subr.mxu0 0.0
        %2804 = vmatpush1.msra.mxu0 0.0
        %2805 = vmatprep.subr.mxu0 0.0
        %2806 = vmatpush1.msra.mxu0 0.0
        %2807 = vmatprep.subr.mxu0 0.0
        %2808 = vmatpush1.msra.mxu0 0.0
        %2809 = vmatprep.subr.mxu0 0.0
        %2810 = vmatpush1.msra.mxu0 0.0
        %2811 = vmatprep.subr.mxu0 0.0
        %2812 = vmatpush1.msra.mxu0 0.0
        %2813 = vmatprep.subr.mxu0 0.0
        %2814 = vmatpush1.msra.mxu0 0.0
        %2815 = vmatprep.subr.mxu0 0.0
        %2816 = vmatpush1.msra.mxu0 0.0
        %2817 = vmatprep.subr.mxu0 0.0
        %2818 = vmatpush1.msra.mxu0 0.0
        %2819 = vmatprep.subr.mxu0 0.0
        %2820 = vmatpush1.msra.mxu0 0.0
        %2821 = vmatprep.subr.mxu0 0.0
        %2822 = vmatpush1.msra.mxu0 0.0
        %2823 = vmatprep.subr.mxu0 0.0
        %2824 = vmatpush1.msra.mxu0 0.0
        %2825 = vmatprep.subr.mxu0 0.0
        %2826 = vmatpush1.msra.mxu0 0.0
        %2827 = vmatprep.subr.mxu0 0.0
        %2828 = vmatpush1.msra.mxu0 0.0
        %2829 = vmatprep.subr.mxu0 0.0
        %2830 = vmatpush1.msra.mxu0 0.0
        %2831 = vmatprep.subr.mxu0 0.0
        %2832 = vmatpush1.msra.mxu0 0.0
        %2833 = vmatprep.subr.mxu0 0.0
        %2834 = vmatpush1.msra.mxu0 0.0
        %2835 = vmatprep.subr.mxu0 0.0
        %2836 = vmatpush1.msra.mxu0 0.0
        %2837 = vmatprep.subr.mxu0 0.0
        %2838 = vmatpush1.msra.mxu0 0.0
        %2839 = vmatprep.subr.mxu0 0.0
        %2840 = vmatpush1.msra.mxu0 0.0
        %2841 = vmatprep.subr.mxu0 0.0
        %2842 = vmatpush1.msra.mxu0 0.0
        %2843 = vmatprep.subr.mxu0 0.0
        %2844 = vmatpush1.msra.mxu0 0.0
        %2845 = vmatprep.subr.mxu0 0.0
        %2846 = vmatpush1.msra.mxu0 0.0
        %2847 = vmatprep.subr.mxu0 0.0
        %2848 = vmatpush1.msra.mxu0 0.0
        %2849 = vmatprep.subr.mxu0 0.0
        %2850 = vmatpush1.msra.mxu0 0.0
        %2851 = vmatprep.mubr.f32.mxu0 0.0
        %2852 = vmatmul.mubr.f32.gmra.mrb[0].mxu0 %v2396
        %v2853 = vpop.f32.mrb[0].mxu0
        %v2854 = vadd.f32 0.0, %v2853
        %v2855 = vpop.f32.mrb[0].mxu0
        %2856 = vdwg.mxu0
        %v2857 = vld [vmem:[%s1008] sm:$0xff]
        %v2858 = vld [vmem:[%s1008 + $0x8] sm:$0xff]
        %v2859 = vld [vmem:[%s1008 + $0x10] sm:$0xff]
        %v2860 = vld [vmem:[%s1008 + $0x18] sm:$0xff]
        %2861 = vmatprep.subr.mxu0 0.0
        %2862 = vmatpush1.msra.mxu0 %v2857
        %2863 = vmatprep.subr.mxu0 0.0
        %2864 = vmatpush1.msra.mxu0 %v2858
        %2865 = vmatprep.subr.mxu0 0.0
        %2866 = vmatpush1.msra.mxu0 %v2859
        %2867 = vmatprep.subr.mxu0 0.0
        %2868 = vmatpush1.msra.mxu0 %v2860
        %2869 = vmatprep.subr.mxu0 0.0
        %2870 = vmatpush1.msra.mxu0 0.0
        %2871 = vmatprep.subr.mxu0 0.0
        %2872 = vmatpush1.msra.mxu0 0.0
        %2873 = vmatprep.subr.mxu0 0.0
        %2874 = vmatpush1.msra.mxu0 0.0
        %2875 = vmatprep.subr.mxu0 0.0
        %2876 = vmatpush1.msra.mxu0 0.0
        %2877 = vmatprep.subr.mxu0 0.0
        %2878 = vmatpush1.msra.mxu0 0.0
        %2879 = vmatprep.subr.mxu0 0.0
        %2880 = vmatpush1.msra.mxu0 0.0
        %2881 = vmatprep.subr.mxu0 0.0
        %2882 = vmatpush1.msra.mxu0 0.0
        %2883 = vmatprep.subr.mxu0 0.0
        %2884 = vmatpush1.msra.mxu0 0.0
        %2885 = vmatprep.subr.mxu0 0.0
        %2886 = vmatpush1.msra.mxu0 0.0
        %2887 = vmatprep.subr.mxu0 0.0
        %2888 = vmatpush1.msra.mxu0 0.0
        %2889 = vmatprep.subr.mxu0 0.0
        %2890 = vmatpush1.msra.mxu0 0.0
        %2891 = vmatprep.subr.mxu0 0.0
        %2892 = vmatpush1.msra.mxu0 0.0
        %2893 = vmatprep.subr.mxu0 0.0
        %2894 = vmatpush1.msra.mxu0 0.0
        %2895 = vmatprep.subr.mxu0 0.0
        %2896 = vmatpush1.msra.mxu0 0.0
        %2897 = vmatprep.subr.mxu0 0.0
        %2898 = vmatpush1.msra.mxu0 0.0
        %2899 = vmatprep.subr.mxu0 0.0
        %2900 = vmatpush1.msra.mxu0 0.0
        %2901 = vmatprep.subr.mxu0 0.0
        %2902 = vmatpush1.msra.mxu0 0.0
        %2903 = vmatprep.subr.mxu0 0.0
        %2904 = vmatpush1.msra.mxu0 0.0
        %2905 = vmatprep.subr.mxu0 0.0
        %2906 = vmatpush1.msra.mxu0 0.0
        %2907 = vmatprep.subr.mxu0 0.0
        %2908 = vmatpush1.msra.mxu0 0.0
        %2909 = vmatprep.subr.mxu0 0.0
        %2910 = vmatpush1.msra.mxu0 0.0
        %2911 = vmatprep.subr.mxu0 0.0
        %2912 = vmatpush1.msra.mxu0 0.0
        %2913 = vmatprep.subr.mxu0 0.0
        %2914 = vmatpush1.msra.mxu0 0.0
        %2915 = vmatprep.subr.mxu0 0.0
        %2916 = vmatpush1.msra.mxu0 0.0
        %2917 = vmatprep.subr.mxu0 0.0
        %2918 = vmatpush1.msra.mxu0 0.0
        %2919 = vmatprep.subr.mxu0 0.0
        %2920 = vmatpush1.msra.mxu0 0.0
        %2921 = vmatprep.subr.mxu0 0.0
        %2922 = vmatpush1.msra.mxu0 0.0
        %2923 = vmatprep.subr.mxu0 0.0
        %2924 = vmatpush1.msra.mxu0 0.0
        %2925 = vmatprep.mubr.f32.mxu0 0.0
        %2926 = vmatmul.mubr.f32.gmra.mrb[0].mxu0 %v2396
        %v2927 = vpop.f32.mrb[0].mxu0
        %v2928 = vadd.f32 0.0, %v2927
        %v2929 = vpop.f32.mrb[0].mxu0
        %2930 = vdwg.mxu0
        %v2931 = vld [vmem:[%s1083] sm:$0xff]
        %v2932 = vld [vmem:[%s1083 + $0x8] sm:$0xff]
        %v2933 = vld [vmem:[%s1083 + $0x10] sm:$0xff]
        %v2934 = vld [vmem:[%s1083 + $0x18] sm:$0xff]
        %2935 = vmatprep.subr.mxu0 0.0
        %2936 = vmatpush1.msra.mxu0 %v2931
        %2937 = vmatprep.subr.mxu0 0.0
        %2938 = vmatpush1.msra.mxu0 %v2932
        %2939 = vmatprep.subr.mxu0 0.0
        %2940 = vmatpush1.msra.mxu0 %v2933
        %2941 = vmatprep.subr.mxu0 0.0
        %2942 = vmatpush1.msra.mxu0 %v2934
        %2943 = vmatprep.subr.mxu0 0.0
        %2944 = vmatpush1.msra.mxu0 0.0
        %2945 = vmatprep.subr.mxu0 0.0
        %2946 = vmatpush1.msra.mxu0 0.0
        %2947 = vmatprep.subr.mxu0 0.0
        %2948 = vmatpush1.msra.mxu0 0.0
        %2949 = vmatprep.subr.mxu0 0.0
        %2950 = vmatpush1.msra.mxu0 0.0
        %2951 = vmatprep.subr.mxu0 0.0
        %2952 = vmatpush1.msra.mxu0 0.0
        %2953 = vmatprep.subr.mxu0 0.0
        %2954 = vmatpush1.msra.mxu0 0.0
        %2955 = vmatprep.subr.mxu0 0.0
        %2956 = vmatpush1.msra.mxu0 0.0
        %2957 = vmatprep.subr.mxu0 0.0
        %2958 = vmatpush1.msra.mxu0 0.0
        %2959 = vmatprep.subr.mxu0 0.0
        %2960 = vmatpush1.msra.mxu0 0.0
        %2961 = vmatprep.subr.mxu0 0.0
        %2962 = vmatpush1.msra.mxu0 0.0
        %2963 = vmatprep.subr.mxu0 0.0
        %2964 = vmatpush1.msra.mxu0 0.0
        %2965 = vmatprep.subr.mxu0 0.0
        %2966 = vmatpush1.msra.mxu0 0.0
        %2967 = vmatprep.subr.mxu0 0.0
        %2968 = vmatpush1.msra.mxu0 0.0
        %2969 = vmatprep.subr.mxu0 0.0
        %2970 = vmatpush1.msra.mxu0 0.0
        %2971 = vmatprep.subr.mxu0 0.0
        %2972 = vmatpush1.msra.mxu0 0.0
        %2973 = vmatprep.subr.mxu0 0.0
        %2974 = vmatpush1.msra.mxu0 0.0
        %2975 = vmatprep.subr.mxu0 0.0
        %2976 = vmatpush1.msra.mxu0 0.0
        %2977 = vmatprep.subr.mxu0 0.0
        %2978 = vmatpush1.msra.mxu0 0.0
        %2979 = vmatprep.subr.mxu0 0.0
        %2980 = vmatpush1.msra.mxu0 0.0
        %2981 = vmatprep.subr.mxu0 0.0
        %2982 = vmatpush1.msra.mxu0 0.0
        %2983 = vmatprep.subr.mxu0 0.0
        %2984 = vmatpush1.msra.mxu0 0.0
        %2985 = vmatprep.subr.mxu0 0.0
        %2986 = vmatpush1.msra.mxu0 0.0
        %2987 = vmatprep.subr.mxu0 0.0
        %2988 = vmatpush1.msra.mxu0 0.0
        %2989 = vmatprep.subr.mxu0 0.0
        %2990 = vmatpush1.msra.mxu0 0.0
        %2991 = vmatprep.subr.mxu0 0.0
        %2992 = vmatpush1.msra.mxu0 0.0
        %2993 = vmatprep.subr.mxu0 0.0
        %2994 = vmatpush1.msra.mxu0 0.0
        %2995 = vmatprep.subr.mxu0 0.0
        %2996 = vmatpush1.msra.mxu0 0.0
        %2997 = vmatprep.subr.mxu0 0.0
        %2998 = vmatpush1.msra.mxu0 0.0
        %2999 = vmatprep.mubr.f32.mxu0 0.0
        %3000 = vmatmul.mubr.f32.gmra.mrb[0].mxu0 %v2396
        %v3001 = vpop.f32.mrb[0].mxu0
        %v3002 = vadd.f32 0.0, %v3001
        %v3003 = vpop.f32.mrb[0].mxu0
        %3004 = vdwg.mxu0
        %v3006 = vsel %vm771, %v2854, 0
        %v3009 = vsel %vm771, %v2928, 0
        %3011 = vmatprep.subr.mxu0 0.0
        %3012 = vmatpush1.xpose.msra.mxu0 %v3009
        %3013 = vmatprep.subr.mxu0 0.0
        %3014 = vmatpush1.xpose.msra.mxu0 0.0
        %3015 = vmatprep.subr.mxu0 0.0
        %3016 = vmatpush1.xpose.msra.mxu0 0.0
        %3017 = vmatprep.subr.mxu0 0.0
        %3018 = vmatpush1.xpose.msra.mxu0 0.0
        %3019 = vmatprep.subr.mxu0 0.0
        %3020 = vmatpush1.xpose.msra.mxu0 0.0
        %3021 = vmatprep.subr.mxu0 0.0
        %3022 = vmatpush1.xpose.msra.mxu0 0.0
        %3023 = vmatprep.subr.mxu0 0.0
        %3024 = vmatpush1.xpose.msra.mxu0 0.0
        %3025 = vmatprep.subr.mxu0 0.0
        %3026 = vmatpush1.xpose.msra.mxu0 0.0
        %3027 = vmatprep.subr.mxu0 0.0
        %3028 = vmatpush1.xpose.msra.mxu0 0.0
        %3029 = vmatprep.subr.mxu0 0.0
        %3030 = vmatpush1.xpose.msra.mxu0 0.0
        %3031 = vmatprep.subr.mxu0 0.0
        %3032 = vmatpush1.xpose.msra.mxu0 0.0
        %3033 = vmatprep.subr.mxu0 0.0
        %3034 = vmatpush1.xpose.msra.mxu0 0.0
        %3035 = vmatprep.subr.mxu0 0.0
        %3036 = vmatpush1.xpose.msra.mxu0 0.0
        %3037 = vmatprep.subr.mxu0 0.0
        %3038 = vmatpush1.xpose.msra.mxu0 0.0
        %3039 = vmatprep.subr.mxu0 0.0
        %3040 = vmatpush1.xpose.msra.mxu0 0.0
        %3041 = vmatprep.subr.mxu0 0.0
        %3042 = vmatpush1.xpose.msra.mxu0 0.0
        %3043 = vmatprep.subr.mxu0 0.0
        %3044 = vmatpush1.xpose.msra.mxu0 0.0
        %3045 = vmatprep.subr.mxu0 0.0
        %3046 = vmatpush1.xpose.msra.mxu0 0.0
        %3047 = vmatprep.subr.mxu0 0.0
        %3048 = vmatpush1.xpose.msra.mxu0 0.0
        %3049 = vmatprep.subr.mxu0 0.0
        %3050 = vmatpush1.xpose.msra.mxu0 0.0
        %3051 = vmatprep.subr.mxu0 0.0
        %3052 = vmatpush1.xpose.msra.mxu0 0.0
        %3053 = vmatprep.subr.mxu0 0.0
        %3054 = vmatpush1.xpose.msra.mxu0 0.0
        %3055 = vmatprep.subr.mxu0 0.0
        %3056 = vmatpush1.xpose.msra.mxu0 0.0
        %3057 = vmatprep.subr.mxu0 0.0
        %3058 = vmatpush1.xpose.msra.mxu0 0.0
        %3059 = vmatprep.subr.mxu0 0.0
        %3060 = vmatpush1.xpose.msra.mxu0 0.0
        %3061 = vmatprep.subr.mxu0 0.0
        %3062 = vmatpush1.xpose.msra.mxu0 0.0
        %3063 = vmatprep.subr.mxu0 0.0
        %3064 = vmatpush1.xpose.msra.mxu0 0.0
        %3065 = vmatprep.subr.mxu0 0.0
        %3066 = vmatpush1.xpose.msra.mxu0 0.0
        %3067 = vmatprep.subr.mxu0 0.0
        %3068 = vmatpush1.xpose.msra.mxu0 0.0
        %3069 = vmatprep.subr.mxu0 0.0
        %3070 = vmatpush1.xpose.msra.mxu0 0.0
        %3071 = vmatprep.subr.mxu0 0.0
        %3072 = vmatpush1.xpose.msra.mxu0 0.0
        %3073 = vmatprep.subr.mxu0 0.0
        %3074 = vmatpush1.xpose.msra.mxu0 0.0
        %3075 = vmatprep.mubr.f32.mxu0 0.0
        %3076 = vmatmul.mubr.f32.gmra.mrb[0].mxu0 %v3006
        %v3077 = vpop.f32.mrb[0].mxu0
        %v3078 = vadd.f32 %v2620, %v3077
        %v3079 = vpop.f32.mrb[0].mxu0
        %3080 = vdwg.mxu0
        %v3081 = vsel %vm771, %v3078, -inf
        %3082 = vmax.xlane.f32.xlu0 %v3081
        %v3083 = vpop.xlane.xlu0 %3082
        %v3084 = vsub.f32 %v3078, %v3083
        %v3085 = vmul.f32 %v3084, 1.442695
        %v3086 = vpow.pop %v3085
        %v3087 = vsel %vm771, %v3086, 0.0
        %3088 = vadd.xlane.f32.xlu0 %v3087
        %v3089 = vpop.xlane.xlu0 %3088
        %v3090 = vrcp.pop %v3089
        %v3091 = vmul.f32 %v3086, %v3090
        %v3093 = vsel %vm771, %v3091, 0
        %3095 = vmatprep.subr.mxu0 0.0
        %3096 = vmatpush1.msra.mxu0 %v3002
        %3097 = vmatprep.subr.mxu0 0.0
        %3098 = vmatpush1.msra.mxu0 0.0
        %3099 = vmatprep.subr.mxu0 0.0
        %3100 = vmatpush1.msra.mxu0 0.0
        %3101 = vmatprep.subr.mxu0 0.0
        %3102 = vmatpush1.msra.mxu0 0.0
        %3103 = vmatprep.subr.mxu0 0.0
        %3104 = vmatpush1.msra.mxu0 0.0
        %3105 = vmatprep.subr.mxu0 0.0
        %3106 = vmatpush1.msra.mxu0 0.0
        %3107 = vmatprep.subr.mxu0 0.0
        %3108 = vmatpush1.msra.mxu0 0.0
        %3109 = vmatprep.subr.mxu0 0.0
        %3110 = vmatpush1.msra.mxu0 0.0
        %3111 = vmatprep.subr.mxu0 0.0
        %3112 = vmatpush1.msra.mxu0 0.0
        %3113 = vmatprep.subr.mxu0 0.0
        %3114 = vmatpush1.msra.mxu0 0.0
        %3115 = vmatprep.subr.mxu0 0.0
        %3116 = vmatpush1.msra.mxu0 0.0
        %3117 = vmatprep.subr.mxu0 0.0
        %3118 = vmatpush1.msra.mxu0 0.0
        %3119 = vmatprep.subr.mxu0 0.0
        %3120 = vmatpush1.msra.mxu0 0.0
        %3121 = vmatprep.subr.mxu0 0.0
        %3122 = vmatpush1.msra.mxu0 0.0
        %3123 = vmatprep.subr.mxu0 0.0
        %3124 = vmatpush1.msra.mxu0 0.0
        %3125 = vmatprep.subr.mxu0 0.0
        %3126 = vmatpush1.msra.mxu0 0.0
        %3127 = vmatprep.subr.mxu0 0.0
        %3128 = vmatpush1.msra.mxu0 0.0
        %3129 = vmatprep.subr.mxu0 0.0
        %3130 = vmatpush1.msra.mxu0 0.0
        %3131 = vmatprep.subr.mxu0 0.0
        %3132 = vmatpush1.msra.mxu0 0.0
        %3133 = vmatprep.subr.mxu0 0.0
        %3134 = vmatpush1.msra.mxu0 0.0
        %3135 = vmatprep.subr.mxu0 0.0
        %3136 = vmatpush1.msra.mxu0 0.0
        %3137 = vmatprep.subr.mxu0 0.0
        %3138 = vmatpush1.msra.mxu0 0.0
        %3139 = vmatprep.subr.mxu0 0.0
        %3140 = vmatpush1.msra.mxu0 0.0
        %3141 = vmatprep.subr.mxu0 0.0
        %3142 = vmatpush1.msra.mxu0 0.0
        %3143 = vmatprep.subr.mxu0 0.0
        %3144 = vmatpush1.msra.mxu0 0.0
        %3145 = vmatprep.subr.mxu0 0.0
        %3146 = vmatpush1.msra.mxu0 0.0
        %3147 = vmatprep.subr.mxu0 0.0
        %3148 = vmatpush1.msra.mxu0 0.0
        %3149 = vmatprep.subr.mxu0 0.0
        %3150 = vmatpush1.msra.mxu0 0.0
        %3151 = vmatprep.subr.mxu0 0.0
        %3152 = vmatpush1.msra.mxu0 0.0
        %3153 = vmatprep.subr.mxu0 0.0
        %3154 = vmatpush1.msra.mxu0 0.0
        %3155 = vmatprep.subr.mxu0 0.0
        %3156 = vmatpush1.msra.mxu0 0.0
        %3157 = vmatprep.subr.mxu0 0.0
        %3158 = vmatpush1.msra.mxu0 0.0
        %3159 = vmatprep.mubr.f32.mxu0 0.0
        %3160 = vmatmul.mubr.f32.gmra.mrb[0].mxu0 %v3093
        %v3161 = vpop.f32.mrb[0].mxu0
        %v3162 = vadd.f32 0.0, %v3161
        %v3163 = vpop.f32.mrb[0].mxu0
        %3164 = vdwg.mxu0
        %v3165 = vld [vmem:[%s1318] sm:$0xff]
        %v3167 = vsel %vm771, %v3162, 0
        %3169 = vmatprep.subr.mxu0 0.0
        %3170 = vmatpush1.msra.mxu0 %v3165
        %3171 = vmatprep.subr.mxu0 0.0
        %3172 = vmatpush1.msra.mxu0 0.0
        %3173 = vmatprep.subr.mxu0 0.0
        %3174 = vmatpush1.msra.mxu0 0.0
        %3175 = vmatprep.subr.mxu0 0.0
        %3176 = vmatpush1.msra.mxu0 0.0
        %3177 = vmatprep.subr.mxu0 0.0
        %3178 = vmatpush1.msra.mxu0 0.0
        %3179 = vmatprep.subr.mxu0 0.0
        %3180 = vmatpush1.msra.mxu0 0.0
        %3181 = vmatprep.subr.mxu0 0.0
        %3182 = vmatpush1.msra.mxu0 0.0
        %3183 = vmatprep.subr.mxu0 0.0
        %3184 = vmatpush1.msra.mxu0 0.0
        %3185 = vmatprep.subr.mxu0 0.0
        %3186 = vmatpush1.msra.mxu0 0.0
        %3187 = vmatprep.subr.mxu0 0.0
        %3188 = vmatpush1.msra.mxu0 0.0
        %3189 = vmatprep.subr.mxu0 0.0
        %3190 = vmatpush1.msra.mxu0 0.0
        %3191 = vmatprep.subr.mxu0 0.0
        %3192 = vmatpush1.msra.mxu0 0.0
        %3193 = vmatprep.subr.mxu0 0.0
        %3194 = vmatpush1.msra.mxu0 0.0
        %3195 = vmatprep.subr.mxu0 0.0
        %3196 = vmatpush1.msra.mxu0 0.0
        %3197 = vmatprep.subr.mxu0 0.0
        %3198 = vmatpush1.msra.mxu0 0.0
        %3199 = vmatprep.subr.mxu0 0.0
        %3200 = vmatpush1.msra.mxu0 0.0
        %3201 = vmatprep.subr.mxu0 0.0
        %3202 = vmatpush1.msra.mxu0 0.0
        %3203 = vmatprep.subr.mxu0 0.0
        %3204 = vmatpush1.msra.mxu0 0.0
        %3205 = vmatprep.subr.mxu0 0.0
        %3206 = vmatpush1.msra.mxu0 0.0
        %3207 = vmatprep.subr.mxu0 0.0
        %3208 = vmatpush1.msra.mxu0 0.0
        %3209 = vmatprep.subr.mxu0 0.0
        %3210 = vmatpush1.msra.mxu0 0.0
        %3211 = vmatprep.subr.mxu0 0.0
        %3212 = vmatpush1.msra.mxu0 0.0
        %3213 = vmatprep.subr.mxu0 0.0
        %3214 = vmatpush1.msra.mxu0 0.0
        %3215 = vmatprep.subr.mxu0 0.0
        %3216 = vmatpush1.msra.mxu0 0.0
        %3217 = vmatprep.subr.mxu0 0.0
        %3218 = vmatpush1.msra.mxu0 0.0
        %3219 = vmatprep.subr.mxu0 0.0
        %3220 = vmatpush1.msra.mxu0 0.0
        %3221 = vmatprep.subr.mxu0 0.0
        %3222 = vmatpush1.msra.mxu0 0.0
        %3223 = vmatprep.subr.mxu0 0.0
        %3224 = vmatpush1.msra.mxu0 0.0
        %3225 = vmatprep.subr.mxu0 0.0
        %3226 = vmatpush1.msra.mxu0 0.0
        %3227 = vmatprep.subr.mxu0 0.0
        %3228 = vmatpush1.msra.mxu0 0.0
        %3229 = vmatprep.subr.mxu0 0.0
        %3230 = vmatpush1.msra.mxu0 0.0
        %3231 = vmatprep.subr.mxu0 0.0
        %3232 = vmatpush1.msra.mxu0 0.0
        %3233 = vmatprep.mubr.f32.mxu0 0.0
        %3234 = vmatmul.mubr.f32.gmra.mrb[0].mxu0 %v3167
        %v3235 = vpop.f32.mrb[0].mxu0
        %v3236 = vadd.f32 0.0, %v3235
        %v3237 = vpop.f32.mrb[0].mxu0
        %3238 = vdwg.mxu0
        %v3240 = vsel %vm771, %v2779, 0
        %3242 = vmatprep.subr.mxu0 0.0
        %3243 = vmatpush1.msra.mxu0 %v2782
        %3244 = vmatprep.subr.mxu0 0.0
        %3245 = vmatpush1.msra.mxu0 0.0
        %3246 = vmatprep.subr.mxu0 0.0
        %3247 = vmatpush1.msra.mxu0 0.0
        %3248 = vmatprep.subr.mxu0 0.0
        %3249 = vmatpush1.msra.mxu0 0.0
        %3250 = vmatprep.subr.mxu0 0.0
        %3251 = vmatpush1.msra.mxu0 0.0
        %3252 = vmatprep.subr.mxu0 0.0
        %3253 = vmatpush1.msra.mxu0 0.0
        %3254 = vmatprep.subr.mxu0 0.0
        %3255 = vmatpush1.msra.mxu0 0.0
        %3256 = vmatprep.subr.mxu0 0.0
        %3257 = vmatpush1.msra.mxu0 0.0
        %3258 = vmatprep.subr.mxu0 0.0
        %3259 = vmatpush1.msra.mxu0 0.0
        %3260 = vmatprep.subr.mxu0 0.0
        %3261 = vmatpush1.msra.mxu0 0.0
        %3262 = vmatprep.subr.mxu0 0.0
        %3263 = vmatpush1.msra.mxu0 0.0
        %3264 = vmatprep.subr.mxu0 0.0
        %3265 = vmatpush1.msra.mxu0 0.0
        %3266 = vmatprep.subr.mxu0 0.0
        %3267 = vmatpush1.msra.mxu0 0.0
        %3268 = vmatprep.subr.mxu0 0.0
        %3269 = vmatpush1.msra.mxu0 0.0
        %3270 = vmatprep.subr.mxu0 0.0
        %3271 = vmatpush1.msra.mxu0 0.0
        %3272 = vmatprep.subr.mxu0 0.0
        %3273 = vmatpush1.msra.mxu0 0.0
        %3274 = vmatprep.subr.mxu0 0.0
        %3275 = vmatpush1.msra.mxu0 0.0
        %3276 = vmatprep.subr.mxu0 0.0
        %3277 = vmatpush1.msra.mxu0 0.0
        %3278 = vmatprep.subr.mxu0 0.0
        %3279 = vmatpush1.msra.mxu0 0.0
        %3280 = vmatprep.subr.mxu0 0.0
        %3281 = vmatpush1.msra.mxu0 0.0
        %3282 = vmatprep.subr.mxu0 0.0
        %3283 = vmatpush1.msra.mxu0 0.0
        %3284 = vmatprep.subr.mxu0 0.0
        %3285 = vmatpush1.msra.mxu0 0.0
        %3286 = vmatprep.subr.mxu0 0.0
        %3287 = vmatpush1.msra.mxu0 0.0
        %3288 = vmatprep.subr.mxu0 0.0
        %3289 = vmatpush1.msra.mxu0 0.0
        %3290 = vmatprep.subr.mxu0 0.0
        %3291 = vmatpush1.msra.mxu0 0.0
        %3292 = vmatprep.subr.mxu0 0.0
        %3293 = vmatpush1.msra.mxu0 0.0
        %3294 = vmatprep.subr.mxu0 0.0
        %3295 = vmatpush1.msra.mxu0 0.0
        %3296 = vmatprep.subr.mxu0 0.0
        %3297 = vmatpush1.msra.mxu0 0.0
        %3298 = vmatprep.subr.mxu0 0.0
        %3299 = vmatpush1.msra.mxu0 0.0
        %3300 = vmatprep.subr.mxu0 0.0
        %3301 = vmatpush1.msra.mxu0 0.0
        %3302 = vmatprep.subr.mxu0 0.0
        %3303 = vmatpush1.msra.mxu0 0.0
        %3304 = vmatprep.subr.mxu0 0.0
        %3305 = vmatpush1.msra.mxu0 0.0
        %3306 = vmatprep.mubr.f32.mxu0 0.0
        %3307 = vmatmul.mubr.f32.gmra.mrb[0].mxu0 %v3240
        %v3308 = vpop.f32.mrb[0].mxu0
        %v3309 = vadd.f32 %v3236, %v3308
        %v3310 = vpop.f32.mrb[0].mxu0
        %3311 = vdwg.mxu0
        %v3312 = vld [vmem:[%s1466] sm:$0xff]
        %v3313 = vld [vmem:[%s1466 + $0x8] sm:$0xff]
        %v3314 = vld [vmem:[%s1466 + $0x10] sm:$0xff]
        %v3315 = vld [vmem:[%s1466 + $0x18] sm:$0xff]
        %3316 = vmatprep.subr.mxu0 0.0
        %3317 = vmatpush1.msra.mxu0 %v3312
        %3318 = vmatprep.subr.mxu0 0.0
        %3319 = vmatpush1.msra.mxu0 %v3313
        %3320 = vmatprep.subr.mxu0 0.0
        %3321 = vmatpush1.msra.mxu0 %v3314
        %3322 = vmatprep.subr.mxu0 0.0
        %3323 = vmatpush1.msra.mxu0 %v3315
        %3324 = vmatprep.subr.mxu0 0.0
        %3325 = vmatpush1.msra.mxu0 0.0
        %3326 = vmatprep.subr.mxu0 0.0
        %3327 = vmatpush1.msra.mxu0 0.0
        %3328 = vmatprep.subr.mxu0 0.0
        %3329 = vmatpush1.msra.mxu0 0.0
        %3330 = vmatprep.subr.mxu0 0.0
        %3331 = vmatpush1.msra.mxu0 0.0
        %3332 = vmatprep.subr.mxu0 0.0
        %3333 = vmatpush1.msra.mxu0 0.0
        %3334 = vmatprep.subr.mxu0 0.0
        %3335 = vmatpush1.msra.mxu0 0.0
        %3336 = vmatprep.subr.mxu0 0.0
        %3337 = vmatpush1.msra.mxu0 0.0
        %3338 = vmatprep.subr.mxu0 0.0
        %3339 = vmatpush1.msra.mxu0 0.0
        %3340 = vmatprep.subr.mxu0 0.0
        %3341 = vmatpush1.msra.mxu0 0.0
        %3342 = vmatprep.subr.mxu0 0.0
        %3343 = vmatpush1.msra.mxu0 0.0
        %3344 = vmatprep.subr.mxu0 0.0
        %3345 = vmatpush1.msra.mxu0 0.0
        %3346 = vmatprep.subr.mxu0 0.0
        %3347 = vmatpush1.msra.mxu0 0.0
        %3348 = vmatprep.subr.mxu0 0.0
        %3349 = vmatpush1.msra.mxu0 0.0
        %3350 = vmatprep.subr.mxu0 0.0
        %3351 = vmatpush1.msra.mxu0 0.0
        %3352 = vmatprep.subr.mxu0 0.0
        %3353 = vmatpush1.msra.mxu0 0.0
        %3354 = vmatprep.subr.mxu0 0.0
        %3355 = vmatpush1.msra.mxu0 0.0
        %3356 = vmatprep.subr.mxu0 0.0
        %3357 = vmatpush1.msra.mxu0 0.0
        %3358 = vmatprep.subr.mxu0 0.0
        %3359 = vmatpush1.msra.mxu0 0.0
        %3360 = vmatprep.subr.mxu0 0.0
        %3361 = vmatpush1.msra.mxu0 0.0
        %3362 = vmatprep.subr.mxu0 0.0
        %3363 = vmatpush1.msra.mxu0 0.0
        %3364 = vmatprep.subr.mxu0 0.0
        %3365 = vmatpush1.msra.mxu0 0.0
        %3366 = vmatprep.subr.mxu0 0.0
        %3367 = vmatpush1.msra.mxu0 0.0
        %3368 = vmatprep.subr.mxu0 0.0
        %3369 = vmatpush1.msra.mxu0 0.0
        %3370 = vmatprep.subr.mxu0 0.0
        %3371 = vmatpush1.msra.mxu0 0.0
        %3372 = vmatprep.subr.mxu0 0.0
        %3373 = vmatpush1.msra.mxu0 0.0
        %3374 = vmatprep.subr.mxu0 0.0
        %3375 = vmatpush1.msra.mxu0 0.0
        %3376 = vmatprep.subr.mxu0 0.0
        %3377 = vmatpush1.msra.mxu0 0.0
        %3378 = vmatprep.subr.mxu0 0.0
        %3379 = vmatpush1.msra.mxu0 0.0
        %3380 = vmatprep.mubr.f32.mxu0 0.0
        %3381 = vmatmul.mubr.f32.gmra.mrb[0].mxu0 %v2396
        %v3382 = vpop.f32.mrb[0].mxu0
        %v3383 = vadd.f32 0.0, %v3382
        %v3384 = vpop.f32.mrb[0].mxu0
        %3385 = vdwg.mxu0
        %v3386 = vld [vmem:[%s1541] sm:$0xff]
        %v3387 = vld [vmem:[%s1541 + $0x8] sm:$0xff]
        %v3388 = vld [vmem:[%s1541 + $0x10] sm:$0xff]
        %v3389 = vld [vmem:[%s1541 + $0x18] sm:$0xff]
        %3390 = vmatprep.subr.mxu0 0.0
        %3391 = vmatpush1.msra.mxu0 %v3386
        %3392 = vmatprep.subr.mxu0 0.0
        %3393 = vmatpush1.msra.mxu0 %v3387
        %3394 = vmatprep.subr.mxu0 0.0
        %3395 = vmatpush1.msra.mxu0 %v3388
        %3396 = vmatprep.subr.mxu0 0.0
        %3397 = vmatpush1.msra.mxu0 %v3389
        %3398 = vmatprep.subr.mxu0 0.0
        %3399 = vmatpush1.msra.mxu0 0.0
        %3400 = vmatprep.subr.mxu0 0.0
        %3401 = vmatpush1.msra.mxu0 0.0
        %3402 = vmatprep.subr.mxu0 0.0
        %3403 = vmatpush1.msra.mxu0 0.0
        %3404 = vmatprep.subr.mxu0 0.0
        %3405 = vmatpush1.msra.mxu0 0.0
        %3406 = vmatprep.subr.mxu0 0.0
        %3407 = vmatpush1.msra.mxu0 0.0
        %3408 = vmatprep.subr.mxu0 0.0
        %3409 = vmatpush1.msra.mxu0 0.0
        %3410 = vmatprep.subr.mxu0 0.0
        %3411 = vmatpush1.msra.mxu0 0.0
        %3412 = vmatprep.subr.mxu0 0.0
        %3413 = vmatpush1.msra.mxu0 0.0
        %3414 = vmatprep.subr.mxu0 0.0
        %3415 = vmatpush1.msra.mxu0 0.0
        %3416 = vmatprep.subr.mxu0 0.0
        %3417 = vmatpush1.msra.mxu0 0.0
        %3418 = vmatprep.subr.mxu0 0.0
        %3419 = vmatpush1.msra.mxu0 0.0
        %3420 = vmatprep.subr.mxu0 0.0
        %3421 = vmatpush1.msra.mxu0 0.0
        %3422 = vmatprep.subr.mxu0 0.0
        %3423 = vmatpush1.msra.mxu0 0.0
        %3424 = vmatprep.subr.mxu0 0.0
        %3425 = vmatpush1.msra.mxu0 0.0
        %3426 = vmatprep.subr.mxu0 0.0
        %3427 = vmatpush1.msra.mxu0 0.0
        %3428 = vmatprep.subr.mxu0 0.0
        %3429 = vmatpush1.msra.mxu0 0.0
        %3430 = vmatprep.subr.mxu0 0.0
        %3431 = vmatpush1.msra.mxu0 0.0
        %3432 = vmatprep.subr.mxu0 0.0
        %3433 = vmatpush1.msra.mxu0 0.0
        %3434 = vmatprep.subr.mxu0 0.0
        %3435 = vmatpush1.msra.mxu0 0.0
        %3436 = vmatprep.subr.mxu0 0.0
        %3437 = vmatpush1.msra.mxu0 0.0
        %3438 = vmatprep.subr.mxu0 0.0
        %3439 = vmatpush1.msra.mxu0 0.0
        %3440 = vmatprep.subr.mxu0 0.0
        %3441 = vmatpush1.msra.mxu0 0.0
        %3442 = vmatprep.subr.mxu0 0.0
        %3443 = vmatpush1.msra.mxu0 0.0
        %3444 = vmatprep.subr.mxu0 0.0
        %3445 = vmatpush1.msra.mxu0 0.0
        %3446 = vmatprep.subr.mxu0 0.0
        %3447 = vmatpush1.msra.mxu0 0.0
        %3448 = vmatprep.subr.mxu0 0.0
        %3449 = vmatpush1.msra.mxu0 0.0
        %3450 = vmatprep.subr.mxu0 0.0
        %3451 = vmatpush1.msra.mxu0 0.0
        %3452 = vmatprep.subr.mxu0 0.0
        %3453 = vmatpush1.msra.mxu0 0.0
        %3454 = vmatprep.mubr.f32.mxu0 0.0
        %3455 = vmatmul.mubr.f32.gmra.mrb[0].mxu0 %v2396
        %v3456 = vpop.f32.mrb[0].mxu0
        %v3457 = vadd.f32 0.0, %v3456
        %v3458 = vpop.f32.mrb[0].mxu0
        %3459 = vdwg.mxu0
        %v3460 = vld [vmem:[%s1616] sm:$0xff]
        %v3461 = vld [vmem:[%s1616 + $0x8] sm:$0xff]
        %v3462 = vld [vmem:[%s1616 + $0x10] sm:$0xff]
        %v3463 = vld [vmem:[%s1616 + $0x18] sm:$0xff]
        %3464 = vmatprep.subr.mxu0 0.0
        %3465 = vmatpush1.msra.mxu0 %v3460
        %3466 = vmatprep.subr.mxu0 0.0
        %3467 = vmatpush1.msra.mxu0 %v3461
        %3468 = vmatprep.subr.mxu0 0.0
        %3469 = vmatpush1.msra.mxu0 %v3462
        %3470 = vmatprep.subr.mxu0 0.0
        %3471 = vmatpush1.msra.mxu0 %v3463
        %3472 = vmatprep.subr.mxu0 0.0
        %3473 = vmatpush1.msra.mxu0 0.0
        %3474 = vmatprep.subr.mxu0 0.0
        %3475 = vmatpush1.msra.mxu0 0.0
        %3476 = vmatprep.subr.mxu0 0.0
        %3477 = vmatpush1.msra.mxu0 0.0
        %3478 = vmatprep.subr.mxu0 0.0
        %3479 = vmatpush1.msra.mxu0 0.0
        %3480 = vmatprep.subr.mxu0 0.0
        %3481 = vmatpush1.msra.mxu0 0.0
        %3482 = vmatprep.subr.mxu0 0.0
        %3483 = vmatpush1.msra.mxu0 0.0
        %3484 = vmatprep.subr.mxu0 0.0
        %3485 = vmatpush1.msra.mxu0 0.0
        %3486 = vmatprep.subr.mxu0 0.0
        %3487 = vmatpush1.msra.mxu0 0.0
        %3488 = vmatprep.subr.mxu0 0.0
        %3489 = vmatpush1.msra.mxu0 0.0
        %3490 = vmatprep.subr.mxu0 0.0
        %3491 = vmatpush1.msra.mxu0 0.0
        %3492 = vmatprep.subr.mxu0 0.0
        %3493 = vmatpush1.msra.mxu0 0.0
        %3494 = vmatprep.subr.mxu0 0.0
        %3495 = vmatpush1.msra.mxu0 0.0
        %3496 = vmatprep.subr.mxu0 0.0
        %3497 = vmatpush1.msra.mxu0 0.0
        %3498 = vmatprep.subr.mxu0 0.0
        %3499 = vmatpush1.msra.mxu0 0.0
        %3500 = vmatprep.subr.mxu0 0.0
        %3501 = vmatpush1.msra.mxu0 0.0
        %3502 = vmatprep.subr.mxu0 0.0
        %3503 = vmatpush1.msra.mxu0 0.0
        %3504 = vmatprep.subr.mxu0 0.0
        %3505 = vmatpush1.msra.mxu0 0.0
        %3506 = vmatprep.subr.mxu0 0.0
        %3507 = vmatpush1.msra.mxu0 0.0
        %3508 = vmatprep.subr.mxu0 0.0
        %3509 = vmatpush1.msra.mxu0 0.0
        %3510 = vmatprep.subr.mxu0 0.0
        %3511 = vmatpush1.msra.mxu0 0.0
        %3512 = vmatprep.subr.mxu0 0.0
        %3513 = vmatpush1.msra.mxu0 0.0
        %3514 = vmatprep.subr.mxu0 0.0
        %3515 = vmatpush1.msra.mxu0 0.0
        %3516 = vmatprep.subr.mxu0 0.0
        %3517 = vmatpush1.msra.mxu0 0.0
        %3518 = vmatprep.subr.mxu0 0.0
        %3519 = vmatpush1.msra.mxu0 0.0
        %3520 = vmatprep.subr.mxu0 0.0
        %3521 = vmatpush1.msra.mxu0 0.0
        %3522 = vmatprep.subr.mxu0 0.0
        %3523 = vmatpush1.msra.mxu0 0.0
        %3524 = vmatprep.subr.mxu0 0.0
        %3525 = vmatpush1.msra.mxu0 0.0
        %3526 = vmatprep.subr.mxu0 0.0
        %3527 = vmatpush1.msra.mxu0 0.0
        %3528 = vmatprep.mubr.f32.mxu0 0.0
        %3529 = vmatmul.mubr.f32.gmra.mrb[0].mxu0 %v2396
        %v3530 = vpop.f32.mrb[0].mxu0
        %v3531 = vadd.f32 0.0, %v3530
        %v3532 = vpop.f32.mrb[0].mxu0
        %3533 = vdwg.mxu0
        %v3535 = vsel %vm771, %v3383, 0
        %v3538 = vsel %vm771, %v3457, 0
        %3540 = vmatprep.subr.mxu0 0.0
        %3541 = vmatpush1.xpose.msra.mxu0 %v3538
        %3542 = vmatprep.subr.mxu0 0.0
        %3543 = vmatpush1.xpose.msra.mxu0 0.0
        %3544 = vmatprep.subr.mxu0 0.0
        %3545 = vmatpush1.xpose.msra.mxu0 0.0
        %3546 = vmatprep.subr.mxu0 0.0
        %3547 = vmatpush1.xpose.msra.mxu0 0.0
        %3548 = vmatprep.subr.mxu0 0.0
        %3549 = vmatpush1.xpose.msra.mxu0 0.0
        %3550 = vmatprep.subr.mxu0 0.0
        %3551 = vmatpush1.xpose.msra.mxu0 0.0
        %3552 = vmatprep.subr.mxu0 0.0
        %3553 = vmatpush1.xpose.msra.mxu0 0.0
        %3554 = vmatprep.subr.mxu0 0.0
        %3555 = vmatpush1.xpose.msra.mxu0 0.0
        %3556 = vmatprep.subr.mxu0 0.0
        %3557 = vmatpush1.xpose.msra.mxu0 0.0
        %3558 = vmatprep.subr.mxu0 0.0
        %3559 = vmatpush1.xpose.msra.mxu0 0.0
        %3560 = vmatprep.subr.mxu0 0.0
        %3561 = vmatpush1.xpose.msra.mxu0 0.0
        %3562 = vmatprep.subr.mxu0 0.0
        %3563 = vmatpush1.xpose.msra.mxu0 0.0
        %3564 = vmatprep.subr.mxu0 0.0
        %3565 = vmatpush1.xpose.msra.mxu0 0.0
        %3566 = vmatprep.subr.mxu0 0.0
        %3567 = vmatpush1.xpose.msra.mxu0 0.0
        %3568 = vmatprep.subr.mxu0 0.0
        %3569 = vmatpush1.xpose.msra.mxu0 0.0
        %3570 = vmatprep.subr.mxu0 0.0
        %3571 = vmatpush1.xpose.msra.mxu0 0.0
        %3572 = vmatprep.subr.mxu0 0.0
        %3573 = vmatpush1.xpose.msra.mxu0 0.0
        %3574 = vmatprep.subr.mxu0 0.0
        %3575 = vmatpush1.xpose.msra.mxu0 0.0
        %3576 = vmatprep.subr.mxu0 0.0
        %3577 = vmatpush1.xpose.msra.mxu0 0.0
        %3578 = vmatprep.subr.mxu0 0.0
        %3579 = vmatpush1.xpose.msra.mxu0 0.0
        %3580 = vmatprep.subr.mxu0 0.0
        %3581 = vmatpush1.xpose.msra.mxu0 0.0
        %3582 = vmatprep.subr.mxu0 0.0
        %3583 = vmatpush1.xpose.msra.mxu0 0.0
        %3584 = vmatprep.subr.mxu0 0.0
        %3585 = vmatpush1.xpose.msra.mxu0 0.0
        %3586 = vmatprep.subr.mxu0 0.0
        %3587 = vmatpush1.xpose.msra.mxu0 0.0
        %3588 = vmatprep.subr.mxu0 0.0
        %3589 = vmatpush1.xpose.msra.mxu0 0.0
        %3590 = vmatprep.subr.mxu0 0.0
        %3591 = vmatpush1.xpose.msra.mxu0 0.0
        %3592 = vmatprep.subr.mxu0 0.0
        %3593 = vmatpush1.xpose.msra.mxu0 0.0
        %3594 = vmatprep.subr.mxu0 0.0
        %3595 = vmatpush1.xpose.msra.mxu0 0.0
        %3596 = vmatprep.subr.mxu0 0.0
        %3597 = vmatpush1.xpose.msra.mxu0 0.0
        %3598 = vmatprep.subr.mxu0 0.0
        %3599 = vmatpush1.xpose.msra.mxu0 0.0
        %3600 = vmatprep.subr.mxu0 0.0
        %3601 = vmatpush1.xpose.msra.mxu0 0.0
        %3602 = vmatprep.subr.mxu0 0.0
        %3603 = vmatpush1.xpose.msra.mxu0 0.0
        %3604 = vmatprep.mubr.f32.mxu0 0.0
        %3605 = vmatmul.mubr.f32.gmra.mrb[0].mxu0 %v3535
        %v3606 = vpop.f32.mrb[0].mxu0
        %v3607 = vadd.f32 %v2620, %v3606
        %v3608 = vpop.f32.mrb[0].mxu0
        %3609 = vdwg.mxu0
        %v3610 = vsel %vm771, %v3607, -inf
        %3611 = vmax.xlane.f32.xlu0 %v3610
        %v3612 = vpop.xlane.xlu0 %3611
        %v3613 = vsub.f32 %v3607, %v3612
        %v3614 = vmul.f32 %v3613, 1.442695
        %v3615 = vpow.pop %v3614
        %v3616 = vsel %vm771, %v3615, 0.0
        %3617 = vadd.xlane.f32.xlu0 %v3616
        %v3618 = vpop.xlane.xlu0 %3617
        %v3619 = vrcp.pop %v3618
        %v3620 = vmul.f32 %v3615, %v3619
        %v3622 = vsel %vm771, %v3620, 0
        %3624 = vmatprep.subr.mxu0 0.0
        %3625 = vmatpush1.msra.mxu0 %v3531
        %3626 = vmatprep.subr.mxu0 0.0
        %3627 = vmatpush1.msra.mxu0 0.0
        %3628 = vmatprep.subr.mxu0 0.0
        %3629 = vmatpush1.msra.mxu0 0.0
        %3630 = vmatprep.subr.mxu0 0.0
        %3631 = vmatpush1.msra.mxu0 0.0
        %3632 = vmatprep.subr.mxu0 0.0
        %3633 = vmatpush1.msra.mxu0 0.0
        %3634 = vmatprep.subr.mxu0 0.0
        %3635 = vmatpush1.msra.mxu0 0.0
        %3636 = vmatprep.subr.mxu0 0.0
        %3637 = vmatpush1.msra.mxu0 0.0
        %3638 = vmatprep.subr.mxu0 0.0
        %3639 = vmatpush1.msra.mxu0 0.0
        %3640 = vmatprep.subr.mxu0 0.0
        %3641 = vmatpush1.msra.mxu0 0.0
        %3642 = vmatprep.subr.mxu0 0.0
        %3643 = vmatpush1.msra.mxu0 0.0
        %3644 = vmatprep.subr.mxu0 0.0
        %3645 = vmatpush1.msra.mxu0 0.0
        %3646 = vmatprep.subr.mxu0 0.0
        %3647 = vmatpush1.msra.mxu0 0.0
        %3648 = vmatprep.subr.mxu0 0.0
        %3649 = vmatpush1.msra.mxu0 0.0
        %3650 = vmatprep.subr.mxu0 0.0
        %3651 = vmatpush1.msra.mxu0 0.0
        %3652 = vmatprep.subr.mxu0 0.0
        %3653 = vmatpush1.msra.mxu0 0.0
        %3654 = vmatprep.subr.mxu0 0.0
        %3655 = vmatpush1.msra.mxu0 0.0
        %3656 = vmatprep.subr.mxu0 0.0
        %3657 = vmatpush1.msra.mxu0 0.0
        %3658 = vmatprep.subr.mxu0 0.0
        %3659 = vmatpush1.msra.mxu0 0.0
        %3660 = vmatprep.subr.mxu0 0.0
        %3661 = vmatpush1.msra.mxu0 0.0
        %3662 = vmatprep.subr.mxu0 0.0
        %3663 = vmatpush1.msra.mxu0 0.0
        %3664 = vmatprep.subr.mxu0 0.0
        %3665 = vmatpush1.msra.mxu0 0.0
        %3666 = vmatprep.subr.mxu0 0.0
        %3667 = vmatpush1.msra.mxu0 0.0
        %3668 = vmatprep.subr.mxu0 0.0
        %3669 = vmatpush1.msra.mxu0 0.0
        %3670 = vmatprep.subr.mxu0 0.0
        %3671 = vmatpush1.msra.mxu0 0.0
        %3672 = vmatprep.subr.mxu0 0.0
        %3673 = vmatpush1.msra.mxu0 0.0
        %3674 = vmatprep.subr.mxu0 0.0
        %3675 = vmatpush1.msra.mxu0 0.0
        %3676 = vmatprep.subr.mxu0 0.0
        %3677 = vmatpush1.msra.mxu0 0.0
        %3678 = vmatprep.subr.mxu0 0.0
        %3679 = vmatpush1.msra.mxu0 0.0
        %3680 = vmatprep.subr.mxu0 0.0
        %3681 = vmatpush1.msra.mxu0 0.0
        %3682 = vmatprep.subr.mxu0 0.0
        %3683 = vmatpush1.msra.mxu0 0.0
        %3684 = vmatprep.subr.mxu0 0.0
        %3685 = vmatpush1.msra.mxu0 0.0
        %3686 = vmatprep.subr.mxu0 0.0
        %3687 = vmatpush1.msra.mxu0 0.0
        %3688 = vmatprep.mubr.f32.mxu0 0.0
        %3689 = vmatmul.mubr.f32.gmra.mrb[0].mxu0 %v3622
        %v3690 = vpop.f32.mrb[0].mxu0
        %v3691 = vadd.f32 0.0, %v3690
        %v3692 = vpop.f32.mrb[0].mxu0
        %3693 = vdwg.mxu0
        %v3694 = vld [vmem:[%s1851] sm:$0xff]
        %v3696 = vsel %vm771, %v3691, 0
        %3698 = vmatprep.subr.mxu0 0.0
        %3699 = vmatpush1.msra.mxu0 %v3694
        %3700 = vmatprep.subr.mxu0 0.0
        %3701 = vmatpush1.msra.mxu0 0.0
        %3702 = vmatprep.subr.mxu0 0.0
        %3703 = vmatpush1.msra.mxu0 0.0
        %3704 = vmatprep.subr.mxu0 0.0
        %3705 = vmatpush1.msra.mxu0 0.0
        %3706 = vmatprep.subr.mxu0 0.0
        %3707 = vmatpush1.msra.mxu0 0.0
        %3708 = vmatprep.subr.mxu0 0.0
        %3709 = vmatpush1.msra.mxu0 0.0
        %3710 = vmatprep.subr.mxu0 0.0
        %3711 = vmatpush1.msra.mxu0 0.0
        %3712 = vmatprep.subr.mxu0 0.0
        %3713 = vmatpush1.msra.mxu0 0.0
        %3714 = vmatprep.subr.mxu0 0.0
        %3715 = vmatpush1.msra.mxu0 0.0
        %3716 = vmatprep.subr.mxu0 0.0
        %3717 = vmatpush1.msra.mxu0 0.0
        %3718 = vmatprep.subr.mxu0 0.0
        %3719 = vmatpush1.msra.mxu0 0.0
        %3720 = vmatprep.subr.mxu0 0.0
        %3721 = vmatpush1.msra.mxu0 0.0
        %3722 = vmatprep.subr.mxu0 0.0
        %3723 = vmatpush1.msra.mxu0 0.0
        %3724 = vmatprep.subr.mxu0 0.0
        %3725 = vmatpush1.msra.mxu0 0.0
        %3726 = vmatprep.subr.mxu0 0.0
        %3727 = vmatpush1.msra.mxu0 0.0
        %3728 = vmatprep.subr.mxu0 0.0
        %3729 = vmatpush1.msra.mxu0 0.0
        %3730 = vmatprep.subr.mxu0 0.0
        %3731 = vmatpush1.msra.mxu0 0.0
        %3732 = vmatprep.subr.mxu0 0.0
        %3733 = vmatpush1.msra.mxu0 0.0
        %3734 = vmatprep.subr.mxu0 0.0
        %3735 = vmatpush1.msra.mxu0 0.0
        %3736 = vmatprep.subr.mxu0 0.0
        %3737 = vmatpush1.msra.mxu0 0.0
        %3738 = vmatprep.subr.mxu0 0.0
        %3739 = vmatpush1.msra.mxu0 0.0
        %3740 = vmatprep.subr.mxu0 0.0
        %3741 = vmatpush1.msra.mxu0 0.0
        %3742 = vmatprep.subr.mxu0 0.0
        %3743 = vmatpush1.msra.mxu0 0.0
        %3744 = vmatprep.subr.mxu0 0.0
        %3745 = vmatpush1.msra.mxu0 0.0
        %3746 = vmatprep.subr.mxu0 0.0
        %3747 = vmatpush1.msra.mxu0 0.0
        %3748 = vmatprep.subr.mxu0 0.0
        %3749 = vmatpush1.msra.mxu0 0.0
        %3750 = vmatprep.subr.mxu0 0.0
        %3751 = vmatpush1.msra.mxu0 0.0
        %3752 = vmatprep.subr.mxu0 0.0
        %3753 = vmatpush1.msra.mxu0 0.0
        %3754 = vmatprep.subr.mxu0 0.0
        %3755 = vmatpush1.msra.mxu0 0.0
        %3756 = vmatprep.subr.mxu0 0.0
        %3757 = vmatpush1.msra.mxu0 0.0
        %3758 = vmatprep.subr.mxu0 0.0
        %3759 = vmatpush1.msra.mxu0 0.0
        %3760 = vmatprep.subr.mxu0 0.0
        %3761 = vmatpush1.msra.mxu0 0.0
        %3762 = vmatprep.mubr.f32.mxu0 0.0
        %3763 = vmatmul.mubr.f32.gmra.mrb[0].mxu0 %v3696
        %v3764 = vpop.f32.mrb[0].mxu0
        %v3765 = vadd.f32 0.0, %v3764
        %v3766 = vpop.f32.mrb[0].mxu0
        %3767 = vdwg.mxu0
        %v3768 = vadd.f32 %v3309, %v3765
        %v3769 = vld [vmem:[%s1927] sm:$0xff]
        %v3770 = vld [vmem:[%s1927 + $0x8] sm:$0xff]
        %v3771 = vld [vmem:[%s1927 + $0x10] sm:$0xff]
        %v3772 = vld [vmem:[%s1927 + $0x18] sm:$0xff]
        %3773 = vmatprep.subr.mxu0 0.0
        %3774 = vmatpush1.msra.mxu0 %v3769
        %3775 = vmatprep.subr.mxu0 0.0
        %3776 = vmatpush1.msra.mxu0 %v3770
        %3777 = vmatprep.subr.mxu0 0.0
        %3778 = vmatpush1.msra.mxu0 %v3771
        %3779 = vmatprep.subr.mxu0 0.0
        %3780 = vmatpush1.msra.mxu0 %v3772
        %3781 = vmatprep.subr.mxu0 0.0
        %3782 = vmatpush1.msra.mxu0 0.0
        %3783 = vmatprep.subr.mxu0 0.0
        %3784 = vmatpush1.msra.mxu0 0.0
        %3785 = vmatprep.subr.mxu0 0.0
        %3786 = vmatpush1.msra.mxu0 0.0
        %3787 = vmatprep.subr.mxu0 0.0
        %3788 = vmatpush1.msra.mxu0 0.0
        %3789 = vmatprep.subr.mxu0 0.0
        %3790 = vmatpush1.msra.mxu0 0.0
        %3791 = vmatprep.subr.mxu0 0.0
        %3792 = vmatpush1.msra.mxu0 0.0
        %3793 = vmatprep.subr.mxu0 0.0
        %3794 = vmatpush1.msra.mxu0 0.0
        %3795 = vmatprep.subr.mxu0 0.0
        %3796 = vmatpush1.msra.mxu0 0.0
        %3797 = vmatprep.subr.mxu0 0.0
        %3798 = vmatpush1.msra.mxu0 0.0
        %3799 = vmatprep.subr.mxu0 0.0
        %3800 = vmatpush1.msra.mxu0 0.0
        %3801 = vmatprep.subr.mxu0 0.0
        %3802 = vmatpush1.msra.mxu0 0.0
        %3803 = vmatprep.subr.mxu0 0.0
        %3804 = vmatpush1.msra.mxu0 0.0
        %3805 = vmatprep.subr.mxu0 0.0
        %3806 = vmatpush1.msra.mxu0 0.0
        %3807 = vmatprep.subr.mxu0 0.0
        %3808 = vmatpush1.msra.mxu0 0.0
        %3809 = vmatprep.subr.mxu0 0.0
        %3810 = vmatpush1.msra.mxu0 0.0
        %3811 = vmatprep.subr.mxu0 0.0
        %3812 = vmatpush1.msra.mxu0 0.0
        %3813 = vmatprep.subr.mxu0 0.0
        %3814 = vmatpush1.msra.mxu0 0.0
        %3815 = vmatprep.subr.mxu0 0.0
        %3816 = vmatpush1.msra.mxu0 0.0
        %3817 = vmatprep.subr.mxu0 0.0
        %3818 = vmatpush1.msra.mxu0 0.0
        %3819 = vmatprep.subr.mxu0 0.0
        %3820 = vmatpush1.msra.mxu0 0.0
        %3821 = vmatprep.subr.mxu0 0.0
        %3822 = vmatpush1.msra.mxu0 0.0
        %3823 = vmatprep.subr.mxu0 0.0
        %3824 = vmatpush1.msra.mxu0 0.0
        %3825 = vmatprep.subr.mxu0 0.0
        %3826 = vmatpush1.msra.mxu0 0.0
        %3827 = vmatprep.subr.mxu0 0.0
        %3828 = vmatpush1.msra.mxu0 0.0
        %3829 = vmatprep.subr.mxu0 0.0
        %3830 = vmatpush1.msra.mxu0 0.0
        %3831 = vmatprep.subr.mxu0 0.0
        %3832 = vmatpush1.msra.mxu0 0.0
        %3833 = vmatprep.subr.mxu0 0.0
        %3834 = vmatpush1.msra.mxu0 0.0
        %3835 = vmatprep.subr.mxu0 0.0
        %3836 = vmatpush1.msra.mxu0 0.0
        %3837 = vmatprep.mubr.f32.mxu0 0.0
        %3838 = vmatmul.mubr.f32.gmra.mrb[0].mxu0 %v2396
        %v3839 = vpop.f32.mrb[0].mxu0
        %v3840 = vadd.f32 0.0, %v3839
        %v3841 = vpop.f32.mrb[0].mxu0
        %3842 = vdwg.mxu0
        %v3843 = vld [vmem:[%s2002] sm:$0xff]
        %v3844 = vld [vmem:[%s2002 + $0x8] sm:$0xff]
        %v3845 = vld [vmem:[%s2002 + $0x10] sm:$0xff]
        %v3846 = vld [vmem:[%s2002 + $0x18] sm:$0xff]
        %3847 = vmatprep.subr.mxu0 0.0
        %3848 = vmatpush1.msra.mxu0 %v3843
        %3849 = vmatprep.subr.mxu0 0.0
        %3850 = vmatpush1.msra.mxu0 %v3844
        %3851 = vmatprep.subr.mxu0 0.0
        %3852 = vmatpush1.msra.mxu0 %v3845
        %3853 = vmatprep.subr.mxu0 0.0
        %3854 = vmatpush1.msra.mxu0 %v3846
        %3855 = vmatprep.subr.mxu0 0.0
        %3856 = vmatpush1.msra.mxu0 0.0
        %3857 = vmatprep.subr.mxu0 0.0
        %3858 = vmatpush1.msra.mxu0 0.0
        %3859 = vmatprep.subr.mxu0 0.0
        %3860 = vmatpush1.msra.mxu0 0.0
        %3861 = vmatprep.subr.mxu0 0.0
        %3862 = vmatpush1.msra.mxu0 0.0
        %3863 = vmatprep.subr.mxu0 0.0
        %3864 = vmatpush1.msra.mxu0 0.0
        %3865 = vmatprep.subr.mxu0 0.0
        %3866 = vmatpush1.msra.mxu0 0.0
        %3867 = vmatprep.subr.mxu0 0.0
        %3868 = vmatpush1.msra.mxu0 0.0
        %3869 = vmatprep.subr.mxu0 0.0
        %3870 = vmatpush1.msra.mxu0 0.0
        %3871 = vmatprep.subr.mxu0 0.0
        %3872 = vmatpush1.msra.mxu0 0.0
        %3873 = vmatprep.subr.mxu0 0.0
        %3874 = vmatpush1.msra.mxu0 0.0
        %3875 = vmatprep.subr.mxu0 0.0
        %3876 = vmatpush1.msra.mxu0 0.0
        %3877 = vmatprep.subr.mxu0 0.0
        %3878 = vmatpush1.msra.mxu0 0.0
        %3879 = vmatprep.subr.mxu0 0.0
        %3880 = vmatpush1.msra.mxu0 0.0
        %3881 = vmatprep.subr.mxu0 0.0
        %3882 = vmatpush1.msra.mxu0 0.0
        %3883 = vmatprep.subr.mxu0 0.0
        %3884 = vmatpush1.msra.mxu0 0.0
        %3885 = vmatprep.subr.mxu0 0.0
        %3886 = vmatpush1.msra.mxu0 0.0
        %3887 = vmatprep.subr.mxu0 0.0
        %3888 = vmatpush1.msra.mxu0 0.0
        %3889 = vmatprep.subr.mxu0 0.0
        %3890 = vmatpush1.msra.mxu0 0.0
        %3891 = vmatprep.subr.mxu0 0.0
        %3892 = vmatpush1.msra.mxu0 0.0
        %3893 = vmatprep.subr.mxu0 0.0
        %3894 = vmatpush1.msra.mxu0 0.0
        %3895 = vmatprep.subr.mxu0 0.0
        %3896 = vmatpush1.msra.mxu0 0.0
        %3897 = vmatprep.subr.mxu0 0.0
        %3898 = vmatpush1.msra.mxu0 0.0
        %3899 = vmatprep.subr.mxu0 0.0
        %3900 = vmatpush1.msra.mxu0 0.0
        %3901 = vmatprep.subr.mxu0 0.0
        %3902 = vmatpush1.msra.mxu0 0.0
        %3903 = vmatprep.subr.mxu0 0.0
        %3904 = vmatpush1.msra.mxu0 0.0
        %3905 = vmatprep.subr.mxu0 0.0
        %3906 = vmatpush1.msra.mxu0 0.0
        %3907 = vmatprep.subr.mxu0 0.0
        %3908 = vmatpush1.msra.mxu0 0.0
        %3909 = vmatprep.subr.mxu0 0.0
        %3910 = vmatpush1.msra.mxu0 0.0
        %3911 = vmatprep.mubr.f32.mxu0 0.0
        %3912 = vmatmul.mubr.f32.gmra.mrb[0].mxu0 %v2396
        %v3913 = vpop.f32.mrb[0].mxu0
        %v3914 = vadd.f32 0.0, %v3913
        %v3915 = vpop.f32.mrb[0].mxu0
        %3916 = vdwg.mxu0
        %v3917 = vld [vmem:[%s2077] sm:$0xff]
        %v3918 = vld [vmem:[%s2077 + $0x8] sm:$0xff]
        %v3919 = vld [vmem:[%s2077 + $0x10] sm:$0xff]
        %v3920 = vld [vmem:[%s2077 + $0x18] sm:$0xff]
        %3921 = vmatprep.subr.mxu0 0.0
        %3922 = vmatpush1.msra.mxu0 %v3917
        %3923 = vmatprep.subr.mxu0 0.0
        %3924 = vmatpush1.msra.mxu0 %v3918
        %3925 = vmatprep.subr.mxu0 0.0
        %3926 = vmatpush1.msra.mxu0 %v3919
        %3927 = vmatprep.subr.mxu0 0.0
        %3928 = vmatpush1.msra.mxu0 %v3920
        %3929 = vmatprep.subr.mxu0 0.0
        %3930 = vmatpush1.msra.mxu0 0.0
        %3931 = vmatprep.subr.mxu0 0.0
        %3932 = vmatpush1.msra.mxu0 0.0
        %3933 = vmatprep.subr.mxu0 0.0
        %3934 = vmatpush1.msra.mxu0 0.0
        %3935 = vmatprep.subr.mxu0 0.0
        %3936 = vmatpush1.msra.mxu0 0.0
        %3937 = vmatprep.subr.mxu0 0.0
        %3938 = vmatpush1.msra.mxu0 0.0
        %3939 = vmatprep.subr.mxu0 0.0
        %3940 = vmatpush1.msra.mxu0 0.0
        %3941 = vmatprep.subr.mxu0 0.0
        %3942 = vmatpush1.msra.mxu0 0.0
        %3943 = vmatprep.subr.mxu0 0.0
        %3944 = vmatpush1.msra.mxu0 0.0
        %3945 = vmatprep.subr.mxu0 0.0
        %3946 = vmatpush1.msra.mxu0 0.0
        %3947 = vmatprep.subr.mxu0 0.0
        %3948 = vmatpush1.msra.mxu0 0.0
        %3949 = vmatprep.subr.mxu0 0.0
        %3950 = vmatpush1.msra.mxu0 0.0
        %3951 = vmatprep.subr.mxu0 0.0
        %3952 = vmatpush1.msra.mxu0 0.0
        %3953 = vmatprep.subr.mxu0 0.0
        %3954 = vmatpush1.msra.mxu0 0.0
        %3955 = vmatprep.subr.mxu0 0.0
        %3956 = vmatpush1.msra.mxu0 0.0
        %3957 = vmatprep.subr.mxu0 0.0
        %3958 = vmatpush1.msra.mxu0 0.0
        %3959 = vmatprep.subr.mxu0 0.0
        %3960 = vmatpush1.msra.mxu0 0.0
        %3961 = vmatprep.subr.mxu0 0.0
        %3962 = vmatpush1.msra.mxu0 0.0
        %3963 = vmatprep.subr.mxu0 0.0
        %3964 = vmatpush1.msra.mxu0 0.0
        %3965 = vmatprep.subr.mxu0 0.0
        %3966 = vmatpush1.msra.mxu0 0.0
        %3967 = vmatprep.subr.mxu0 0.0
        %3968 = vmatpush1.msra.mxu0 0.0
        %3969 = vmatprep.subr.mxu0 0.0
        %3970 = vmatpush1.msra.mxu0 0.0
        %3971 = vmatprep.subr.mxu0 0.0
        %3972 = vmatpush1.msra.mxu0 0.0
        %3973 = vmatprep.subr.mxu0 0.0
        %3974 = vmatpush1.msra.mxu0 0.0
        %3975 = vmatprep.subr.mxu0 0.0
        %3976 = vmatpush1.msra.mxu0 0.0
        %3977 = vmatprep.subr.mxu0 0.0
        %3978 = vmatpush1.msra.mxu0 0.0
        %3979 = vmatprep.subr.mxu0 0.0
        %3980 = vmatpush1.msra.mxu0 0.0
        %3981 = vmatprep.subr.mxu0 0.0
        %3982 = vmatpush1.msra.mxu0 0.0
        %3983 = vmatprep.subr.mxu0 0.0
        %3984 = vmatpush1.msra.mxu0 0.0
        %3985 = vmatprep.mubr.f32.mxu0 0.0
        %3986 = vmatmul.mubr.f32.gmra.mrb[0].mxu0 %v2396
        %v3987 = vpop.f32.mrb[0].mxu0
        %v3988 = vadd.f32 0.0, %v3987
        %v3989 = vpop.f32.mrb[0].mxu0
        %3990 = vdwg.mxu0
        %v3992 = vsel %vm771, %v3840, 0
        %v3995 = vsel %vm771, %v3914, 0
        %3997 = vmatprep.subr.mxu0 0.0
        %3998 = vmatpush1.xpose.msra.mxu0 %v3995
        %3999 = vmatprep.subr.mxu0 0.0
        %4000 = vmatpush1.xpose.msra.mxu0 0.0
        %4001 = vmatprep.subr.mxu0 0.0
        %4002 = vmatpush1.xpose.msra.mxu0 0.0
        %4003 = vmatprep.subr.mxu0 0.0
        %4004 = vmatpush1.xpose.msra.mxu0 0.0
        %4005 = vmatprep.subr.mxu0 0.0
        %4006 = vmatpush1.xpose.msra.mxu0 0.0
        %4007 = vmatprep.subr.mxu0 0.0
        %4008 = vmatpush1.xpose.msra.mxu0 0.0
        %4009 = vmatprep.subr.mxu0 0.0
        %4010 = vmatpush1.xpose.msra.mxu0 0.0
        %4011 = vmatprep.subr.mxu0 0.0
        %4012 = vmatpush1.xpose.msra.mxu0 0.0
        %4013 = vmatprep.subr.mxu0 0.0
        %4014 = vmatpush1.xpose.msra.mxu0 0.0
        %4015 = vmatprep.subr.mxu0 0.0
        %4016 = vmatpush1.xpose.msra.mxu0 0.0
        %4017 = vmatprep.subr.mxu0 0.0
        %4018 = vmatpush1.xpose.msra.mxu0 0.0
        %4019 = vmatprep.subr.mxu0 0.0
        %4020 = vmatpush1.xpose.msra.mxu0 0.0
        %4021 = vmatprep.subr.mxu0 0.0
        %4022 = vmatpush1.xpose.msra.mxu0 0.0
        %4023 = vmatprep.subr.mxu0 0.0
        %4024 = vmatpush1.xpose.msra.mxu0 0.0
        %4025 = vmatprep.subr.mxu0 0.0
        %4026 = vmatpush1.xpose.msra.mxu0 0.0
        %4027 = vmatprep.subr.mxu0 0.0
        %4028 = vmatpush1.xpose.msra.mxu0 0.0
        %4029 = vmatprep.subr.mxu0 0.0
        %4030 = vmatpush1.xpose.msra.mxu0 0.0
        %4031 = vmatprep.subr.mxu0 0.0
        %4032 = vmatpush1.xpose.msra.mxu0 0.0
        %4033 = vmatprep.subr.mxu0 0.0
        %4034 = vmatpush1.xpose.msra.mxu0 0.0
        %4035 = vmatprep.subr.mxu0 0.0
        %4036 = vmatpush1.xpose.msra.mxu0 0.0
        %4037 = vmatprep.subr.mxu0 0.0
        %4038 = vmatpush1.xpose.msra.mxu0 0.0
        %4039 = vmatprep.subr.mxu0 0.0
        %4040 = vmatpush1.xpose.msra.mxu0 0.0
        %4041 = vmatprep.subr.mxu0 0.0
        %4042 = vmatpush1.xpose.msra.mxu0 0.0
        %4043 = vmatprep.subr.mxu0 0.0
        %4044 = vmatpush1.xpose.msra.mxu0 0.0
        %4045 = vmatprep.subr.mxu0 0.0
        %4046 = vmatpush1.xpose.msra.mxu0 0.0
        %4047 = vmatprep.subr.mxu0 0.0
        %4048 = vmatpush1.xpose.msra.mxu0 0.0
        %4049 = vmatprep.subr.mxu0 0.0
        %4050 = vmatpush1.xpose.msra.mxu0 0.0
        %4051 = vmatprep.subr.mxu0 0.0
        %4052 = vmatpush1.xpose.msra.mxu0 0.0
        %4053 = vmatprep.subr.mxu0 0.0
        %4054 = vmatpush1.xpose.msra.mxu0 0.0
        %4055 = vmatprep.subr.mxu0 0.0
        %4056 = vmatpush1.xpose.msra.mxu0 0.0
        %4057 = vmatprep.subr.mxu0 0.0
        %4058 = vmatpush1.xpose.msra.mxu0 0.0
        %4059 = vmatprep.subr.mxu0 0.0
        %4060 = vmatpush1.xpose.msra.mxu0 0.0
        %4061 = vmatprep.mubr.f32.mxu0 0.0
        %4062 = vmatmul.mubr.f32.gmra.mrb[0].mxu0 %v3992
        %v4063 = vpop.f32.mrb[0].mxu0
        %v4064 = vadd.f32 %v2620, %v4063
        %v4065 = vpop.f32.mrb[0].mxu0
        %4066 = vdwg.mxu0
        %v4067 = vsel %vm771, %v4064, -inf
        %4068 = vmax.xlane.f32.xlu0 %v4067
        %v4069 = vpop.xlane.xlu0 %4068
        %v4070 = vsub.f32 %v4064, %v4069
        %v4071 = vmul.f32 %v4070, 1.442695
        %v4072 = vpow.pop %v4071
        %v4073 = vsel %vm771, %v4072, 0.0
        %4074 = vadd.xlane.f32.xlu0 %v4073
        %v4075 = vpop.xlane.xlu0 %4074
        %v4076 = vrcp.pop %v4075
        %v4077 = vmul.f32 %v4072, %v4076
        %v4079 = vsel %vm771, %v4077, 0
        %4081 = vmatprep.subr.mxu0 0.0
        %4082 = vmatpush1.msra.mxu0 %v3988
        %4083 = vmatprep.subr.mxu0 0.0
        %4084 = vmatpush1.msra.mxu0 0.0
        %4085 = vmatprep.subr.mxu0 0.0
        %4086 = vmatpush1.msra.mxu0 0.0
        %4087 = vmatprep.subr.mxu0 0.0
        %4088 = vmatpush1.msra.mxu0 0.0
        %4089 = vmatprep.subr.mxu0 0.0
        %4090 = vmatpush1.msra.mxu0 0.0
        %4091 = vmatprep.subr.mxu0 0.0
        %4092 = vmatpush1.msra.mxu0 0.0
        %4093 = vmatprep.subr.mxu0 0.0
        %4094 = vmatpush1.msra.mxu0 0.0
        %4095 = vmatprep.subr.mxu0 0.0
        %4096 = vmatpush1.msra.mxu0 0.0
        %4097 = vmatprep.subr.mxu0 0.0
        %4098 = vmatpush1.msra.mxu0 0.0
        %4099 = vmatprep.subr.mxu0 0.0
        %4100 = vmatpush1.msra.mxu0 0.0
        %4101 = vmatprep.subr.mxu0 0.0
        %4102 = vmatpush1.msra.mxu0 0.0
        %4103 = vmatprep.subr.mxu0 0.0
        %4104 = vmatpush1.msra.mxu0 0.0
        %4105 = vmatprep.subr.mxu0 0.0
        %4106 = vmatpush1.msra.mxu0 0.0
        %4107 = vmatprep.subr.mxu0 0.0
        %4108 = vmatpush1.msra.mxu0 0.0
        %4109 = vmatprep.subr.mxu0 0.0
        %4110 = vmatpush1.msra.mxu0 0.0
        %4111 = vmatprep.subr.mxu0 0.0
        %4112 = vmatpush1.msra.mxu0 0.0
        %4113 = vmatprep.subr.mxu0 0.0
        %4114 = vmatpush1.msra.mxu0 0.0
        %4115 = vmatprep.subr.mxu0 0.0
        %4116 = vmatpush1.msra.mxu0 0.0
        %4117 = vmatprep.subr.mxu0 0.0
        %4118 = vmatpush1.msra.mxu0 0.0
        %4119 = vmatprep.subr.mxu0 0.0
        %4120 = vmatpush1.msra.mxu0 0.0
        %4121 = vmatprep.subr.mxu0 0.0
        %4122 = vmatpush1.msra.mxu0 0.0
        %4123 = vmatprep.subr.mxu0 0.0
        %4124 = vmatpush1.msra.mxu0 0.0
        %4125 = vmatprep.subr.mxu0 0.0
        %4126 = vmatpush1.msra.mxu0 0.0
        %4127 = vmatprep.subr.mxu0 0.0
        %4128 = vmatpush1.msra.mxu0 0.0
        %4129 = vmatprep.subr.mxu0 0.0
        %4130 = vmatpush1.msra.mxu0 0.0
        %4131 = vmatprep.subr.mxu0 0.0
        %4132 = vmatpush1.msra.mxu0 0.0
        %4133 = vmatprep.subr.mxu0 0.0
        %4134 = vmatpush1.msra.mxu0 0.0
        %4135 = vmatprep.subr.mxu0 0.0
        %4136 = vmatpush1.msra.mxu0 0.0
        %4137 = vmatprep.subr.mxu0 0.0
        %4138 = vmatpush1.msra.mxu0 0.0
        %4139 = vmatprep.subr.mxu0 0.0
        %4140 = vmatpush1.msra.mxu0 0.0
        %4141 = vmatprep.subr.mxu0 0.0
        %4142 = vmatpush1.msra.mxu0 0.0
        %4143 = vmatprep.subr.mxu0 0.0
        %4144 = vmatpush1.msra.mxu0 0.0
        %4145 = vmatprep.mubr.f32.mxu0 0.0
        %4146 = vmatmul.mubr.f32.gmra.mrb[0].mxu0 %v4079
        %v4147 = vpop.f32.mrb[0].mxu0
        %v4148 = vadd.f32 0.0, %v4147
        %v4149 = vpop.f32.mrb[0].mxu0
        %4150 = vdwg.mxu0
        %v4151 = vld [vmem:[%s2312] sm:$0xff]
        %v4153 = vsel %vm771, %v4148, 0
        %4155 = vmatprep.subr.mxu0 0.0
        %4156 = vmatpush1.msra.mxu0 %v4151
        %4157 = vmatprep.subr.mxu0 0.0
        %4158 = vmatpush1.msra.mxu0 0.0
        %4159 = vmatprep.subr.mxu0 0.0
        %4160 = vmatpush1.msra.mxu0 0.0
        %4161 = vmatprep.subr.mxu0 0.0
        %4162 = vmatpush1.msra.mxu0 0.0
        %4163 = vmatprep.subr.mxu0 0.0
        %4164 = vmatpush1.msra.mxu0 0.0
        %4165 = vmatprep.subr.mxu0 0.0
        %4166 = vmatpush1.msra.mxu0 0.0
        %4167 = vmatprep.subr.mxu0 0.0
        %4168 = vmatpush1.msra.mxu0 0.0
        %4169 = vmatprep.subr.mxu0 0.0
        %4170 = vmatpush1.msra.mxu0 0.0
        %4171 = vmatprep.subr.mxu0 0.0
        %4172 = vmatpush1.msra.mxu0 0.0
        %4173 = vmatprep.subr.mxu0 0.0
        %4174 = vmatpush1.msra.mxu0 0.0
        %4175 = vmatprep.subr.mxu0 0.0
        %4176 = vmatpush1.msra.mxu0 0.0
        %4177 = vmatprep.subr.mxu0 0.0
        %4178 = vmatpush1.msra.mxu0 0.0
        %4179 = vmatprep.subr.mxu0 0.0
        %4180 = vmatpush1.msra.mxu0 0.0
        %4181 = vmatprep.subr.mxu0 0.0
        %4182 = vmatpush1.msra.mxu0 0.0
        %4183 = vmatprep.subr.mxu0 0.0
        %4184 = vmatpush1.msra.mxu0 0.0
        %4185 = vmatprep.subr.mxu0 0.0
        %4186 = vmatpush1.msra.mxu0 0.0
        %4187 = vmatprep.subr.mxu0 0.0
        %4188 = vmatpush1.msra.mxu0 0.0
        %4189 = vmatprep.subr.mxu0 0.0
        %4190 = vmatpush1.msra.mxu0 0.0
        %4191 = vmatprep.subr.mxu0 0.0
        %4192 = vmatpush1.msra.mxu0 0.0
        %4193 = vmatprep.subr.mxu0 0.0
        %4194 = vmatpush1.msra.mxu0 0.0
        %4195 = vmatprep.subr.mxu0 0.0
        %4196 = vmatpush1.msra.mxu0 0.0
        %4197 = vmatprep.subr.mxu0 0.0
        %4198 = vmatpush1.msra.mxu0 0.0
        %4199 = vmatprep.subr.mxu0 0.0
        %4200 = vmatpush1.msra.mxu0 0.0
        %4201 = vmatprep.subr.mxu0 0.0
        %4202 = vmatpush1.msra.mxu0 0.0
        %4203 = vmatprep.subr.mxu0 0.0
        %4204 = vmatpush1.msra.mxu0 0.0
        %4205 = vmatprep.subr.mxu0 0.0
        %4206 = vmatpush1.msra.mxu0 0.0
        %4207 = vmatprep.subr.mxu0 0.0
        %4208 = vmatpush1.msra.mxu0 0.0
        %4209 = vmatprep.subr.mxu0 0.0
        %4210 = vmatpush1.msra.mxu0 0.0
        %4211 = vmatprep.subr.mxu0 0.0
        %4212 = vmatpush1.msra.mxu0 0.0
        %4213 = vmatprep.subr.mxu0 0.0
        %4214 = vmatpush1.msra.mxu0 0.0
        %4215 = vmatprep.subr.mxu0 0.0
        %4216 = vmatpush1.msra.mxu0 0.0
        %4217 = vmatprep.subr.mxu0 0.0
        %4218 = vmatpush1.msra.mxu0 0.0
        %4219 = vmatprep.mubr.f32.mxu0 0.0
        %4220 = vmatmul.mubr.f32.gmra.mrb[0].mxu0 %v4153
        %v4221 = vpop.f32.mrb[0].mxu0
        %v4222 = vadd.f32 0.0, %v4221
        %v4223 = vpop.f32.mrb[0].mxu0
        %4224 = vdwg.mxu0
        %v4225 = vadd.f32 %v3768, %v4222
        %4226 = vst.msk [vmem:[#allocation2 + $0x8] sm:$0xff] %vm515, %v4225
        %v4227 = vld [vmem:[#allocation2] sm:$0xff]
        %v4228 = vld [vmem:[#allocation2 + $0x8] sm:$0xff]
        %v4229 = vadd.f32 %v510, %v4227
        %v4230 = vadd.f32 %v511, %v4228
        %v4231 = vld [vmem:[%s490] sm:$0x1]
        %v4232 = vmul.f32 %v4229, %v4229
        %v4233 = vmul.f32 %v4230, %v4230
        %v4234 = vsel %vm515, %v4232, 0.0
        %4235 = vadd.xlane.f32.xlu0 %v4234
        %v4236 = vpop.xlane.xlu0 %4235
        %v4237 = vsel %vm515, %v4233, 0.0
        %4238 = vadd.xlane.f32.xlu0 %v4237
        %v4239 = vpop.xlane.xlu0 %4238
        %v4240 = vmul.f32 %v4236, %v522
        %v4241 = vmul.f32 %v4239, %v522
        %v4242 = vadd.f32 %v4240, 1e-06
        %v4243 = vadd.f32 %v4241, 1e-06
        %v4244 = vrsqrt.pop %v4242
        %v4245 = vrsqrt.pop %v4243
        %v4246 = vmul.f32 %v4229, %v4244
        %v4247 = vmul.f32 %v4230, %v4245
        %v4249 = vlaneseq
        %v4250 = vshrl.u32 %v4249, 7
        %v4251 = vsub.s32 0, %v4250
        %v4252 = vrot.slane %v4231, %v4251
        %v4254 = vmul.f32 %v4246, %v4252
        %v4255 = vmul.f32 %v4247, %v4252
        %v4256 = vld [vmem:[%s495] sm:$0xff]
        %v4257 = vld [vmem:[%s495 + $0x8] sm:$0xff]
        %v4258 = vld [vmem:[%s495 + $0x10] sm:$0xff]
        %v4259 = vld [vmem:[%s495 + $0x18] sm:$0xff]
        %v4261 = vsel %vm515, %v4254, 0
        %v4264 = vsel %vm515, %v4255, 0
        %4266 = vmatprep.subr.mxu0 0.0
        %4267 = vmatpush1.msra.mxu0 %v4256
        %4268 = vmatprep.subr.mxu0 0.0
        %4269 = vmatpush1.msra.mxu0 %v4257
        %4270 = vmatprep.subr.mxu0 0.0
        %4271 = vmatpush1.msra.mxu0 %v4258
        %4272 = vmatprep.subr.mxu0 0.0
        %4273 = vmatpush1.msra.mxu0 %v4259
        %4274 = vmatprep.subr.mxu0 0.0
        %4275 = vmatpush1.msra.mxu0 0.0
        %4276 = vmatprep.subr.mxu0 0.0
        %4277 = vmatpush1.msra.mxu0 0.0
        %4278 = vmatprep.subr.mxu0 0.0
        %4279 = vmatpush1.msra.mxu0 0.0
        %4280 = vmatprep.subr.mxu0 0.0
        %4281 = vmatpush1.msra.mxu0 0.0
        %4282 = vmatprep.subr.mxu0 0.0
        %4283 = vmatpush1.msra.mxu0 0.0
        %4284 = vmatprep.subr.mxu0 0.0
        %4285 = vmatpush1.msra.mxu0 0.0
        %4286 = vmatprep.subr.mxu0 0.0
        %4287 = vmatpush1.msra.mxu0 0.0
        %4288 = vmatprep.subr.mxu0 0.0
        %4289 = vmatpush1.msra.mxu0 0.0
        %4290 = vmatprep.subr.mxu0 0.0
        %4291 = vmatpush1.msra.mxu0 0.0
        %4292 = vmatprep.subr.mxu0 0.0
        %4293 = vmatpush1.msra.mxu0 0.0
        %4294 = vmatprep.subr.mxu0 0.0
        %4295 = vmatpush1.msra.mxu0 0.0
        %4296 = vmatprep.subr.mxu0 0.0
        %4297 = vmatpush1.msra.mxu0 0.0
        %4298 = vmatprep.subr.mxu0 0.0
        %4299 = vmatpush1.msra.mxu0 0.0
        %4300 = vmatprep.subr.mxu0 0.0
        %4301 = vmatpush1.msra.mxu0 0.0
        %4302 = vmatprep.subr.mxu0 0.0
        %4303 = vmatpush1.msra.mxu0 0.0
        %4304 = vmatprep.subr.mxu0 0.0
        %4305 = vmatpush1.msra.mxu0 0.0
        %4306 = vmatprep.subr.mxu0 0.0
        %4307 = vmatpush1.msra.mxu0 0.0
        %4308 = vmatprep.subr.mxu0 0.0
        %4309 = vmatpush1.msra.mxu0 0.0
        %4310 = vmatprep.subr.mxu0 0.0
        %4311 = vmatpush1.msra.mxu0 0.0
        %4312 = vmatprep.subr.mxu0 0.0
        %4313 = vmatpush1.msra.mxu0 0.0
        %4314 = vmatprep.subr.mxu0 0.0
        %4315 = vmatpush1.msra.mxu0 0.0
        %4316 = vmatprep.subr.mxu0 0.0
        %4317 = vmatpush1.msra.mxu0 0.0
        %4318 = vmatprep.subr.mxu0 0.0
        %4319 = vmatpush1.msra.mxu0 0.0
        %4320 = vmatprep.subr.mxu0 0.0
        %4321 = vmatpush1.msra.mxu0 0.0
        %4322 = vmatprep.subr.mxu0 0.0
        %4323 = vmatpush1.msra.mxu0 0.0
        %4324 = vmatprep.subr.mxu0 0.0
        %4325 = vmatpush1.msra.mxu0 0.0
        %4326 = vmatprep.subr.mxu0 0.0
        %4327 = vmatpush1.msra.mxu0 0.0
        %4328 = vmatprep.subr.mxu0 0.0
        %4329 = vmatpush1.msra.mxu0 0.0
        %4330 = vmatprep.mubr.f32.mxu0 0.0
        %4331 = vmatmul.mubr.f32.gmra.mrb[0].mxu0 %v4261
        %v4332 = vpop.f32.mrb[0].mxu0
        %v4333 = vadd.f32 0.0, %v4332
        %v4334 = vpop.f32.mrb[0].mxu0
        %4335 = vmatprep.mubr.f32.mxu0 0.0
        %4336 = vmatmul.mubr.f32.gmra.mrb[0].mxu0 %v4264
        %v4337 = vpop.f32.mrb[0].mxu0
        %v4338 = vadd.f32 0.0, %v4337
        %v4339 = vpop.f32.mrb[0].mxu0
        %4340 = vdwg.mxu0
        %v4341 = vmax.f32 %v4333, 0.0
        %v4342 = vmax.f32 %v4338, 0.0
        %v4343 = vld [vmem:[%s500] sm:$0xff]
        %v4344 = vld [vmem:[%s500 + $0x8] sm:$0xff]
        %v4345 = vld [vmem:[%s500 + $0x10] sm:$0xff]
        %v4346 = vld [vmem:[%s500 + $0x18] sm:$0xff]
        %v4347 = vld [vmem:[%s500 + $0x20] sm:$0xff]
        %v4348 = vld [vmem:[%s500 + $0x28] sm:$0xff]
        %v4349 = vld [vmem:[%s500 + $0x30] sm:$0xff]
        %v4350 = vld [vmem:[%s500 + $0x38] sm:$0xff]
        %vm4351 = vcmask 523264
        %v4353 = vsel %vm4351, %v4341, 0
        %v4356 = vsel %vm4351, %v4342, 0
        %4358 = vmatprep.subr.mxu0 0.0
        %4359 = vmatpush1.msra.mxu0 %v4343
        %4360 = vmatprep.subr.mxu0 0.0
        %4361 = vmatpush1.msra.mxu0 %v4344
        %4362 = vmatprep.subr.mxu0 0.0
        %4363 = vmatpush1.msra.mxu0 %v4345
        %4364 = vmatprep.subr.mxu0 0.0
        %4365 = vmatpush1.msra.mxu0 %v4346
        %4366 = vmatprep.subr.mxu0 0.0
        %4367 = vmatpush1.msra.mxu0 %v4347
        %4368 = vmatprep.subr.mxu0 0.0
        %4369 = vmatpush1.msra.mxu0 %v4348
        %4370 = vmatprep.subr.mxu0 0.0
        %4371 = vmatpush1.msra.mxu0 %v4349
        %4372 = vmatprep.subr.mxu0 0.0
        %4373 = vmatpush1.msra.mxu0 %v4350
        %4374 = vmatprep.subr.mxu0 0.0
        %4375 = vmatpush1.msra.mxu0 0.0
        %4376 = vmatprep.subr.mxu0 0.0
        %4377 = vmatpush1.msra.mxu0 0.0
        %4378 = vmatprep.subr.mxu0 0.0
        %4379 = vmatpush1.msra.mxu0 0.0
        %4380 = vmatprep.subr.mxu0 0.0
        %4381 = vmatpush1.msra.mxu0 0.0
        %4382 = vmatprep.subr.mxu0 0.0
        %4383 = vmatpush1.msra.mxu0 0.0
        %4384 = vmatprep.subr.mxu0 0.0
        %4385 = vmatpush1.msra.mxu0 0.0
        %4386 = vmatprep.subr.mxu0 0.0
        %4387 = vmatpush1.msra.mxu0 0.0
        %4388 = vmatprep.subr.mxu0 0.0
        %4389 = vmatpush1.msra.mxu0 0.0
        %4390 = vmatprep.subr.mxu0 0.0
        %4391 = vmatpush1.msra.mxu0 0.0
        %4392 = vmatprep.subr.mxu0 0.0
        %4393 = vmatpush1.msra.mxu0 0.0
        %4394 = vmatprep.subr.mxu0 0.0
        %4395 = vmatpush1.msra.mxu0 0.0
        %4396 = vmatprep.subr.mxu0 0.0
        %4397 = vmatpush1.msra.mxu0 0.0
        %4398 = vmatprep.subr.mxu0 0.0
        %4399 = vmatpush1.msra.mxu0 0.0
        %4400 = vmatprep.subr.mxu0 0.0
        %4401 = vmatpush1.msra.mxu0 0.0
        %4402 = vmatprep.subr.mxu0 0.0
        %4403 = vmatpush1.msra.mxu0 0.0
        %4404 = vmatprep.subr.mxu0 0.0
        %4405 = vmatpush1.msra.mxu0 0.0
        %4406 = vmatprep.subr.mxu0 0.0
        %4407 = vmatpush1.msra.mxu0 0.0
        %4408 = vmatprep.subr.mxu0 0.0
        %4409 = vmatpush1.msra.mxu0 0.0
        %4410 = vmatprep.subr.mxu0 0.0
        %4411 = vmatpush1.msra.mxu0 0.0
        %4412 = vmatprep.subr.mxu0 0.0
        %4413 = vmatpush1.msra.mxu0 0.0
        %4414 = vmatprep.subr.mxu0 0.0
        %4415 = vmatpush1.msra.mxu0 0.0
        %4416 = vmatprep.subr.mxu0 0.0
        %4417 = vmatpush1.msra.mxu0 0.0
        %4418 = vmatprep.subr.mxu0 0.0
        %4419 = vmatpush1.msra.mxu0 0.0
        %4420 = vmatprep.subr.mxu0 0.0
        %4421 = vmatpush1.msra.mxu0 0.0
        %4422 = vmatprep.mubr.f32.mxu0 0.0
        %4423 = vmatmul.mubr.f32.gmra.mrb[0].mxu0 %v4353
        %v4424 = vpop.f32.mrb[0].mxu0
        %v4425 = vadd.f32 0.0, %v4424
        %v4426 = vpop.f32.mrb[0].mxu0
        %4427 = vmatprep.mubr.f32.mxu0 0.0
        %4428 = vmatmul.mubr.f32.gmra.mrb[0].mxu0 %v4356
        %v4429 = vpop.f32.mrb[0].mxu0
        %v4430 = vadd.f32 0.0, %v4429
        %v4431 = vpop.f32.mrb[0].mxu0
        %4432 = vdwg.mxu0
        %v4433 = vadd.f32 %v4229, %v4425
        %v4434 = vadd.f32 %v4230, %v4430
        %4435 = vst.msk [vmem:[#allocation3] sm:$0xff] %vm515, %v4433
        %4436 = vst.msk [vmem:[#allocation3 + $0x8] sm:$0xff] %vm515, %v4434
        %p4437 = scmp.eq.s32.totalorder %s23, 1
        // Predicated region
        $region69: #{encoder_forward.1} parent=63 // pred_check
          %p4438 = pneg %p4437
        $region70: #{encoder_forward.1} parent=63 // pred_check_branch
          %4440 = sbr.rel (%p4438) target = $region72
        $region71: #{encoder_forward.1} parent=63 // pred_region
          %v4441 = vld [vmem:[#allocation3] sm:$0xff]
          %v4442 = vld [vmem:[#allocation3 + $0x8] sm:$0xff]
          %v4443 = vld [vmem:[%s10] sm:$0x1]
          %v4444 = vmul.f32 %v4441, %v4441
          %v4445 = vmul.f32 %v4442, %v4442
          %v4446 = vsel %vm515, %v4444, 0.0
          %4447 = vadd.xlane.f32.xlu0 %v4446
          %v4448 = vpop.xlane.xlu0 %4447
          %v4449 = vsel %vm515, %v4445, 0.0
          %4450 = vadd.xlane.f32.xlu0 %v4449
          %v4451 = vpop.xlane.xlu0 %4450
          %v4452 = vmul.f32 %v4448, %v522
          %v4453 = vmul.f32 %v4451, %v522
          %v4454 = vadd.f32 %v4452, 1e-06
          %v4455 = vadd.f32 %v4453, 1e-06
          %v4456 = vrsqrt.pop %v4454
          %v4457 = vrsqrt.pop %v4455
          %v4458 = vmul.f32 %v4441, %v4456
          %v4459 = vmul.f32 %v4442, %v4457
          %v4461 = vlaneseq
          %v4462 = vshrl.u32 %v4461, 7
          %v4463 = vsub.s32 0, %v4462
          %v4464 = vrot.slane %v4443, %v4463
          %v4466 = vmul.f32 %v4458, %v4464
          %v4467 = vmul.f32 %v4459, %v4464
          %4468 = vst.msk [vmem:[#allocation3] sm:$0xff] %vm515, %v4466
          %4469 = vst.msk [vmem:[#allocation3 + $0x8] sm:$0xff] %vm515, %v4467
        $region72: #{encoder_forward.1} parent=63 // pred_fallthru
          _
        // Predicated region
        $region73: #{encoder_forward.1} parent=63 // pred_check
          %p4470 = pneg %p307
        $region74: #{encoder_forward.1} parent=63 // pred_check_branch
          %4472 = sbr.rel (%p4470) target = $region76
        $region75: #{encoder_forward.1} parent=63 // pred_region
          %s4474 = ssub.s32 256, 256
          %4475 = vsyncadd [#allocation4], %s4474
          %s4476 = sshll.u32 [#allocation3], 4
          %s4477 = int_to_ptr.vmem [resolvable:$true] %s4476
          %4482 = dma.vmem_to_hbm [thread:$0]  %s4477, 256, %s11, [#allocation4], 128, 128, 8
        $region76: #{encoder_forward.1} parent=63 // pred_fallthru
          _
        // Predicated region
        $region77: #{encoder_forward.1} parent=63 // pred_check
          %p4483 = pneg %p307
        $region78: #{encoder_forward.1} parent=63 // pred_check_branch
          %4485 = sbr.rel (%p4483) target = $region80
        $region79: #{encoder_forward.1} parent=63 // pred_region
          %4486 = dma.done [#allocation4], 256
        $region80: #{encoder_forward.1} parent=63 // pred_fallthru
          _
      $region64: #{encoder_forward.1} parent=5 // pred_fallthru
        _
      %p4487 = scmp.le.s32.totalorder 2, %s18
      // Predicated region
      $region81: #{encoder_forward.1} parent=5 // pred_check
        %p4488 = pneg %p4487
      $region82: #{encoder_forward.1} parent=5 // pred_check_branch
        %4490 = sbr.rel (%p4488) target = $region84
      $region83: #{encoder_forward.1} parent=5 // pred_region
        %s4491 = ssub.s32 %s18, 2
      $region84: #{encoder_forward.1} parent=5 // pred_fallthru
        _
    $region6: #{encoder_forward.1} parent=1 // loop_footer
      %s22 = sadd.s32 1, %s18
    $region7: #{encoder_forward.1} parent=1 // loop_footer_branch
      %17 = sbr.rel target = $region3
    $region8: #{encoder_forward.1} parent=1 // loop_exit
      _
    %4492 = vsyncpa [#allocation4], 1
    %s4493 = scalar_lea.sflag [#allocation4], 1
    %4494 = vsyncpa %s4493, 1

</llo_original>
